<compile_context>
chip_gen: v6e
topology: v6e:2x2x1
jax: 0.10.0
libtpu: 0.0.40
codegen_flags: <defaults>
</compile_context>

<pallas_src>
import functools
import math

import jax
import jax.numpy as jnp
from jax.experimental import pallas as pl
from jax.experimental.pallas import tpu as pltpu

# ---- small synthetic BERT config (scaled down from bert-base) ----
VOCAB = 100
TYPE_VOCAB = 2
MAX_POS = 16
HIDDEN = 32
NUM_HEADS = 4
HEAD_DIM = HIDDEN // NUM_HEADS
FFN = 64
NUM_LAYERS = 2
LN_EPS = 1e-12


# ------------------------- in-kernel helpers -------------------------
def _layer_norm(x, gamma, beta, eps=LN_EPS):
    # Two-pass (centered) LayerNorm for numerical robustness.
    mean = jnp.mean(x, axis=-1, keepdims=True)
    xc = x - mean
    var = jnp.mean(xc * xc, axis=-1, keepdims=True)
    inv = jax.lax.rsqrt(var + eps)
    return xc * inv * gamma + beta


def _gelu(x):
    # TODO(synk): original BERT uses erf-based GELU; tanh approximation used
    # here to avoid relying on a lax.erf Mosaic lowering.
    c = math.sqrt(2.0 / math.pi)
    return 0.5 * x * (1.0 + jnp.tanh(c * (x + 0.044715 * x * x * x)))


# ------------------------- fused kernel -------------------------
def fused_encoder_kernel(clss_ref, clst_ref,                       # scalar prefetch (SMEM)
                         emb_ref, bias_ref, eg_ref, eb_ref,
                         wqkv_ref, bqkv_ref, wo_ref, bo_ref, g1_ref, b1_ref,
                         wi_ref, bi_ref, w2_ref, b2_ref, g2_ref, b2b_ref,
                         out_ref, x_scratch,
                         *, bb, seq, n_cls, n_tok):
    f32 = jnp.float32
    H = HIDDEN
    dH = HEAD_DIM
    nH = NUM_HEADS
    inv_sqrt_d = 1.0 / math.sqrt(dH)

    # ---- embeddings LayerNorm (we+pe+te pre-summed in wrapper; dropout = eval no-op) ----
    x = _layer_norm(emb_ref[...], eg_ref[...], eb_ref[...])        # (bb*seq, H)

    bias = bias_ref[...]                                           # (bb*nH, 1, seq)

    # ---- transformer layers: weights resident in VMEM, static unrolled loop ----
    for l in range(NUM_LAYERS):
        # Fused QKV projection: one (bb*seq, H) @ (H, 3H) matmul.
        qkv = jnp.dot(x, wqkv_ref[l], preferred_element_type=f32) + bqkv_ref[l]

        # Build per-(batch, head) tensors only for the attention einsums.
        qs, ks, vs = [], [], []
        for b in range(bb):
            rows = slice(b * seq, (b + 1) * seq)
            for h in range(nH):
                qs.append(qkv[rows, h * dH:(h + 1) * dH])
                ks.append(qkv[rows, H + h * dH:H + (h + 1) * dH])
                vs.append(qkv[rows, 2 * H + h * dH:2 * H + (h + 1) * dH])
        qg = jnp.stack(qs, axis=0)                                 # (bb*nH, seq, dH)
        kg = jnp.stack(ks, axis=0)
        vg = jnp.stack(vs, axis=0)

        sc = jnp.einsum('gsd,gtd->gst', qg, kg,
                        preferred_element_type=f32) * inv_sqrt_d   # (bb*nH, seq, seq)
        sc = sc + bias                                             # broadcast over queries
        m = jnp.max(sc, axis=-1, keepdims=True)
        e = jnp.exp(sc - m)
        p = e * pl.reciprocal(jnp.sum(e, axis=-1, keepdims=True), approx=True)

        ctx = jnp.einsum('gst,gtd->gsd', p, vg,
                         preferred_element_type=f32)               # (bb*nH, seq, dH)

        # Lane-concat heads back to (bb*seq, H); the head contraction then
        # happens inside one (bb*seq, H) @ (H, H) output-projection matmul.
        per_batch = []
        for b in range(bb):
            per_batch.append(jnp.concatenate(
                [ctx[b * nH + h] for h in range(nH)], axis=-1))    # (seq, H)
        ctx2d = per_batch[0] if bb == 1 else jnp.concatenate(per_batch, axis=0)

        attn_out = jnp.dot(ctx2d, wo_ref[l], preferred_element_type=f32) + bo_ref[l]
        h1 = _layer_norm(attn_out + x, g1_ref[l], b1_ref[l])

        inter = _gelu(jnp.dot(h1, wi_ref[l], preferred_element_type=f32) + bi_ref[l])
        ffn = jnp.dot(inter, w2_ref[l], preferred_element_type=f32) + b2_ref[l]
        x = _layer_norm(ffn + h1, g2_ref[l], b2b_ref[l])

    # ---- exact clss/clst row gathers: SMEM indices + VMEM-staged hidden states ----
    x_scratch[...] = x
    blk = pl.program_id(0)
    for b in range(bb):
        for j in range(n_cls):
            idx = clss_ref[(blk * bb + b) * n_cls + j]
            out_ref[b, pl.ds(j, 1), :] = x_scratch[pl.ds(b * seq + idx, 1), :]
        for j in range(n_tok):
            idx = clst_ref[(blk * bb + b) * n_tok + j]
            out_ref[b, pl.ds(n_cls + j, 1), :] = x_scratch[pl.ds(b * seq + idx, 1), :]


# ------------------------- pallas_call wrapper -------------------------
def _batch_block(block_shape):
    zeros = (0,) * (len(block_shape) - 1)
    return pl.BlockSpec(tuple(block_shape), lambda g, *_: (g,) + zeros)


def _const_block(shape):
    zeros = (0,) * len(shape)
    return pl.BlockSpec(tuple(shape), lambda g, *_: zeros)


def pack_params(params):
    """One-time weight re-layout, hoisted out of the per-call hot path."""
    L = params['layers']
    return dict(
        word_emb=params['word_emb'], pos_emb=params['pos_emb'], type_emb=params['type_emb'],
        emb_ln_g=params['emb_ln_g'], emb_ln_b=params['emb_ln_b'],
        cls_w=params['cls_w'], cls_b=params['cls_b'],
        wqkv=jnp.stack([jnp.concatenate([lp['wq'], lp['wk'], lp['wv']], axis=1) for lp in L]),
        bqkv=jnp.stack([jnp.concatenate([lp['bq'], lp['bk'], lp['bv']], axis=1) for lp in L]),
        wo=jnp.stack([lp['wo'] for lp in L]),
        bo=jnp.stack([lp['bo'] for lp in L]),
        ln1_g=jnp.stack([lp['ln1_g'] for lp in L]),
        ln1_b=jnp.stack([lp['ln1_b'] for lp in L]),
        wi=jnp.stack([lp['wi'] for lp in L]),
        bi=jnp.stack([lp['bi'] for lp in L]),
        w2=jnp.stack([lp['w2'] for lp in L]),
        b2=jnp.stack([lp['b2'] for lp in L]),
        ln2_g=jnp.stack([lp['ln2_g'] for lp in L]),
        ln2_b=jnp.stack([lp['ln2_b'] for lp in L]),
    )


def encoder_both_forward(packed, input_ids, position_ids, segment_ids, attention_mask,
                         clss, mask_clss, clst, mask_clst, num_batch_blocks=1):
    # num_batch_blocks=1 -> single fat grid step (best on single-TC v5e/v6e).
    # num_batch_blocks=2 -> two balanced steps for v7x's 2 TensorCores.
    B, S = input_ids.shape
    Nc = clss.shape[1]
    Nt = clst.shape[1]
    H = HIDDEN
    G = num_batch_blocks
    assert B % G == 0
    BB = B // G

    # ----- glue (plain JAX, input-dependent): embedding gathers + sum, mask bias -----
    emb = (packed['word_emb'][input_ids] + packed['pos_emb'][position_ids]
           + packed['type_emb'][segment_ids]).reshape(B * S, H)
    att = attention_mask.astype(jnp.float32).reshape(B, 1, S)
    bias = (1.0 - att) * -10000.0                                  # (B, 1, S)
    bias_g = jnp.broadcast_to(bias[:, None, :, :],
                              (B, NUM_HEADS, 1, S)).reshape(B * NUM_HEADS, 1, S)

    clss_flat = clss.astype(jnp.int32).reshape(-1)
    clst_flat = clst.astype(jnp.int32).reshape(-1)

    weight_arrays = (packed['emb_ln_g'], packed['emb_ln_b'],
                     packed['wqkv'], packed['bqkv'], packed['wo'], packed['bo'],
                     packed['ln1_g'], packed['ln1_b'],
                     packed['wi'], packed['bi'], packed['w2'], packed['b2'],
                     packed['ln2_g'], packed['ln2_b'])

    in_specs = ([_batch_block((BB * S, H)),
                 _batch_block((BB * NUM_HEADS, 1, S))]
                + [_const_block(a.shape) for a in weight_arrays])

    out = pl.pallas_call(
        functools.partial(fused_encoder_kernel, bb=BB, seq=S, n_cls=Nc, n_tok=Nt),
        grid_spec=pltpu.PrefetchScalarGridSpec(
            num_scalar_prefetch=2,
            grid=(G,),
            in_specs=in_specs,
            out_specs=_batch_block((BB, Nc + Nt, H)),
            scratch_shapes=[pltpu.VMEM((BB * S, H), jnp.float32)]),
        out_shape=jax.ShapeDtypeStruct((B, Nc + Nt, H), jnp.float32),
        compiler_params=pltpu.CompilerParams(dimension_semantics=("parallel",)),
    )(clss_flat, clst_flat, emb, bias_g, *weight_arrays)

    # ----- extractive head (tiny Linear(H,1) + exact sigmoid) and masks -----
    mc = mask_clss.astype(jnp.float32)
    mt = mask_clst.astype(jnp.float32)
    sents_vec = out[:, :Nc, :] * mc[:, :, None]
    tokns_vec = out[:, Nc:, :] * mt[:, :, None]
    logits = jnp.einsum('bnh,h->bn', sents_vec, packed['cls_w'][0]) + packed['cls_b'][0, 0]
    node_scores = jax.nn.sigmoid(logits) * mc
    return tokns_vec, sents_vec, node_scores


# ------------------------- deterministic parameter init -------------------------
def init_params(seed=0):
    keys = iter(jax.random.split(jax.random.PRNGKey(seed), 64))
    nrm = lambda shape: (0.02 * jax.random.normal(next(keys), shape)).astype(jnp.float32)
    params = dict(
        word_emb=nrm((VOCAB, HIDDEN)).at[0].set(0.0),   # padding_idx=0 row zeroed
        pos_emb=nrm((MAX_POS, HIDDEN)),
        type_emb=nrm((TYPE_VOCAB, HIDDEN)),
        emb_ln_g=jnp.ones((1, HIDDEN), jnp.float32),
        emb_ln_b=jnp.zeros((1, HIDDEN), jnp.float32),
        cls_w=nrm((1, HIDDEN)),                         # Classifier Linear(H, 1) weight
        cls_b=jnp.zeros((1, 1), jnp.float32),
        layers=[],
    )
    for _ in range(NUM_LAYERS):
        # Linear weights stored pre-transposed to (in, out) so kernels do x @ W + b.
        params['layers'].append(dict(
            wq=nrm((HIDDEN, HIDDEN)), bq=jnp.zeros((1, HIDDEN), jnp.float32),
            wk=nrm((HIDDEN, HIDDEN)), bk=jnp.zeros((1, HIDDEN), jnp.float32),
            wv=nrm((HIDDEN, HIDDEN)), bv=jnp.zeros((1, HIDDEN), jnp.float32),
            wo=nrm((HIDDEN, HIDDEN)), bo=jnp.zeros((1, HIDDEN), jnp.float32),
            ln1_g=jnp.ones((1, HIDDEN), jnp.float32),
            ln1_b=jnp.zeros((1, HIDDEN), jnp.float32),
            wi=nrm((HIDDEN, FFN)), bi=jnp.zeros((1, FFN), jnp.float32),
            w2=nrm((FFN, HIDDEN)), b2=jnp.zeros((1, HIDDEN), jnp.float32),
            ln2_g=jnp.ones((1, HIDDEN), jnp.float32),
            ln2_b=jnp.zeros((1, HIDDEN), jnp.float32),
        ))
    return params


# ------------------------- demo -------------------------
if __name__ == "__main__":
    B, S = 2, 8
    Nc, Nt = 3, 5   # number of sentence-cls positions / token positions

    key = jax.random.PRNGKey(0)
    k1, k2, k3, k4 = jax.random.split(key, 4)

    input_ids = jax.random.randint(k1, (B, S), 1, VOCAB).astype(jnp.int32)
    position_ids = jnp.tile(jnp.arange(S, dtype=jnp.int32)[None, :], (B, 1))
    segment_ids = jax.random.randint(k2, (B, S), 0, TYPE_VOCAB).astype(jnp.int32)
    attention_mask = jnp.ones((B, 1, S), jnp.float32).at[1, 0, 6:].set(0.0)

    clss = jax.random.randint(k3, (B, Nc), 0, S).astype(jnp.int32)
    mask_clss = jnp.array([[1.0, 1.0, 1.0], [1.0, 1.0, 0.0]], jnp.float32)
    clst = jax.random.randint(k4, (B, Nt), 0, S).astype(jnp.int32)
    mask_clst = jnp.ones((B, Nt), jnp.float32).at[1, 4].set(0.0)

    params = init_params(0)
    packed = pack_params(params)          # one-time weight re-layout (outside hot path)

    fwd = jax.jit(encoder_both_forward)
    tokns_vec, sents_vec, node_scores = fwd(
        packed, input_ids, position_ids, segment_ids, attention_mask,
        clss, mask_clss, clst, mask_clst)
    jax.block_until_ready((tokns_vec, sents_vec, node_scores))

    assert tokns_vec.shape == (B, Nt, HIDDEN)
    assert sents_vec.shape == (B, Nc, HIDDEN)
    assert node_scores.shape == (B, Nc)
    print("KERNEL_OK")
</pallas_src>

<mosaic_0001>
module attributes {stable_mosaic.version = 11 : i64} {
  func.func @fused_encoder_kernel(%arg0: i32, %arg1: memref<6xi32, #tpu.memory_space<smem>>, %arg2: memref<10xi32, #tpu.memory_space<smem>>, %arg3: memref<16x32xf32, #tpu.memory_space<vmem>>, %arg4: memref<8x1x8xf32, #tpu.memory_space<vmem>>, %arg5: memref<1x32xf32, #tpu.memory_space<vmem>>, %arg6: memref<1x32xf32, #tpu.memory_space<vmem>>, %arg7: memref<2x32x96xf32, #tpu.memory_space<vmem>>, %arg8: memref<2x1x96xf32, #tpu.memory_space<vmem>>, %arg9: memref<2x32x32xf32, #tpu.memory_space<vmem>>, %arg10: memref<2x1x32xf32, #tpu.memory_space<vmem>>, %arg11: memref<2x1x32xf32, #tpu.memory_space<vmem>>, %arg12: memref<2x1x32xf32, #tpu.memory_space<vmem>>, %arg13: memref<2x32x64xf32, #tpu.memory_space<vmem>>, %arg14: memref<2x1x64xf32, #tpu.memory_space<vmem>>, %arg15: memref<2x64x32xf32, #tpu.memory_space<vmem>>, %arg16: memref<2x1x32xf32, #tpu.memory_space<vmem>>, %arg17: memref<2x1x32xf32, #tpu.memory_space<vmem>>, %arg18: memref<2x1x32xf32, #tpu.memory_space<vmem>>, %arg19: memref<2x8x32xf32, #tpu.memory_space<vmem>>, %arg20: memref<16x32xf32, #tpu.memory_space<vmem>>) attributes {dimension_semantics = [#tpu.dimension_semantics<parallel>], iteration_bounds = array<i64: 1>, scalar_prefetch = 2 : i64, scratch_operands = 1 : i64, tpu.core_type = #tpu.core_type<tc>, window_params = [{transform_indices = @transform_0, window_bounds = array<i64: 16, 32>}, {transform_indices = @transform_1, window_bounds = array<i64: 8, 1, 8>}, {pipeline_mode = #tpu.pipeline_mode<synchronous>, transform_indices = @transform_2, window_bounds = array<i64: 1, 32>}, {pipeline_mode = #tpu.pipeline_mode<synchronous>, transform_indices = @transform_3, window_bounds = array<i64: 1, 32>}, {pipeline_mode = #tpu.pipeline_mode<synchronous>, transform_indices = @transform_4, window_bounds = array<i64: 2, 32, 96>}, {pipeline_mode = #tpu.pipeline_mode<synchronous>, transform_indices = @transform_5, window_bounds = array<i64: 2, 1, 96>}, {pipeline_mode = #tpu.pipeline_mode<synchronous>, transform_indices = @transform_6, window_bounds = array<i64: 2, 32, 32>}, {pipeline_mode = #tpu.pipeline_mode<synchronous>, transform_indices = @transform_7, window_bounds = array<i64: 2, 1, 32>}, {pipeline_mode = #tpu.pipeline_mode<synchronous>, transform_indices = @transform_8, window_bounds = array<i64: 2, 1, 32>}, {pipeline_mode = #tpu.pipeline_mode<synchronous>, transform_indices = @transform_9, window_bounds = array<i64: 2, 1, 32>}, {pipeline_mode = #tpu.pipeline_mode<synchronous>, transform_indices = @transform_10, window_bounds = array<i64: 2, 32, 64>}, {pipeline_mode = #tpu.pipeline_mode<synchronous>, transform_indices = @transform_11, window_bounds = array<i64: 2, 1, 64>}, {pipeline_mode = #tpu.pipeline_mode<synchronous>, transform_indices = @transform_12, window_bounds = array<i64: 2, 64, 32>}, {pipeline_mode = #tpu.pipeline_mode<synchronous>, transform_indices = @transform_13, window_bounds = array<i64: 2, 1, 32>}, {pipeline_mode = #tpu.pipeline_mode<synchronous>, transform_indices = @transform_14, window_bounds = array<i64: 2, 1, 32>}, {pipeline_mode = #tpu.pipeline_mode<synchronous>, transform_indices = @transform_15, window_bounds = array<i64: 2, 1, 32>}, {transform_indices = @transform_16, window_bounds = array<i64: 2, 8, 32>}]} {
    %c0 = arith.constant 0 : index
    %c0_0 = arith.constant 0 : index
    %0 = vector.load %arg3[%c0, %c0_0] : memref<16x32xf32, #tpu.memory_space<vmem>>, vector<16x32xf32>
    %c0_1 = arith.constant 0 : index
    %c0_2 = arith.constant 0 : index
    %1 = vector.load %arg5[%c0_1, %c0_2] : memref<1x32xf32, #tpu.memory_space<vmem>>, vector<1x32xf32>
    %c0_3 = arith.constant 0 : index
    %c0_4 = arith.constant 0 : index
    %2 = vector.load %arg6[%c0_3, %c0_4] : memref<1x32xf32, #tpu.memory_space<vmem>>, vector<1x32xf32>
    %cst = arith.constant dense<0.000000e+00> : vector<16xf32>
    %3 = vector.multi_reduction <add>, %0, %cst [1] : vector<16x32xf32> to vector<16xf32>
    %4 = vector.shape_cast %3 : vector<16xf32> to vector<16x1xf32>
    %cst_5 = arith.constant 3.200000e+01 : f32
    %5 = vector.broadcast %cst_5 : f32 to vector<16x1xf32>
    %6 = arith.divf %4, %5 : vector<16x1xf32>
    %7 = vector.broadcast %6 : vector<16x1xf32> to vector<16x32xf32>
    %8 = arith.subf %0, %7 : vector<16x32xf32>
    %9 = arith.mulf %8, %8 : vector<16x32xf32>
    %cst_6 = arith.constant dense<0.000000e+00> : vector<16xf32>
    %10 = vector.multi_reduction <add>, %9, %cst_6 [1] : vector<16x32xf32> to vector<16xf32>
    %11 = vector.shape_cast %10 : vector<16xf32> to vector<16x1xf32>
    %cst_7 = arith.constant 3.200000e+01 : f32
    %12 = vector.broadcast %cst_7 : f32 to vector<16x1xf32>
    %13 = arith.divf %11, %12 : vector<16x1xf32>
    %cst_8 = arith.constant 9.99999996E-13 : f32
    %14 = vector.broadcast %cst_8 : f32 to vector<16x1xf32>
    %15 = arith.addf %13, %14 : vector<16x1xf32>
    %16 = math.rsqrt %15 : vector<16x1xf32>
    %17 = vector.broadcast %16 : vector<16x1xf32> to vector<16x32xf32>
    %18 = arith.mulf %8, %17 : vector<16x32xf32>
    %19 = vector.broadcast %1 : vector<1x32xf32> to vector<16x32xf32>
    %20 = arith.mulf %18, %19 : vector<16x32xf32>
    %21 = vector.broadcast %2 : vector<1x32xf32> to vector<16x32xf32>
    %22 = arith.addf %20, %21 : vector<16x32xf32>
    %c0_9 = arith.constant 0 : index
    %c0_10 = arith.constant 0 : index
    %c0_11 = arith.constant 0 : index
    %23 = vector.load %arg4[%c0_9, %c0_10, %c0_11] : memref<8x1x8xf32, #tpu.memory_space<vmem>>, vector<8x1x8xf32>
    %c0_12 = arith.constant 0 : index
    %c0_13 = arith.constant 0 : index
    %c0_14 = arith.constant 0 : index
    %24 = vector.load %arg7[%c0_12, %c0_13, %c0_14] : memref<2x32x96xf32, #tpu.memory_space<vmem>>, vector<1x32x96xf32>
    %25 = vector.shape_cast %24 : vector<1x32x96xf32> to vector<32x96xf32>
    %cst_15 = arith.constant dense<0.000000e+00> : vector<16x96xf32>
    %26 = tpu.matmul %22, %25, %cst_15 {dimension_numbers = #tpu.dot_dimension_numbers<[1], [0], [0], [1], [0, 0, 1, 1], [], []>} : vector<16x32xf32>, vector<32x96xf32>, vector<16x96xf32> -> vector<16x96xf32>
    %c0_16 = arith.constant 0 : index
    %c0_17 = arith.constant 0 : index
    %c0_18 = arith.constant 0 : index
    %27 = vector.load %arg8[%c0_16, %c0_17, %c0_18] : memref<2x1x96xf32, #tpu.memory_space<vmem>>, vector<1x1x96xf32>
    %28 = vector.shape_cast %27 : vector<1x1x96xf32> to vector<1x96xf32>
    %29 = vector.broadcast %28 : vector<1x96xf32> to vector<16x96xf32>
    %30 = arith.addf %26, %29 : vector<16x96xf32>
    %31 = vector.extract_strided_slice %30 {offsets = [0, 0], sizes = [8, 8], strides = [1, 1]} : vector<16x96xf32> to vector<8x8xf32>
    %32 = vector.extract_strided_slice %30 {offsets = [0, 32], sizes = [8, 8], strides = [1, 1]} : vector<16x96xf32> to vector<8x8xf32>
    %33 = vector.extract_strided_slice %30 {offsets = [0, 64], sizes = [8, 8], strides = [1, 1]} : vector<16x96xf32> to vector<8x8xf32>
    %34 = vector.extract_strided_slice %30 {offsets = [0, 8], sizes = [8, 8], strides = [1, 1]} : vector<16x96xf32> to vector<8x8xf32>
    %35 = vector.extract_strided_slice %30 {offsets = [0, 40], sizes = [8, 8], strides = [1, 1]} : vector<16x96xf32> to vector<8x8xf32>
    %36 = vector.extract_strided_slice %30 {offsets = [0, 72], sizes = [8, 8], strides = [1, 1]} : vector<16x96xf32> to vector<8x8xf32>
    %37 = vector.extract_strided_slice %30 {offsets = [0, 16], sizes = [8, 8], strides = [1, 1]} : vector<16x96xf32> to vector<8x8xf32>
    %38 = vector.extract_strided_slice %30 {offsets = [0, 48], sizes = [8, 8], strides = [1, 1]} : vector<16x96xf32> to vector<8x8xf32>
    %39 = vector.extract_strided_slice %30 {offsets = [0, 80], sizes = [8, 8], strides = [1, 1]} : vector<16x96xf32> to vector<8x8xf32>
    %40 = vector.extract_strided_slice %30 {offsets = [0, 24], sizes = [8, 8], strides = [1, 1]} : vector<16x96xf32> to vector<8x8xf32>
    %41 = vector.extract_strided_slice %30 {offsets = [0, 56], sizes = [8, 8], strides = [1, 1]} : vector<16x96xf32> to vector<8x8xf32>
    %42 = vector.extract_strided_slice %30 {offsets = [0, 88], sizes = [8, 8], strides = [1, 1]} : vector<16x96xf32> to vector<8x8xf32>
    %43 = vector.extract_strided_slice %30 {offsets = [8, 0], sizes = [8, 8], strides = [1, 1]} : vector<16x96xf32> to vector<8x8xf32>
    %44 = vector.extract_strided_slice %30 {offsets = [8, 32], sizes = [8, 8], strides = [1, 1]} : vector<16x96xf32> to vector<8x8xf32>
    %45 = vector.extract_strided_slice %30 {offsets = [8, 64], sizes = [8, 8], strides = [1, 1]} : vector<16x96xf32> to vector<8x8xf32>
    %46 = vector.extract_strided_slice %30 {offsets = [8, 8], sizes = [8, 8], strides = [1, 1]} : vector<16x96xf32> to vector<8x8xf32>
    %47 = vector.extract_strided_slice %30 {offsets = [8, 40], sizes = [8, 8], strides = [1, 1]} : vector<16x96xf32> to vector<8x8xf32>
    %48 = vector.extract_strided_slice %30 {offsets = [8, 72], sizes = [8, 8], strides = [1, 1]} : vector<16x96xf32> to vector<8x8xf32>
    %49 = vector.extract_strided_slice %30 {offsets = [8, 16], sizes = [8, 8], strides = [1, 1]} : vector<16x96xf32> to vector<8x8xf32>
    %50 = vector.extract_strided_slice %30 {offsets = [8, 48], sizes = [8, 8], strides = [1, 1]} : vector<16x96xf32> to vector<8x8xf32>
    %51 = vector.extract_strided_slice %30 {offsets = [8, 80], sizes = [8, 8], strides = [1, 1]} : vector<16x96xf32> to vector<8x8xf32>
    %52 = vector.extract_strided_slice %30 {offsets = [8, 24], sizes = [8, 8], strides = [1, 1]} : vector<16x96xf32> to vector<8x8xf32>
    %53 = vector.extract_strided_slice %30 {offsets = [8, 56], sizes = [8, 8], strides = [1, 1]} : vector<16x96xf32> to vector<8x8xf32>
    %54 = vector.extract_strided_slice %30 {offsets = [8, 88], sizes = [8, 8], strides = [1, 1]} : vector<16x96xf32> to vector<8x8xf32>
    %55 = vector.shape_cast %31 : vector<8x8xf32> to vector<1x8x8xf32>
    %56 = vector.shape_cast %34 : vector<8x8xf32> to vector<1x8x8xf32>
    %57 = vector.shape_cast %37 : vector<8x8xf32> to vector<1x8x8xf32>
    %58 = vector.shape_cast %40 : vector<8x8xf32> to vector<1x8x8xf32>
    %59 = vector.shape_cast %43 : vector<8x8xf32> to vector<1x8x8xf32>
    %60 = vector.shape_cast %46 : vector<8x8xf32> to vector<1x8x8xf32>
    %61 = vector.shape_cast %49 : vector<8x8xf32> to vector<1x8x8xf32>
    %62 = vector.shape_cast %52 : vector<8x8xf32> to vector<1x8x8xf32>
    %63 = tpu.concatenate %55, %56, %57, %58, %59, %60, %61, %62 in 0 : vector<1x8x8xf32>, vector<1x8x8xf32>, vector<1x8x8xf32>, vector<1x8x8xf32>, vector<1x8x8xf32>, vector<1x8x8xf32>, vector<1x8x8xf32>, vector<1x8x8xf32> -> vector<8x8x8xf32>
    %64 = vector.shape_cast %32 : vector<8x8xf32> to vector<1x8x8xf32>
    %65 = vector.shape_cast %35 : vector<8x8xf32> to vector<1x8x8xf32>
    %66 = vector.shape_cast %38 : vector<8x8xf32> to vector<1x8x8xf32>
    %67 = vector.shape_cast %41 : vector<8x8xf32> to vector<1x8x8xf32>
    %68 = vector.shape_cast %44 : vector<8x8xf32> to vector<1x8x8xf32>
    %69 = vector.shape_cast %47 : vector<8x8xf32> to vector<1x8x8xf32>
    %70 = vector.shape_cast %50 : vector<8x8xf32> to vector<1x8x8xf32>
    %71 = vector.shape_cast %53 : vector<8x8xf32> to vector<1x8x8xf32>
    %72 = tpu.concatenate %64, %65, %66, %67, %68, %69, %70, %71 in 0 : vector<1x8x8xf32>, vector<1x8x8xf32>, vector<1x8x8xf32>, vector<1x8x8xf32>, vector<1x8x8xf32>, vector<1x8x8xf32>, vector<1x8x8xf32>, vector<1x8x8xf32> -> vector<8x8x8xf32>
    %73 = vector.shape_cast %33 : vector<8x8xf32> to vector<1x8x8xf32>
    %74 = vector.shape_cast %36 : vector<8x8xf32> to vector<1x8x8xf32>
    %75 = vector.shape_cast %39 : vector<8x8xf32> to vector<1x8x8xf32>
    %76 = vector.shape_cast %42 : vector<8x8xf32> to vector<1x8x8xf32>
    %77 = vector.shape_cast %45 : vector<8x8xf32> to vector<1x8x8xf32>
    %78 = vector.shape_cast %48 : vector<8x8xf32> to vector<1x8x8xf32>
    %79 = vector.shape_cast %51 : vector<8x8xf32> to vector<1x8x8xf32>
    %80 = vector.shape_cast %54 : vector<8x8xf32> to vector<1x8x8xf32>
    %81 = tpu.concatenate %73, %74, %75, %76, %77, %78, %79, %80 in 0 : vector<1x8x8xf32>, vector<1x8x8xf32>, vector<1x8x8xf32>, vector<1x8x8xf32>, vector<1x8x8xf32>, vector<1x8x8xf32>, vector<1x8x8xf32>, vector<1x8x8xf32> -> vector<8x8x8xf32>
    "tpu.trace_start"() <{level = 10 : i32, message = "gsd,gtd->gst"}> : () -> ()
    %cst_19 = arith.constant dense<0.000000e+00> : vector<8x8x8xf32>
    %82 = tpu.matmul %63, %72, %cst_19 {dimension_numbers = #tpu.dot_dimension_numbers<[2], [2], [1], [1], [0, 0, 0, 1, 1, 1], [0], [0]>} : vector<8x8x8xf32>, vector<8x8x8xf32>, vector<8x8x8xf32> -> vector<8x8x8xf32>
    "tpu.trace_stop"() : () -> ()
    %cst_20 = arith.constant 0.353553385 : f32
    %83 = vector.broadcast %cst_20 : f32 to vector<8x8x8xf32>
    %84 = arith.mulf %82, %83 : vector<8x8x8xf32>
    %85 = vector.broadcast %23 : vector<8x1x8xf32> to vector<8x8x8xf32>
    %86 = arith.addf %84, %85 : vector<8x8x8xf32>
    %cst_21 = arith.constant dense<0xFF800000> : vector<8x8xf32>
    %87 = vector.multi_reduction <maximumf>, %86, %cst_21 [2] : vector<8x8x8xf32> to vector<8x8xf32>
    %88 = vector.shape_cast %87 : vector<8x8xf32> to vector<8x8x1xf32>
    %89 = vector.broadcast %88 : vector<8x8x1xf32> to vector<8x8x8xf32>
    %90 = arith.subf %86, %89 : vector<8x8x8xf32>
    %91 = math.exp %90 : vector<8x8x8xf32>
    %cst_22 = arith.constant dense<0.000000e+00> : vector<8x8xf32>
    %92 = vector.multi_reduction <add>, %91, %cst_22 [2] : vector<8x8x8xf32> to vector<8x8xf32>
    %93 = vector.shape_cast %92 : vector<8x8xf32> to vector<8x8x1xf32>
    %94 = tpu.reciprocal %93 {approx = true} : vector<8x8x1xf32> -> vector<8x8x1xf32>
    %95 = vector.broadcast %94 : vector<8x8x1xf32> to vector<8x8x8xf32>
    %96 = arith.mulf %91, %95 : vector<8x8x8xf32>
    "tpu.trace_start"() <{level = 10 : i32, message = "gst,gtd->gsd"}> : () -> ()
    %cst_23 = arith.constant dense<0.000000e+00> : vector<8x8x8xf32>
    %97 = tpu.matmul %96, %81, %cst_23 {dimension_numbers = #tpu.dot_dimension_numbers<[2], [1], [1], [2], [0, 0, 0, 1, 1, 2], [0], [0]>} : vector<8x8x8xf32>, vector<8x8x8xf32>, vector<8x8x8xf32> -> vector<8x8x8xf32>
    "tpu.trace_stop"() : () -> ()
    %98 = vector.extract_strided_slice %97 {offsets = [0, 0, 0], sizes = [1, 8, 8], strides = [1, 1, 1]} : vector<8x8x8xf32> to vector<1x8x8xf32>
    %99 = vector.shape_cast %98 : vector<1x8x8xf32> to vector<8x8xf32>
    %100 = vector.extract_strided_slice %97 {offsets = [1, 0, 0], sizes = [1, 8, 8], strides = [1, 1, 1]} : vector<8x8x8xf32> to vector<1x8x8xf32>
    %101 = vector.shape_cast %100 : vector<1x8x8xf32> to vector<8x8xf32>
    %102 = vector.extract_strided_slice %97 {offsets = [2, 0, 0], sizes = [1, 8, 8], strides = [1, 1, 1]} : vector<8x8x8xf32> to vector<1x8x8xf32>
    %103 = vector.shape_cast %102 : vector<1x8x8xf32> to vector<8x8xf32>
    %104 = vector.extract_strided_slice %97 {offsets = [3, 0, 0], sizes = [1, 8, 8], strides = [1, 1, 1]} : vector<8x8x8xf32> to vector<1x8x8xf32>
    %105 = vector.shape_cast %104 : vector<1x8x8xf32> to vector<8x8xf32>
    %106 = tpu.concatenate %99, %101, %103, %105 in 1 : vector<8x8xf32>, vector<8x8xf32>, vector<8x8xf32>, vector<8x8xf32> -> vector<8x32xf32>
    %107 = vector.extract_strided_slice %97 {offsets = [4, 0, 0], sizes = [1, 8, 8], strides = [1, 1, 1]} : vector<8x8x8xf32> to vector<1x8x8xf32>
    %108 = vector.shape_cast %107 : vector<1x8x8xf32> to vector<8x8xf32>
    %109 = vector.extract_strided_slice %97 {offsets = [5, 0, 0], sizes = [1, 8, 8], strides = [1, 1, 1]} : vector<8x8x8xf32> to vector<1x8x8xf32>
    %110 = vector.shape_cast %109 : vector<1x8x8xf32> to vector<8x8xf32>
    %111 = vector.extract_strided_slice %97 {offsets = [6, 0, 0], sizes = [1, 8, 8], strides = [1, 1, 1]} : vector<8x8x8xf32> to vector<1x8x8xf32>
    %112 = vector.shape_cast %111 : vector<1x8x8xf32> to vector<8x8xf32>
    %113 = vector.extract_strided_slice %97 {offsets = [7, 0, 0], sizes = [1, 8, 8], strides = [1, 1, 1]} : vector<8x8x8xf32> to vector<1x8x8xf32>
    %114 = vector.shape_cast %113 : vector<1x8x8xf32> to vector<8x8xf32>
    %115 = tpu.concatenate %108, %110, %112, %114 in 1 : vector<8x8xf32>, vector<8x8xf32>, vector<8x8xf32>, vector<8x8xf32> -> vector<8x32xf32>
    %116 = tpu.concatenate %106, %115 in 0 : vector<8x32xf32>, vector<8x32xf32> -> vector<16x32xf32>
    %c0_24 = arith.constant 0 : index
    %c0_25 = arith.constant 0 : index
    %c0_26 = arith.constant 0 : index
    %117 = vector.load %arg9[%c0_24, %c0_25, %c0_26] : memref<2x32x32xf32, #tpu.memory_space<vmem>>, vector<1x32x32xf32>
    %118 = vector.shape_cast %117 : vector<1x32x32xf32> to vector<32x32xf32>
    %cst_27 = arith.constant dense<0.000000e+00> : vector<16x32xf32>
    %119 = tpu.matmul %116, %118, %cst_27 {dimension_numbers = #tpu.dot_dimension_numbers<[1], [0], [0], [1], [0, 0, 1, 1], [], []>} : vector<16x32xf32>, vector<32x32xf32>, vector<16x32xf32> -> vector<16x32xf32>
    %c0_28 = arith.constant 0 : index
    %c0_29 = arith.constant 0 : index
    %c0_30 = arith.constant 0 : index
    %120 = vector.load %arg10[%c0_28, %c0_29, %c0_30] : memref<2x1x32xf32, #tpu.memory_space<vmem>>, vector<1x1x32xf32>
    %121 = vector.shape_cast %120 : vector<1x1x32xf32> to vector<1x32xf32>
    %122 = vector.broadcast %121 : vector<1x32xf32> to vector<16x32xf32>
    %123 = arith.addf %119, %122 : vector<16x32xf32>
    %124 = arith.addf %123, %22 : vector<16x32xf32>
    %c0_31 = arith.constant 0 : index
    %c0_32 = arith.constant 0 : index
    %c0_33 = arith.constant 0 : index
    %125 = vector.load %arg11[%c0_31, %c0_32, %c0_33] : memref<2x1x32xf32, #tpu.memory_space<vmem>>, vector<1x1x32xf32>
    %126 = vector.shape_cast %125 : vector<1x1x32xf32> to vector<1x32xf32>
    %c0_34 = arith.constant 0 : index
    %c0_35 = arith.constant 0 : index
    %c0_36 = arith.constant 0 : index
    %127 = vector.load %arg12[%c0_34, %c0_35, %c0_36] : memref<2x1x32xf32, #tpu.memory_space<vmem>>, vector<1x1x32xf32>
    %128 = vector.shape_cast %127 : vector<1x1x32xf32> to vector<1x32xf32>
    %cst_37 = arith.constant dense<0.000000e+00> : vector<16xf32>
    %129 = vector.multi_reduction <add>, %124, %cst_37 [1] : vector<16x32xf32> to vector<16xf32>
    %130 = vector.shape_cast %129 : vector<16xf32> to vector<16x1xf32>
    %cst_38 = arith.constant 3.200000e+01 : f32
    %131 = vector.broadcast %cst_38 : f32 to vector<16x1xf32>
    %132 = arith.divf %130, %131 : vector<16x1xf32>
    %133 = vector.broadcast %132 : vector<16x1xf32> to vector<16x32xf32>
    %134 = arith.subf %124, %133 : vector<16x32xf32>
    %135 = arith.mulf %134, %134 : vector<16x32xf32>
    %cst_39 = arith.constant dense<0.000000e+00> : vector<16xf32>
    %136 = vector.multi_reduction <add>, %135, %cst_39 [1] : vector<16x32xf32> to vector<16xf32>
    %137 = vector.shape_cast %136 : vector<16xf32> to vector<16x1xf32>
    %cst_40 = arith.constant 3.200000e+01 : f32
    %138 = vector.broadcast %cst_40 : f32 to vector<16x1xf32>
    %139 = arith.divf %137, %138 : vector<16x1xf32>
    %cst_41 = arith.constant 9.99999996E-13 : f32
    %140 = vector.broadcast %cst_41 : f32 to vector<16x1xf32>
    %141 = arith.addf %139, %140 : vector<16x1xf32>
    %142 = math.rsqrt %141 : vector<16x1xf32>
    %143 = vector.broadcast %142 : vector<16x1xf32> to vector<16x32xf32>
    %144 = arith.mulf %134, %143 : vector<16x32xf32>
    %145 = vector.broadcast %126 : vector<1x32xf32> to vector<16x32xf32>
    %146 = arith.mulf %144, %145 : vector<16x32xf32>
    %147 = vector.broadcast %128 : vector<1x32xf32> to vector<16x32xf32>
    %148 = arith.addf %146, %147 : vector<16x32xf32>
    %c0_42 = arith.constant 0 : index
    %c0_43 = arith.constant 0 : index
    %c0_44 = arith.constant 0 : index
    %149 = vector.load %arg13[%c0_42, %c0_43, %c0_44] : memref<2x32x64xf32, #tpu.memory_space<vmem>>, vector<1x32x64xf32>
    %150 = vector.shape_cast %149 : vector<1x32x64xf32> to vector<32x64xf32>
    %cst_45 = arith.constant dense<0.000000e+00> : vector<16x64xf32>
    %151 = tpu.matmul %148, %150, %cst_45 {dimension_numbers = #tpu.dot_dimension_numbers<[1], [0], [0], [1], [0, 0, 1, 1], [], []>} : vector<16x32xf32>, vector<32x64xf32>, vector<16x64xf32> -> vector<16x64xf32>
    %c0_46 = arith.constant 0 : index
    %c0_47 = arith.constant 0 : index
    %c0_48 = arith.constant 0 : index
    %152 = vector.load %arg14[%c0_46, %c0_47, %c0_48] : memref<2x1x64xf32, #tpu.memory_space<vmem>>, vector<1x1x64xf32>
    %153 = vector.shape_cast %152 : vector<1x1x64xf32> to vector<1x64xf32>
    %154 = vector.broadcast %153 : vector<1x64xf32> to vector<16x64xf32>
    %155 = arith.addf %151, %154 : vector<16x64xf32>
    %cst_49 = arith.constant 5.000000e-01 : f32
    %156 = vector.broadcast %cst_49 : f32 to vector<16x64xf32>
    %157 = arith.mulf %156, %155 : vector<16x64xf32>
    %cst_50 = arith.constant 4.471500e-02 : f32
    %158 = vector.broadcast %cst_50 : f32 to vector<16x64xf32>
    %159 = arith.mulf %158, %155 : vector<16x64xf32>
    %160 = arith.mulf %159, %155 : vector<16x64xf32>
    %161 = arith.mulf %160, %155 : vector<16x64xf32>
    %162 = arith.addf %155, %161 : vector<16x64xf32>
    %cst_51 = arith.constant 0.797884583 : f32
    %163 = vector.broadcast %cst_51 : f32 to vector<16x64xf32>
    %164 = arith.mulf %163, %162 : vector<16x64xf32>
    %165 = math.tanh %164 : vector<16x64xf32>
    %cst_52 = arith.constant 1.000000e+00 : f32
    %166 = vector.broadcast %cst_52 : f32 to vector<16x64xf32>
    %167 = arith.addf %166, %165 : vector<16x64xf32>
    %168 = arith.mulf %157, %167 : vector<16x64xf32>
    %c0_53 = arith.constant 0 : index
    %c0_54 = arith.constant 0 : index
    %c0_55 = arith.constant 0 : index
    %169 = vector.load %arg15[%c0_53, %c0_54, %c0_55] : memref<2x64x32xf32, #tpu.memory_space<vmem>>, vector<1x64x32xf32>
    %170 = vector.shape_cast %169 : vector<1x64x32xf32> to vector<64x32xf32>
    %cst_56 = arith.constant dense<0.000000e+00> : vector<16x32xf32>
    %171 = tpu.matmul %168, %170, %cst_56 {dimension_numbers = #tpu.dot_dimension_numbers<[1], [0], [0], [1], [0, 0, 1, 1], [], []>} : vector<16x64xf32>, vector<64x32xf32>, vector<16x32xf32> -> vector<16x32xf32>
    %c0_57 = arith.constant 0 : index
    %c0_58 = arith.constant 0 : index
    %c0_59 = arith.constant 0 : index
    %172 = vector.load %arg16[%c0_57, %c0_58, %c0_59] : memref<2x1x32xf32, #tpu.memory_space<vmem>>, vector<1x1x32xf32>
    %173 = vector.shape_cast %172 : vector<1x1x32xf32> to vector<1x32xf32>
    %174 = vector.broadcast %173 : vector<1x32xf32> to vector<16x32xf32>
    %175 = arith.addf %171, %174 : vector<16x32xf32>
    %176 = arith.addf %175, %148 : vector<16x32xf32>
    %c0_60 = arith.constant 0 : index
    %c0_61 = arith.constant 0 : index
    %c0_62 = arith.constant 0 : index
    %177 = vector.load %arg17[%c0_60, %c0_61, %c0_62] : memref<2x1x32xf32, #tpu.memory_space<vmem>>, vector<1x1x32xf32>
    %178 = vector.shape_cast %177 : vector<1x1x32xf32> to vector<1x32xf32>
    %c0_63 = arith.constant 0 : index
    %c0_64 = arith.constant 0 : index
    %c0_65 = arith.constant 0 : index
    %179 = vector.load %arg18[%c0_63, %c0_64, %c0_65] : memref<2x1x32xf32, #tpu.memory_space<vmem>>, vector<1x1x32xf32>
    %180 = vector.shape_cast %179 : vector<1x1x32xf32> to vector<1x32xf32>
    %cst_66 = arith.constant dense<0.000000e+00> : vector<16xf32>
    %181 = vector.multi_reduction <add>, %176, %cst_66 [1] : vector<16x32xf32> to vector<16xf32>
    %182 = vector.shape_cast %181 : vector<16xf32> to vector<16x1xf32>
    %cst_67 = arith.constant 3.200000e+01 : f32
    %183 = vector.broadcast %cst_67 : f32 to vector<16x1xf32>
    %184 = arith.divf %182, %183 : vector<16x1xf32>
    %185 = vector.broadcast %184 : vector<16x1xf32> to vector<16x32xf32>
    %186 = arith.subf %176, %185 : vector<16x32xf32>
    %187 = arith.mulf %186, %186 : vector<16x32xf32>
    %cst_68 = arith.constant dense<0.000000e+00> : vector<16xf32>
    %188 = vector.multi_reduction <add>, %187, %cst_68 [1] : vector<16x32xf32> to vector<16xf32>
    %189 = vector.shape_cast %188 : vector<16xf32> to vector<16x1xf32>
    %cst_69 = arith.constant 3.200000e+01 : f32
    %190 = vector.broadcast %cst_69 : f32 to vector<16x1xf32>
    %191 = arith.divf %189, %190 : vector<16x1xf32>
    %cst_70 = arith.constant 9.99999996E-13 : f32
    %192 = vector.broadcast %cst_70 : f32 to vector<16x1xf32>
    %193 = arith.addf %191, %192 : vector<16x1xf32>
    %194 = math.rsqrt %193 : vector<16x1xf32>
    %195 = vector.broadcast %194 : vector<16x1xf32> to vector<16x32xf32>
    %196 = arith.mulf %186, %195 : vector<16x32xf32>
    %197 = vector.broadcast %178 : vector<1x32xf32> to vector<16x32xf32>
    %198 = arith.mulf %196, %197 : vector<16x32xf32>
    %199 = vector.broadcast %180 : vector<1x32xf32> to vector<16x32xf32>
    %200 = arith.addf %198, %199 : vector<16x32xf32>
    %c1 = arith.constant 1 : index
    %c0_71 = arith.constant 0 : index
    %c0_72 = arith.constant 0 : index
    %201 = vector.load %arg7[%c1, %c0_71, %c0_72] : memref<2x32x96xf32, #tpu.memory_space<vmem>>, vector<1x32x96xf32>
    %202 = vector.shape_cast %201 : vector<1x32x96xf32> to vector<32x96xf32>
    %cst_73 = arith.constant dense<0.000000e+00> : vector<16x96xf32>
    %203 = tpu.matmul %200, %202, %cst_73 {dimension_numbers = #tpu.dot_dimension_numbers<[1], [0], [0], [1], [0, 0, 1, 1], [], []>} : vector<16x32xf32>, vector<32x96xf32>, vector<16x96xf32> -> vector<16x96xf32>
    %c1_74 = arith.constant 1 : index
    %c0_75 = arith.constant 0 : index
    %c0_76 = arith.constant 0 : index
    %204 = vector.load %arg8[%c1_74, %c0_75, %c0_76] : memref<2x1x96xf32, #tpu.memory_space<vmem>>, vector<1x1x96xf32>
    %205 = vector.shape_cast %204 : vector<1x1x96xf32> to vector<1x96xf32>
    %206 = vector.broadcast %205 : vector<1x96xf32> to vector<16x96xf32>
    %207 = arith.addf %203, %206 : vector<16x96xf32>
    %208 = vector.extract_strided_slice %207 {offsets = [0, 0], sizes = [8, 8], strides = [1, 1]} : vector<16x96xf32> to vector<8x8xf32>
    %209 = vector.extract_strided_slice %207 {offsets = [0, 32], sizes = [8, 8], strides = [1, 1]} : vector<16x96xf32> to vector<8x8xf32>
    %210 = vector.extract_strided_slice %207 {offsets = [0, 64], sizes = [8, 8], strides = [1, 1]} : vector<16x96xf32> to vector<8x8xf32>
    %211 = vector.extract_strided_slice %207 {offsets = [0, 8], sizes = [8, 8], strides = [1, 1]} : vector<16x96xf32> to vector<8x8xf32>
    %212 = vector.extract_strided_slice %207 {offsets = [0, 40], sizes = [8, 8], strides = [1, 1]} : vector<16x96xf32> to vector<8x8xf32>
    %213 = vector.extract_strided_slice %207 {offsets = [0, 72], sizes = [8, 8], strides = [1, 1]} : vector<16x96xf32> to vector<8x8xf32>
    %214 = vector.extract_strided_slice %207 {offsets = [0, 16], sizes = [8, 8], strides = [1, 1]} : vector<16x96xf32> to vector<8x8xf32>
    %215 = vector.extract_strided_slice %207 {offsets = [0, 48], sizes = [8, 8], strides = [1, 1]} : vector<16x96xf32> to vector<8x8xf32>
    %216 = vector.extract_strided_slice %207 {offsets = [0, 80], sizes = [8, 8], strides = [1, 1]} : vector<16x96xf32> to vector<8x8xf32>
    %217 = vector.extract_strided_slice %207 {offsets = [0, 24], sizes = [8, 8], strides = [1, 1]} : vector<16x96xf32> to vector<8x8xf32>
    %218 = vector.extract_strided_slice %207 {offsets = [0, 56], sizes = [8, 8], strides = [1, 1]} : vector<16x96xf32> to vector<8x8xf32>
    %219 = vector.extract_strided_slice %207 {offsets = [0, 88], sizes = [8, 8], strides = [1, 1]} : vector<16x96xf32> to vector<8x8xf32>
    %220 = vector.extract_strided_slice %207 {offsets = [8, 0], sizes = [8, 8], strides = [1, 1]} : vector<16x96xf32> to vector<8x8xf32>
    %221 = vector.extract_strided_slice %207 {offsets = [8, 32], sizes = [8, 8], strides = [1, 1]} : vector<16x96xf32> to vector<8x8xf32>
    %222 = vector.extract_strided_slice %207 {offsets = [8, 64], sizes = [8, 8], strides = [1, 1]} : vector<16x96xf32> to vector<8x8xf32>
    %223 = vector.extract_strided_slice %207 {offsets = [8, 8], sizes = [8, 8], strides = [1, 1]} : vector<16x96xf32> to vector<8x8xf32>
    %224 = vector.extract_strided_slice %207 {offsets = [8, 40], sizes = [8, 8], strides = [1, 1]} : vector<16x96xf32> to vector<8x8xf32>
    %225 = vector.extract_strided_slice %207 {offsets = [8, 72], sizes = [8, 8], strides = [1, 1]} : vector<16x96xf32> to vector<8x8xf32>
    %226 = vector.extract_strided_slice %207 {offsets = [8, 16], sizes = [8, 8], strides = [1, 1]} : vector<16x96xf32> to vector<8x8xf32>
    %227 = vector.extract_strided_slice %207 {offsets = [8, 48], sizes = [8, 8], strides = [1, 1]} : vector<16x96xf32> to vector<8x8xf32>
    %228 = vector.extract_strided_slice %207 {offsets = [8, 80], sizes = [8, 8], strides = [1, 1]} : vector<16x96xf32> to vector<8x8xf32>
    %229 = vector.extract_strided_slice %207 {offsets = [8, 24], sizes = [8, 8], strides = [1, 1]} : vector<16x96xf32> to vector<8x8xf32>
    %230 = vector.extract_strided_slice %207 {offsets = [8, 56], sizes = [8, 8], strides = [1, 1]} : vector<16x96xf32> to vector<8x8xf32>
    %231 = vector.extract_strided_slice %207 {offsets = [8, 88], sizes = [8, 8], strides = [1, 1]} : vector<16x96xf32> to vector<8x8xf32>
    %232 = vector.shape_cast %208 : vector<8x8xf32> to vector<1x8x8xf32>
    %233 = vector.shape_cast %211 : vector<8x8xf32> to vector<1x8x8xf32>
    %234 = vector.shape_cast %214 : vector<8x8xf32> to vector<1x8x8xf32>
    %235 = vector.shape_cast %217 : vector<8x8xf32> to vector<1x8x8xf32>
    %236 = vector.shape_cast %220 : vector<8x8xf32> to vector<1x8x8xf32>
    %237 = vector.shape_cast %223 : vector<8x8xf32> to vector<1x8x8xf32>
    %238 = vector.shape_cast %226 : vector<8x8xf32> to vector<1x8x8xf32>
    %239 = vector.shape_cast %229 : vector<8x8xf32> to vector<1x8x8xf32>
    %240 = tpu.concatenate %232, %233, %234, %235, %236, %237, %238, %239 in 0 : vector<1x8x8xf32>, vector<1x8x8xf32>, vector<1x8x8xf32>, vector<1x8x8xf32>, vector<1x8x8xf32>, vector<1x8x8xf32>, vector<1x8x8xf32>, vector<1x8x8xf32> -> vector<8x8x8xf32>
    %241 = vector.shape_cast %209 : vector<8x8xf32> to vector<1x8x8xf32>
    %242 = vector.shape_cast %212 : vector<8x8xf32> to vector<1x8x8xf32>
    %243 = vector.shape_cast %215 : vector<8x8xf32> to vector<1x8x8xf32>
    %244 = vector.shape_cast %218 : vector<8x8xf32> to vector<1x8x8xf32>
    %245 = vector.shape_cast %221 : vector<8x8xf32> to vector<1x8x8xf32>
    %246 = vector.shape_cast %224 : vector<8x8xf32> to vector<1x8x8xf32>
    %247 = vector.shape_cast %227 : vector<8x8xf32> to vector<1x8x8xf32>
    %248 = vector.shape_cast %230 : vector<8x8xf32> to vector<1x8x8xf32>
    %249 = tpu.concatenate %241, %242, %243, %244, %245, %246, %247, %248 in 0 : vector<1x8x8xf32>, vector<1x8x8xf32>, vector<1x8x8xf32>, vector<1x8x8xf32>, vector<1x8x8xf32>, vector<1x8x8xf32>, vector<1x8x8xf32>, vector<1x8x8xf32> -> vector<8x8x8xf32>
    %250 = vector.shape_cast %210 : vector<8x8xf32> to vector<1x8x8xf32>
    %251 = vector.shape_cast %213 : vector<8x8xf32> to vector<1x8x8xf32>
    %252 = vector.shape_cast %216 : vector<8x8xf32> to vector<1x8x8xf32>
    %253 = vector.shape_cast %219 : vector<8x8xf32> to vector<1x8x8xf32>
    %254 = vector.shape_cast %222 : vector<8x8xf32> to vector<1x8x8xf32>
    %255 = vector.shape_cast %225 : vector<8x8xf32> to vector<1x8x8xf32>
    %256 = vector.shape_cast %228 : vector<8x8xf32> to vector<1x8x8xf32>
    %257 = vector.shape_cast %231 : vector<8x8xf32> to vector<1x8x8xf32>
    %258 = tpu.concatenate %250, %251, %252, %253, %254, %255, %256, %257 in 0 : vector<1x8x8xf32>, vector<1x8x8xf32>, vector<1x8x8xf32>, vector<1x8x8xf32>, vector<1x8x8xf32>, vector<1x8x8xf32>, vector<1x8x8xf32>, vector<1x8x8xf32> -> vector<8x8x8xf32>
    "tpu.trace_start"() <{level = 10 : i32, message = "gsd,gtd->gst"}> : () -> ()
    %cst_77 = arith.constant dense<0.000000e+00> : vector<8x8x8xf32>
    %259 = tpu.matmul %240, %249, %cst_77 {dimension_numbers = #tpu.dot_dimension_numbers<[2], [2], [1], [1], [0, 0, 0, 1, 1, 1], [0], [0]>} : vector<8x8x8xf32>, vector<8x8x8xf32>, vector<8x8x8xf32> -> vector<8x8x8xf32>
    "tpu.trace_stop"() : () -> ()
    %cst_78 = arith.constant 0.353553385 : f32
    %260 = vector.broadcast %cst_78 : f32 to vector<8x8x8xf32>
    %261 = arith.mulf %259, %260 : vector<8x8x8xf32>
    %262 = vector.broadcast %23 : vector<8x1x8xf32> to vector<8x8x8xf32>
    %263 = arith.addf %261, %262 : vector<8x8x8xf32>
    %cst_79 = arith.constant dense<0xFF800000> : vector<8x8xf32>
    %264 = vector.multi_reduction <maximumf>, %263, %cst_79 [2] : vector<8x8x8xf32> to vector<8x8xf32>
    %265 = vector.shape_cast %264 : vector<8x8xf32> to vector<8x8x1xf32>
    %266 = vector.broadcast %265 : vector<8x8x1xf32> to vector<8x8x8xf32>
    %267 = arith.subf %263, %266 : vector<8x8x8xf32>
    %268 = math.exp %267 : vector<8x8x8xf32>
    %cst_80 = arith.constant dense<0.000000e+00> : vector<8x8xf32>
    %269 = vector.multi_reduction <add>, %268, %cst_80 [2] : vector<8x8x8xf32> to vector<8x8xf32>
    %270 = vector.shape_cast %269 : vector<8x8xf32> to vector<8x8x1xf32>
    %271 = tpu.reciprocal %270 {approx = true} : vector<8x8x1xf32> -> vector<8x8x1xf32>
    %272 = vector.broadcast %271 : vector<8x8x1xf32> to vector<8x8x8xf32>
    %273 = arith.mulf %268, %272 : vector<8x8x8xf32>
    "tpu.trace_start"() <{level = 10 : i32, message = "gst,gtd->gsd"}> : () -> ()
    %cst_81 = arith.constant dense<0.000000e+00> : vector<8x8x8xf32>
    %274 = tpu.matmul %273, %258, %cst_81 {dimension_numbers = #tpu.dot_dimension_numbers<[2], [1], [1], [2], [0, 0, 0, 1, 1, 2], [0], [0]>} : vector<8x8x8xf32>, vector<8x8x8xf32>, vector<8x8x8xf32> -> vector<8x8x8xf32>
    "tpu.trace_stop"() : () -> ()
    %275 = vector.extract_strided_slice %274 {offsets = [0, 0, 0], sizes = [1, 8, 8], strides = [1, 1, 1]} : vector<8x8x8xf32> to vector<1x8x8xf32>
    %276 = vector.shape_cast %275 : vector<1x8x8xf32> to vector<8x8xf32>
    %277 = vector.extract_strided_slice %274 {offsets = [1, 0, 0], sizes = [1, 8, 8], strides = [1, 1, 1]} : vector<8x8x8xf32> to vector<1x8x8xf32>
    %278 = vector.shape_cast %277 : vector<1x8x8xf32> to vector<8x8xf32>
    %279 = vector.extract_strided_slice %274 {offsets = [2, 0, 0], sizes = [1, 8, 8], strides = [1, 1, 1]} : vector<8x8x8xf32> to vector<1x8x8xf32>
    %280 = vector.shape_cast %279 : vector<1x8x8xf32> to vector<8x8xf32>
    %281 = vector.extract_strided_slice %274 {offsets = [3, 0, 0], sizes = [1, 8, 8], strides = [1, 1, 1]} : vector<8x8x8xf32> to vector<1x8x8xf32>
    %282 = vector.shape_cast %281 : vector<1x8x8xf32> to vector<8x8xf32>
    %283 = tpu.concatenate %276, %278, %280, %282 in 1 : vector<8x8xf32>, vector<8x8xf32>, vector<8x8xf32>, vector<8x8xf32> -> vector<8x32xf32>
    %284 = vector.extract_strided_slice %274 {offsets = [4, 0, 0], sizes = [1, 8, 8], strides = [1, 1, 1]} : vector<8x8x8xf32> to vector<1x8x8xf32>
    %285 = vector.shape_cast %284 : vector<1x8x8xf32> to vector<8x8xf32>
    %286 = vector.extract_strided_slice %274 {offsets = [5, 0, 0], sizes = [1, 8, 8], strides = [1, 1, 1]} : vector<8x8x8xf32> to vector<1x8x8xf32>
    %287 = vector.shape_cast %286 : vector<1x8x8xf32> to vector<8x8xf32>
    %288 = vector.extract_strided_slice %274 {offsets = [6, 0, 0], sizes = [1, 8, 8], strides = [1, 1, 1]} : vector<8x8x8xf32> to vector<1x8x8xf32>
    %289 = vector.shape_cast %288 : vector<1x8x8xf32> to vector<8x8xf32>
    %290 = vector.extract_strided_slice %274 {offsets = [7, 0, 0], sizes = [1, 8, 8], strides = [1, 1, 1]} : vector<8x8x8xf32> to vector<1x8x8xf32>
    %291 = vector.shape_cast %290 : vector<1x8x8xf32> to vector<8x8xf32>
    %292 = tpu.concatenate %285, %287, %289, %291 in 1 : vector<8x8xf32>, vector<8x8xf32>, vector<8x8xf32>, vector<8x8xf32> -> vector<8x32xf32>
    %293 = tpu.concatenate %283, %292 in 0 : vector<8x32xf32>, vector<8x32xf32> -> vector<16x32xf32>
    %c1_82 = arith.constant 1 : index
    %c0_83 = arith.constant 0 : index
    %c0_84 = arith.constant 0 : index
    %294 = vector.load %arg9[%c1_82, %c0_83, %c0_84] : memref<2x32x32xf32, #tpu.memory_space<vmem>>, vector<1x32x32xf32>
    %295 = vector.shape_cast %294 : vector<1x32x32xf32> to vector<32x32xf32>
    %cst_85 = arith.constant dense<0.000000e+00> : vector<16x32xf32>
    %296 = tpu.matmul %293, %295, %cst_85 {dimension_numbers = #tpu.dot_dimension_numbers<[1], [0], [0], [1], [0, 0, 1, 1], [], []>} : vector<16x32xf32>, vector<32x32xf32>, vector<16x32xf32> -> vector<16x32xf32>
    %c1_86 = arith.constant 1 : index
    %c0_87 = arith.constant 0 : index
    %c0_88 = arith.constant 0 : index
    %297 = vector.load %arg10[%c1_86, %c0_87, %c0_88] : memref<2x1x32xf32, #tpu.memory_space<vmem>>, vector<1x1x32xf32>
    %298 = vector.shape_cast %297 : vector<1x1x32xf32> to vector<1x32xf32>
    %299 = vector.broadcast %298 : vector<1x32xf32> to vector<16x32xf32>
    %300 = arith.addf %296, %299 : vector<16x32xf32>
    %301 = arith.addf %300, %200 : vector<16x32xf32>
    %c1_89 = arith.constant 1 : index
    %c0_90 = arith.constant 0 : index
    %c0_91 = arith.constant 0 : index
    %302 = vector.load %arg11[%c1_89, %c0_90, %c0_91] : memref<2x1x32xf32, #tpu.memory_space<vmem>>, vector<1x1x32xf32>
    %303 = vector.shape_cast %302 : vector<1x1x32xf32> to vector<1x32xf32>
    %c1_92 = arith.constant 1 : index
    %c0_93 = arith.constant 0 : index
    %c0_94 = arith.constant 0 : index
    %304 = vector.load %arg12[%c1_92, %c0_93, %c0_94] : memref<2x1x32xf32, #tpu.memory_space<vmem>>, vector<1x1x32xf32>
    %305 = vector.shape_cast %304 : vector<1x1x32xf32> to vector<1x32xf32>
    %cst_95 = arith.constant dense<0.000000e+00> : vector<16xf32>
    %306 = vector.multi_reduction <add>, %301, %cst_95 [1] : vector<16x32xf32> to vector<16xf32>
    %307 = vector.shape_cast %306 : vector<16xf32> to vector<16x1xf32>
    %cst_96 = arith.constant 3.200000e+01 : f32
    %308 = vector.broadcast %cst_96 : f32 to vector<16x1xf32>
    %309 = arith.divf %307, %308 : vector<16x1xf32>
    %310 = vector.broadcast %309 : vector<16x1xf32> to vector<16x32xf32>
    %311 = arith.subf %301, %310 : vector<16x32xf32>
    %312 = arith.mulf %311, %311 : vector<16x32xf32>
    %cst_97 = arith.constant dense<0.000000e+00> : vector<16xf32>
    %313 = vector.multi_reduction <add>, %312, %cst_97 [1] : vector<16x32xf32> to vector<16xf32>
    %314 = vector.shape_cast %313 : vector<16xf32> to vector<16x1xf32>
    %cst_98 = arith.constant 3.200000e+01 : f32
    %315 = vector.broadcast %cst_98 : f32 to vector<16x1xf32>
    %316 = arith.divf %314, %315 : vector<16x1xf32>
    %cst_99 = arith.constant 9.99999996E-13 : f32
    %317 = vector.broadcast %cst_99 : f32 to vector<16x1xf32>
    %318 = arith.addf %316, %317 : vector<16x1xf32>
    %319 = math.rsqrt %318 : vector<16x1xf32>
    %320 = vector.broadcast %319 : vector<16x1xf32> to vector<16x32xf32>
    %321 = arith.mulf %311, %320 : vector<16x32xf32>
    %322 = vector.broadcast %303 : vector<1x32xf32> to vector<16x32xf32>
    %323 = arith.mulf %321, %322 : vector<16x32xf32>
    %324 = vector.broadcast %305 : vector<1x32xf32> to vector<16x32xf32>
    %325 = arith.addf %323, %324 : vector<16x32xf32>
    %c1_100 = arith.constant 1 : index
    %c0_101 = arith.constant 0 : index
    %c0_102 = arith.constant 0 : index
    %326 = vector.load %arg13[%c1_100, %c0_101, %c0_102] : memref<2x32x64xf32, #tpu.memory_space<vmem>>, vector<1x32x64xf32>
    %327 = vector.shape_cast %326 : vector<1x32x64xf32> to vector<32x64xf32>
    %cst_103 = arith.constant dense<0.000000e+00> : vector<16x64xf32>
    %328 = tpu.matmul %325, %327, %cst_103 {dimension_numbers = #tpu.dot_dimension_numbers<[1], [0], [0], [1], [0, 0, 1, 1], [], []>} : vector<16x32xf32>, vector<32x64xf32>, vector<16x64xf32> -> vector<16x64xf32>
    %c1_104 = arith.constant 1 : index
    %c0_105 = arith.constant 0 : index
    %c0_106 = arith.constant 0 : index
    %329 = vector.load %arg14[%c1_104, %c0_105, %c0_106] : memref<2x1x64xf32, #tpu.memory_space<vmem>>, vector<1x1x64xf32>
    %330 = vector.shape_cast %329 : vector<1x1x64xf32> to vector<1x64xf32>
    %331 = vector.broadcast %330 : vector<1x64xf32> to vector<16x64xf32>
    %332 = arith.addf %328, %331 : vector<16x64xf32>
    %cst_107 = arith.constant 5.000000e-01 : f32
    %333 = vector.broadcast %cst_107 : f32 to vector<16x64xf32>
    %334 = arith.mulf %333, %332 : vector<16x64xf32>
    %cst_108 = arith.constant 4.471500e-02 : f32
    %335 = vector.broadcast %cst_108 : f32 to vector<16x64xf32>
    %336 = arith.mulf %335, %332 : vector<16x64xf32>
    %337 = arith.mulf %336, %332 : vector<16x64xf32>
    %338 = arith.mulf %337, %332 : vector<16x64xf32>
    %339 = arith.addf %332, %338 : vector<16x64xf32>
    %cst_109 = arith.constant 0.797884583 : f32
    %340 = vector.broadcast %cst_109 : f32 to vector<16x64xf32>
    %341 = arith.mulf %340, %339 : vector<16x64xf32>
    %342 = math.tanh %341 : vector<16x64xf32>
    %cst_110 = arith.constant 1.000000e+00 : f32
    %343 = vector.broadcast %cst_110 : f32 to vector<16x64xf32>
    %344 = arith.addf %343, %342 : vector<16x64xf32>
    %345 = arith.mulf %334, %344 : vector<16x64xf32>
    %c1_111 = arith.constant 1 : index
    %c0_112 = arith.constant 0 : index
    %c0_113 = arith.constant 0 : index
    %346 = vector.load %arg15[%c1_111, %c0_112, %c0_113] : memref<2x64x32xf32, #tpu.memory_space<vmem>>, vector<1x64x32xf32>
    %347 = vector.shape_cast %346 : vector<1x64x32xf32> to vector<64x32xf32>
    %cst_114 = arith.constant dense<0.000000e+00> : vector<16x32xf32>
    %348 = tpu.matmul %345, %347, %cst_114 {dimension_numbers = #tpu.dot_dimension_numbers<[1], [0], [0], [1], [0, 0, 1, 1], [], []>} : vector<16x64xf32>, vector<64x32xf32>, vector<16x32xf32> -> vector<16x32xf32>
    %c1_115 = arith.constant 1 : index
    %c0_116 = arith.constant 0 : index
    %c0_117 = arith.constant 0 : index
    %349 = vector.load %arg16[%c1_115, %c0_116, %c0_117] : memref<2x1x32xf32, #tpu.memory_space<vmem>>, vector<1x1x32xf32>
    %350 = vector.shape_cast %349 : vector<1x1x32xf32> to vector<1x32xf32>
    %351 = vector.broadcast %350 : vector<1x32xf32> to vector<16x32xf32>
    %352 = arith.addf %348, %351 : vector<16x32xf32>
    %353 = arith.addf %352, %325 : vector<16x32xf32>
    %c1_118 = arith.constant 1 : index
    %c0_119 = arith.constant 0 : index
    %c0_120 = arith.constant 0 : index
    %354 = vector.load %arg17[%c1_118, %c0_119, %c0_120] : memref<2x1x32xf32, #tpu.memory_space<vmem>>, vector<1x1x32xf32>
    %355 = vector.shape_cast %354 : vector<1x1x32xf32> to vector<1x32xf32>
    %c1_121 = arith.constant 1 : index
    %c0_122 = arith.constant 0 : index
    %c0_123 = arith.constant 0 : index
    %356 = vector.load %arg18[%c1_121, %c0_122, %c0_123] : memref<2x1x32xf32, #tpu.memory_space<vmem>>, vector<1x1x32xf32>
    %357 = vector.shape_cast %356 : vector<1x1x32xf32> to vector<1x32xf32>
    %cst_124 = arith.constant dense<0.000000e+00> : vector<16xf32>
    %358 = vector.multi_reduction <add>, %353, %cst_124 [1] : vector<16x32xf32> to vector<16xf32>
    %359 = vector.shape_cast %358 : vector<16xf32> to vector<16x1xf32>
    %cst_125 = arith.constant 3.200000e+01 : f32
    %360 = vector.broadcast %cst_125 : f32 to vector<16x1xf32>
    %361 = arith.divf %359, %360 : vector<16x1xf32>
    %362 = vector.broadcast %361 : vector<16x1xf32> to vector<16x32xf32>
    %363 = arith.subf %353, %362 : vector<16x32xf32>
    %364 = arith.mulf %363, %363 : vector<16x32xf32>
    %cst_126 = arith.constant dense<0.000000e+00> : vector<16xf32>
    %365 = vector.multi_reduction <add>, %364, %cst_126 [1] : vector<16x32xf32> to vector<16xf32>
    %366 = vector.shape_cast %365 : vector<16xf32> to vector<16x1xf32>
    %cst_127 = arith.constant 3.200000e+01 : f32
    %367 = vector.broadcast %cst_127 : f32 to vector<16x1xf32>
    %368 = arith.divf %366, %367 : vector<16x1xf32>
    %cst_128 = arith.constant 9.99999996E-13 : f32
    %369 = vector.broadcast %cst_128 : f32 to vector<16x1xf32>
    %370 = arith.addf %368, %369 : vector<16x1xf32>
    %371 = math.rsqrt %370 : vector<16x1xf32>
    %372 = vector.broadcast %371 : vector<16x1xf32> to vector<16x32xf32>
    %373 = arith.mulf %363, %372 : vector<16x32xf32>
    %374 = vector.broadcast %355 : vector<1x32xf32> to vector<16x32xf32>
    %375 = arith.mulf %373, %374 : vector<16x32xf32>
    %376 = vector.broadcast %357 : vector<1x32xf32> to vector<16x32xf32>
    %377 = arith.addf %375, %376 : vector<16x32xf32>
    %c0_129 = arith.constant 0 : index
    %c0_130 = arith.constant 0 : index
    %378 = vector.load %arg20[%c0_129, %c0_130] : memref<16x32xf32, #tpu.memory_space<vmem>>, vector<16x32xf32>
    tpu.vector_store %arg20[%c0_129, %c0_130], %377 {strides = array<i32>} : memref<16x32xf32, #tpu.memory_space<vmem>>, vector<16x32xf32>,
    %c2_i32 = arith.constant 2 : i32
    %379 = arith.muli %arg0, %c2_i32 : i32
    %c0_i32 = arith.constant 0 : i32
    %380 = arith.addi %379, %c0_i32 : i32
    %c3_i32 = arith.constant 3 : i32
    %381 = arith.muli %380, %c3_i32 : i32
    %c0_i32_131 = arith.constant 0 : i32
    %382 = arith.addi %381, %c0_i32_131 : i32
    %383 = arith.index_cast %382 : i32 to index
    %384 = memref.load %arg1[%383] : memref<6xi32, #tpu.memory_space<smem>>
    %c0_i32_132 = arith.constant 0 : i32
    %385 = arith.addi %c0_i32_132, %384 : i32
    %386 = arith.index_cast %385 : i32 to index
    %c0_133 = arith.constant 0 : index
    %387 = vector.load %arg20[%386, %c0_133] : memref<16x32xf32, #tpu.memory_space<vmem>>, vector<1x32xf32>
    %c0_134 = arith.constant 0 : index
    %c0_135 = arith.constant 0 : index
    %c0_136 = arith.constant 0 : index
    %388 = vector.load %arg19[%c0_134, %c0_135, %c0_136] : memref<2x8x32xf32, #tpu.memory_space<vmem>>, vector<1x1x32xf32>
    %389 = vector.shape_cast %388 : vector<1x1x32xf32> to vector<1x32xf32>
    %390 = vector.shape_cast %387 : vector<1x32xf32> to vector<1x1x32xf32>
    tpu.vector_store %arg19[%c0_134, %c0_135, %c0_136], %390 {strides = array<i32>} : memref<2x8x32xf32, #tpu.memory_space<vmem>>, vector<1x1x32xf32>,
    %c2_i32_137 = arith.constant 2 : i32
    %391 = arith.muli %arg0, %c2_i32_137 : i32
    %c0_i32_138 = arith.constant 0 : i32
    %392 = arith.addi %391, %c0_i32_138 : i32
    %c3_i32_139 = arith.constant 3 : i32
    %393 = arith.muli %392, %c3_i32_139 : i32
    %c1_i32 = arith.constant 1 : i32
    %394 = arith.addi %393, %c1_i32 : i32
    %395 = arith.index_cast %394 : i32 to index
    %396 = memref.load %arg1[%395] : memref<6xi32, #tpu.memory_space<smem>>
    %c0_i32_140 = arith.constant 0 : i32
    %397 = arith.addi %c0_i32_140, %396 : i32
    %398 = arith.index_cast %397 : i32 to index
    %c0_141 = arith.constant 0 : index
    %399 = vector.load %arg20[%398, %c0_141] : memref<16x32xf32, #tpu.memory_space<vmem>>, vector<1x32xf32>
    %c0_142 = arith.constant 0 : index
    %c1_143 = arith.constant 1 : index
    %c0_144 = arith.constant 0 : index
    %400 = vector.load %arg19[%c0_142, %c1_143, %c0_144] : memref<2x8x32xf32, #tpu.memory_space<vmem>>, vector<1x1x32xf32>
    %401 = vector.shape_cast %400 : vector<1x1x32xf32> to vector<1x32xf32>
    %402 = vector.shape_cast %399 : vector<1x32xf32> to vector<1x1x32xf32>
    tpu.vector_store %arg19[%c0_142, %c1_143, %c0_144], %402 {strides = array<i32>} : memref<2x8x32xf32, #tpu.memory_space<vmem>>, vector<1x1x32xf32>,
    %c2_i32_145 = arith.constant 2 : i32
    %403 = arith.muli %arg0, %c2_i32_145 : i32
    %c0_i32_146 = arith.constant 0 : i32
    %404 = arith.addi %403, %c0_i32_146 : i32
    %c3_i32_147 = arith.constant 3 : i32
    %405 = arith.muli %404, %c3_i32_147 : i32
    %c2_i32_148 = arith.constant 2 : i32
    %406 = arith.addi %405, %c2_i32_148 : i32
    %407 = arith.index_cast %406 : i32 to index
    %408 = memref.load %arg1[%407] : memref<6xi32, #tpu.memory_space<smem>>
    %c0_i32_149 = arith.constant 0 : i32
    %409 = arith.addi %c0_i32_149, %408 : i32
    %410 = arith.index_cast %409 : i32 to index
    %c0_150 = arith.constant 0 : index
    %411 = vector.load %arg20[%410, %c0_150] : memref<16x32xf32, #tpu.memory_space<vmem>>, vector<1x32xf32>
    %c0_151 = arith.constant 0 : index
    %c2 = arith.constant 2 : index
    %c0_152 = arith.constant 0 : index
    %412 = vector.load %arg19[%c0_151, %c2, %c0_152] : memref<2x8x32xf32, #tpu.memory_space<vmem>>, vector<1x1x32xf32>
    %413 = vector.shape_cast %412 : vector<1x1x32xf32> to vector<1x32xf32>
    %414 = vector.shape_cast %411 : vector<1x32xf32> to vector<1x1x32xf32>
    tpu.vector_store %arg19[%c0_151, %c2, %c0_152], %414 {strides = array<i32>} : memref<2x8x32xf32, #tpu.memory_space<vmem>>, vector<1x1x32xf32>,
    %c2_i32_153 = arith.constant 2 : i32
    %415 = arith.muli %arg0, %c2_i32_153 : i32
    %c0_i32_154 = arith.constant 0 : i32
    %416 = arith.addi %415, %c0_i32_154 : i32
    %c5_i32 = arith.constant 5 : i32
    %417 = arith.muli %416, %c5_i32 : i32
    %c0_i32_155 = arith.constant 0 : i32
    %418 = arith.addi %417, %c0_i32_155 : i32
    %419 = arith.index_cast %418 : i32 to index
    %420 = memref.load %arg2[%419] : memref<10xi32, #tpu.memory_space<smem>>
    %c0_i32_156 = arith.constant 0 : i32
    %421 = arith.addi %c0_i32_156, %420 : i32
    %422 = arith.index_cast %421 : i32 to index
    %c0_157 = arith.constant 0 : index
    %423 = vector.load %arg20[%422, %c0_157] : memref<16x32xf32, #tpu.memory_space<vmem>>, vector<1x32xf32>
    %c0_158 = arith.constant 0 : index
    %c3 = arith.constant 3 : index
    %c0_159 = arith.constant 0 : index
    %424 = vector.load %arg19[%c0_158, %c3, %c0_159] : memref<2x8x32xf32, #tpu.memory_space<vmem>>, vector<1x1x32xf32>
    %425 = vector.shape_cast %424 : vector<1x1x32xf32> to vector<1x32xf32>
    %426 = vector.shape_cast %423 : vector<1x32xf32> to vector<1x1x32xf32>
    tpu.vector_store %arg19[%c0_158, %c3, %c0_159], %426 {strides = array<i32>} : memref<2x8x32xf32, #tpu.memory_space<vmem>>, vector<1x1x32xf32>,
    %c2_i32_160 = arith.constant 2 : i32
    %427 = arith.muli %arg0, %c2_i32_160 : i32
    %c0_i32_161 = arith.constant 0 : i32
    %428 = arith.addi %427, %c0_i32_161 : i32
    %c5_i32_162 = arith.constant 5 : i32
    %429 = arith.muli %428, %c5_i32_162 : i32
    %c1_i32_163 = arith.constant 1 : i32
    %430 = arith.addi %429, %c1_i32_163 : i32
    %431 = arith.index_cast %430 : i32 to index
    %432 = memref.load %arg2[%431] : memref<10xi32, #tpu.memory_space<smem>>
    %c0_i32_164 = arith.constant 0 : i32
    %433 = arith.addi %c0_i32_164, %432 : i32
    %434 = arith.index_cast %433 : i32 to index
    %c0_165 = arith.constant 0 : index
    %435 = vector.load %arg20[%434, %c0_165] : memref<16x32xf32, #tpu.memory_space<vmem>>, vector<1x32xf32>
    %c0_166 = arith.constant 0 : index
    %c4 = arith.constant 4 : index
    %c0_167 = arith.constant 0 : index
    %436 = vector.load %arg19[%c0_166, %c4, %c0_167] : memref<2x8x32xf32, #tpu.memory_space<vmem>>, vector<1x1x32xf32>
    %437 = vector.shape_cast %436 : vector<1x1x32xf32> to vector<1x32xf32>
    %438 = vector.shape_cast %435 : vector<1x32xf32> to vector<1x1x32xf32>
    tpu.vector_store %arg19[%c0_166, %c4, %c0_167], %438 {strides = array<i32>} : memref<2x8x32xf32, #tpu.memory_space<vmem>>, vector<1x1x32xf32>,
    %c2_i32_168 = arith.constant 2 : i32
    %439 = arith.muli %arg0, %c2_i32_168 : i32
    %c0_i32_169 = arith.constant 0 : i32
    %440 = arith.addi %439, %c0_i32_169 : i32
    %c5_i32_170 = arith.constant 5 : i32
    %441 = arith.muli %440, %c5_i32_170 : i32
    %c2_i32_171 = arith.constant 2 : i32
    %442 = arith.addi %441, %c2_i32_171 : i32
    %443 = arith.index_cast %442 : i32 to index
    %444 = memref.load %arg2[%443] : memref<10xi32, #tpu.memory_space<smem>>
    %c0_i32_172 = arith.constant 0 : i32
    %445 = arith.addi %c0_i32_172, %444 : i32
    %446 = arith.index_cast %445 : i32 to index
    %c0_173 = arith.constant 0 : index
    %447 = vector.load %arg20[%446, %c0_173] : memref<16x32xf32, #tpu.memory_space<vmem>>, vector<1x32xf32>
    %c0_174 = arith.constant 0 : index
    %c5 = arith.constant 5 : index
    %c0_175 = arith.constant 0 : index
    %448 = vector.load %arg19[%c0_174, %c5, %c0_175] : memref<2x8x32xf32, #tpu.memory_space<vmem>>, vector<1x1x32xf32>
    %449 = vector.shape_cast %448 : vector<1x1x32xf32> to vector<1x32xf32>
    %450 = vector.shape_cast %447 : vector<1x32xf32> to vector<1x1x32xf32>
    tpu.vector_store %arg19[%c0_174, %c5, %c0_175], %450 {strides = array<i32>} : memref<2x8x32xf32, #tpu.memory_space<vmem>>, vector<1x1x32xf32>,
    %c2_i32_176 = arith.constant 2 : i32
    %451 = arith.muli %arg0, %c2_i32_176 : i32
    %c0_i32_177 = arith.constant 0 : i32
    %452 = arith.addi %451, %c0_i32_177 : i32
    %c5_i32_178 = arith.constant 5 : i32
    %453 = arith.muli %452, %c5_i32_178 : i32
    %c3_i32_179 = arith.constant 3 : i32
    %454 = arith.addi %453, %c3_i32_179 : i32
    %455 = arith.index_cast %454 : i32 to index
    %456 = memref.load %arg2[%455] : memref<10xi32, #tpu.memory_space<smem>>
    %c0_i32_180 = arith.constant 0 : i32
    %457 = arith.addi %c0_i32_180, %456 : i32
    %458 = arith.index_cast %457 : i32 to index
    %c0_181 = arith.constant 0 : index
    %459 = vector.load %arg20[%458, %c0_181] : memref<16x32xf32, #tpu.memory_space<vmem>>, vector<1x32xf32>
    %c0_182 = arith.constant 0 : index
    %c6 = arith.constant 6 : index
    %c0_183 = arith.constant 0 : index
    %460 = vector.load %arg19[%c0_182, %c6, %c0_183] : memref<2x8x32xf32, #tpu.memory_space<vmem>>, vector<1x1x32xf32>
    %461 = vector.shape_cast %460 : vector<1x1x32xf32> to vector<1x32xf32>
    %462 = vector.shape_cast %459 : vector<1x32xf32> to vector<1x1x32xf32>
    tpu.vector_store %arg19[%c0_182, %c6, %c0_183], %462 {strides = array<i32>} : memref<2x8x32xf32, #tpu.memory_space<vmem>>, vector<1x1x32xf32>,
    %c2_i32_184 = arith.constant 2 : i32
    %463 = arith.muli %arg0, %c2_i32_184 : i32
    %c0_i32_185 = arith.constant 0 : i32
    %464 = arith.addi %463, %c0_i32_185 : i32
    %c5_i32_186 = arith.constant 5 : i32
    %465 = arith.muli %464, %c5_i32_186 : i32
    %c4_i32 = arith.constant 4 : i32
    %466 = arith.addi %465, %c4_i32 : i32
    %467 = arith.index_cast %466 : i32 to index
    %468 = memref.load %arg2[%467] : memref<10xi32, #tpu.memory_space<smem>>
    %c0_i32_187 = arith.constant 0 : i32
    %469 = arith.addi %c0_i32_187, %468 : i32
    %470 = arith.index_cast %469 : i32 to index
    %c0_188 = arith.constant 0 : index
    %471 = vector.load %arg20[%470, %c0_188] : memref<16x32xf32, #tpu.memory_space<vmem>>, vector<1x32xf32>
    %c0_189 = arith.constant 0 : index
    %c7 = arith.constant 7 : index
    %c0_190 = arith.constant 0 : index
    %472 = vector.load %arg19[%c0_189, %c7, %c0_190] : memref<2x8x32xf32, #tpu.memory_space<vmem>>, vector<1x1x32xf32>
    %473 = vector.shape_cast %472 : vector<1x1x32xf32> to vector<1x32xf32>
    %474 = vector.shape_cast %471 : vector<1x32xf32> to vector<1x1x32xf32>
    tpu.vector_store %arg19[%c0_189, %c7, %c0_190], %474 {strides = array<i32>} : memref<2x8x32xf32, #tpu.memory_space<vmem>>, vector<1x1x32xf32>,
    %c2_i32_191 = arith.constant 2 : i32
    %475 = arith.muli %arg0, %c2_i32_191 : i32
    %c1_i32_192 = arith.constant 1 : i32
    %476 = arith.addi %475, %c1_i32_192 : i32
    %c3_i32_193 = arith.constant 3 : i32
    %477 = arith.muli %476, %c3_i32_193 : i32
    %c0_i32_194 = arith.constant 0 : i32
    %478 = arith.addi %477, %c0_i32_194 : i32
    %479 = arith.index_cast %478 : i32 to index
    %480 = memref.load %arg1[%479] : memref<6xi32, #tpu.memory_space<smem>>
    %c8_i32 = arith.constant 8 : i32
    %481 = arith.addi %c8_i32, %480 : i32
    %482 = arith.index_cast %481 : i32 to index
    %c0_195 = arith.constant 0 : index
    %483 = vector.load %arg20[%482, %c0_195] : memref<16x32xf32, #tpu.memory_space<vmem>>, vector<1x32xf32>
    %c1_196 = arith.constant 1 : index
    %c0_197 = arith.constant 0 : index
    %c0_198 = arith.constant 0 : index
    %484 = vector.load %arg19[%c1_196, %c0_197, %c0_198] : memref<2x8x32xf32, #tpu.memory_space<vmem>>, vector<1x1x32xf32>
    %485 = vector.shape_cast %484 : vector<1x1x32xf32> to vector<1x32xf32>
    %486 = vector.shape_cast %483 : vector<1x32xf32> to vector<1x1x32xf32>
    tpu.vector_store %arg19[%c1_196, %c0_197, %c0_198], %486 {strides = array<i32>} : memref<2x8x32xf32, #tpu.memory_space<vmem>>, vector<1x1x32xf32>,
    %c2_i32_199 = arith.constant 2 : i32
    %487 = arith.muli %arg0, %c2_i32_199 : i32
    %c1_i32_200 = arith.constant 1 : i32
    %488 = arith.addi %487, %c1_i32_200 : i32
    %c3_i32_201 = arith.constant 3 : i32
    %489 = arith.muli %488, %c3_i32_201 : i32
    %c1_i32_202 = arith.constant 1 : i32
    %490 = arith.addi %489, %c1_i32_202 : i32
    %491 = arith.index_cast %490 : i32 to index
    %492 = memref.load %arg1[%491] : memref<6xi32, #tpu.memory_space<smem>>
    %c8_i32_203 = arith.constant 8 : i32
    %493 = arith.addi %c8_i32_203, %492 : i32
    %494 = arith.index_cast %493 : i32 to index
    %c0_204 = arith.constant 0 : index
    %495 = vector.load %arg20[%494, %c0_204] : memref<16x32xf32, #tpu.memory_space<vmem>>, vector<1x32xf32>
    %c1_205 = arith.constant 1 : index
    %c1_206 = arith.constant 1 : index
    %c0_207 = arith.constant 0 : index
    %496 = vector.load %arg19[%c1_205, %c1_206, %c0_207] : memref<2x8x32xf32, #tpu.memory_space<vmem>>, vector<1x1x32xf32>
    %497 = vector.shape_cast %496 : vector<1x1x32xf32> to vector<1x32xf32>
    %498 = vector.shape_cast %495 : vector<1x32xf32> to vector<1x1x32xf32>
    tpu.vector_store %arg19[%c1_205, %c1_206, %c0_207], %498 {strides = array<i32>} : memref<2x8x32xf32, #tpu.memory_space<vmem>>, vector<1x1x32xf32>,
    %c2_i32_208 = arith.constant 2 : i32
    %499 = arith.muli %arg0, %c2_i32_208 : i32
    %c1_i32_209 = arith.constant 1 : i32
    %500 = arith.addi %499, %c1_i32_209 : i32
    %c3_i32_210 = arith.constant 3 : i32
    %501 = arith.muli %500, %c3_i32_210 : i32
    %c2_i32_211 = arith.constant 2 : i32
    %502 = arith.addi %501, %c2_i32_211 : i32
    %503 = arith.index_cast %502 : i32 to index
    %504 = memref.load %arg1[%503] : memref<6xi32, #tpu.memory_space<smem>>
    %c8_i32_212 = arith.constant 8 : i32
    %505 = arith.addi %c8_i32_212, %504 : i32
    %506 = arith.index_cast %505 : i32 to index
    %c0_213 = arith.constant 0 : index
    %507 = vector.load %arg20[%506, %c0_213] : memref<16x32xf32, #tpu.memory_space<vmem>>, vector<1x32xf32>
    %c1_214 = arith.constant 1 : index
    %c2_215 = arith.constant 2 : index
    %c0_216 = arith.constant 0 : index
    %508 = vector.load %arg19[%c1_214, %c2_215, %c0_216] : memref<2x8x32xf32, #tpu.memory_space<vmem>>, vector<1x1x32xf32>
    %509 = vector.shape_cast %508 : vector<1x1x32xf32> to vector<1x32xf32>
    %510 = vector.shape_cast %507 : vector<1x32xf32> to vector<1x1x32xf32>
    tpu.vector_store %arg19[%c1_214, %c2_215, %c0_216], %510 {strides = array<i32>} : memref<2x8x32xf32, #tpu.memory_space<vmem>>, vector<1x1x32xf32>,
    %c2_i32_217 = arith.constant 2 : i32
    %511 = arith.muli %arg0, %c2_i32_217 : i32
    %c1_i32_218 = arith.constant 1 : i32
    %512 = arith.addi %511, %c1_i32_218 : i32
    %c5_i32_219 = arith.constant 5 : i32
    %513 = arith.muli %512, %c5_i32_219 : i32
    %c0_i32_220 = arith.constant 0 : i32
    %514 = arith.addi %513, %c0_i32_220 : i32
    %515 = arith.index_cast %514 : i32 to index
    %516 = memref.load %arg2[%515] : memref<10xi32, #tpu.memory_space<smem>>
    %c8_i32_221 = arith.constant 8 : i32
    %517 = arith.addi %c8_i32_221, %516 : i32
    %518 = arith.index_cast %517 : i32 to index
    %c0_222 = arith.constant 0 : index
    %519 = vector.load %arg20[%518, %c0_222] : memref<16x32xf32, #tpu.memory_space<vmem>>, vector<1x32xf32>
    %c1_223 = arith.constant 1 : index
    %c3_224 = arith.constant 3 : index
    %c0_225 = arith.constant 0 : index
    %520 = vector.load %arg19[%c1_223, %c3_224, %c0_225] : memref<2x8x32xf32, #tpu.memory_space<vmem>>, vector<1x1x32xf32>
    %521 = vector.shape_cast %520 : vector<1x1x32xf32> to vector<1x32xf32>
    %522 = vector.shape_cast %519 : vector<1x32xf32> to vector<1x1x32xf32>
    tpu.vector_store %arg19[%c1_223, %c3_224, %c0_225], %522 {strides = array<i32>} : memref<2x8x32xf32, #tpu.memory_space<vmem>>, vector<1x1x32xf32>,
    %c2_i32_226 = arith.constant 2 : i32
    %523 = arith.muli %arg0, %c2_i32_226 : i32
    %c1_i32_227 = arith.constant 1 : i32
    %524 = arith.addi %523, %c1_i32_227 : i32
    %c5_i32_228 = arith.constant 5 : i32
    %525 = arith.muli %524, %c5_i32_228 : i32
    %c1_i32_229 = arith.constant 1 : i32
    %526 = arith.addi %525, %c1_i32_229 : i32
    %527 = arith.index_cast %526 : i32 to index
    %528 = memref.load %arg2[%527] : memref<10xi32, #tpu.memory_space<smem>>
    %c8_i32_230 = arith.constant 8 : i32
    %529 = arith.addi %c8_i32_230, %528 : i32
    %530 = arith.index_cast %529 : i32 to index
    %c0_231 = arith.constant 0 : index
    %531 = vector.load %arg20[%530, %c0_231] : memref<16x32xf32, #tpu.memory_space<vmem>>, vector<1x32xf32>
    %c1_232 = arith.constant 1 : index
    %c4_233 = arith.constant 4 : index
    %c0_234 = arith.constant 0 : index
    %532 = vector.load %arg19[%c1_232, %c4_233, %c0_234] : memref<2x8x32xf32, #tpu.memory_space<vmem>>, vector<1x1x32xf32>
    %533 = vector.shape_cast %532 : vector<1x1x32xf32> to vector<1x32xf32>
    %534 = vector.shape_cast %531 : vector<1x32xf32> to vector<1x1x32xf32>
    tpu.vector_store %arg19[%c1_232, %c4_233, %c0_234], %534 {strides = array<i32>} : memref<2x8x32xf32, #tpu.memory_space<vmem>>, vector<1x1x32xf32>,
    %c2_i32_235 = arith.constant 2 : i32
    %535 = arith.muli %arg0, %c2_i32_235 : i32
    %c1_i32_236 = arith.constant 1 : i32
    %536 = arith.addi %535, %c1_i32_236 : i32
    %c5_i32_237 = arith.constant 5 : i32
    %537 = arith.muli %536, %c5_i32_237 : i32
    %c2_i32_238 = arith.constant 2 : i32
    %538 = arith.addi %537, %c2_i32_238 : i32
    %539 = arith.index_cast %538 : i32 to index
    %540 = memref.load %arg2[%539] : memref<10xi32, #tpu.memory_space<smem>>
    %c8_i32_239 = arith.constant 8 : i32
    %541 = arith.addi %c8_i32_239, %540 : i32
    %542 = arith.index_cast %541 : i32 to index
    %c0_240 = arith.constant 0 : index
    %543 = vector.load %arg20[%542, %c0_240] : memref<16x32xf32, #tpu.memory_space<vmem>>, vector<1x32xf32>
    %c1_241 = arith.constant 1 : index
    %c5_242 = arith.constant 5 : index
    %c0_243 = arith.constant 0 : index
    %544 = vector.load %arg19[%c1_241, %c5_242, %c0_243] : memref<2x8x32xf32, #tpu.memory_space<vmem>>, vector<1x1x32xf32>
    %545 = vector.shape_cast %544 : vector<1x1x32xf32> to vector<1x32xf32>
    %546 = vector.shape_cast %543 : vector<1x32xf32> to vector<1x1x32xf32>
    tpu.vector_store %arg19[%c1_241, %c5_242, %c0_243], %546 {strides = array<i32>} : memref<2x8x32xf32, #tpu.memory_space<vmem>>, vector<1x1x32xf32>,
    %c2_i32_244 = arith.constant 2 : i32
    %547 = arith.muli %arg0, %c2_i32_244 : i32
    %c1_i32_245 = arith.constant 1 : i32
    %548 = arith.addi %547, %c1_i32_245 : i32
    %c5_i32_246 = arith.constant 5 : i32
    %549 = arith.muli %548, %c5_i32_246 : i32
    %c3_i32_247 = arith.constant 3 : i32
    %550 = arith.addi %549, %c3_i32_247 : i32
    %551 = arith.index_cast %550 : i32 to index
    %552 = memref.load %arg2[%551] : memref<10xi32, #tpu.memory_space<smem>>
    %c8_i32_248 = arith.constant 8 : i32
    %553 = arith.addi %c8_i32_248, %552 : i32
    %554 = arith.index_cast %553 : i32 to index
    %c0_249 = arith.constant 0 : index
    %555 = vector.load %arg20[%554, %c0_249] : memref<16x32xf32, #tpu.memory_space<vmem>>, vector<1x32xf32>
    %c1_250 = arith.constant 1 : index
    %c6_251 = arith.constant 6 : index
    %c0_252 = arith.constant 0 : index
    %556 = vector.load %arg19[%c1_250, %c6_251, %c0_252] : memref<2x8x32xf32, #tpu.memory_space<vmem>>, vector<1x1x32xf32>
    %557 = vector.shape_cast %556 : vector<1x1x32xf32> to vector<1x32xf32>
    %558 = vector.shape_cast %555 : vector<1x32xf32> to vector<1x1x32xf32>
    tpu.vector_store %arg19[%c1_250, %c6_251, %c0_252], %558 {strides = array<i32>} : memref<2x8x32xf32, #tpu.memory_space<vmem>>, vector<1x1x32xf32>,
    %c2_i32_253 = arith.constant 2 : i32
    %559 = arith.muli %arg0, %c2_i32_253 : i32
    %c1_i32_254 = arith.constant 1 : i32
    %560 = arith.addi %559, %c1_i32_254 : i32
    %c5_i32_255 = arith.constant 5 : i32
    %561 = arith.muli %560, %c5_i32_255 : i32
    %c4_i32_256 = arith.constant 4 : i32
    %562 = arith.addi %561, %c4_i32_256 : i32
    %563 = arith.index_cast %562 : i32 to index
    %564 = memref.load %arg2[%563] : memref<10xi32, #tpu.memory_space<smem>>
    %c8_i32_257 = arith.constant 8 : i32
    %565 = arith.addi %c8_i32_257, %564 : i32
    %566 = arith.index_cast %565 : i32 to index
    %c0_258 = arith.constant 0 : index
    %567 = vector.load %arg20[%566, %c0_258] : memref<16x32xf32, #tpu.memory_space<vmem>>, vector<1x32xf32>
    %c1_259 = arith.constant 1 : index
    %c7_260 = arith.constant 7 : index
    %c0_261 = arith.constant 0 : index
    %568 = vector.load %arg19[%c1_259, %c7_260, %c0_261] : memref<2x8x32xf32, #tpu.memory_space<vmem>>, vector<1x1x32xf32>
    %569 = vector.shape_cast %568 : vector<1x1x32xf32> to vector<1x32xf32>
    %570 = vector.shape_cast %567 : vector<1x32xf32> to vector<1x1x32xf32>
    tpu.vector_store %arg19[%c1_259, %c7_260, %c0_261], %570 {strides = array<i32>} : memref<2x8x32xf32, #tpu.memory_space<vmem>>, vector<1x1x32xf32>,
    return
  }
  func.func @transform_0(%arg0: i32, %arg1: memref<6xi32, #tpu.memory_space<smem>>, %arg2: memref<10xi32, #tpu.memory_space<smem>>) -> (i32, i32) {
    %c0_i32 = arith.constant 0 : i32
    %c0_i32_0 = arith.constant 0 : i32
    return %arg0, %c0_i32 : i32, i32
  }
  func.func @transform_1(%arg0: i32, %arg1: memref<6xi32, #tpu.memory_space<smem>>, %arg2: memref<10xi32, #tpu.memory_space<smem>>) -> (i32, i32, i32) {
    %c0_i32 = arith.constant 0 : i32
    %c0_i32_0 = arith.constant 0 : i32
    %c0_i32_1 = arith.constant 0 : i32
    return %arg0, %c0_i32, %c0_i32_0 : i32, i32, i32
  }
  func.func @transform_2(%arg0: i32, %arg1: memref<6xi32, #tpu.memory_space<smem>>, %arg2: memref<10xi32, #tpu.memory_space<smem>>) -> (i32, i32) {
    %c0_i32 = arith.constant 0 : i32
    %c0_i32_0 = arith.constant 0 : i32
    %c0_i32_1 = arith.constant 0 : i32
    return %c0_i32, %c0_i32_0 : i32, i32
  }
  func.func @transform_3(%arg0: i32, %arg1: memref<6xi32, #tpu.memory_space<smem>>, %arg2: memref<10xi32, #tpu.memory_space<smem>>) -> (i32, i32) {
    %c0_i32 = arith.constant 0 : i32
    %c0_i32_0 = arith.constant 0 : i32
    %c0_i32_1 = arith.constant 0 : i32
    return %c0_i32, %c0_i32_0 : i32, i32
  }
  func.func @transform_4(%arg0: i32, %arg1: memref<6xi32, #tpu.memory_space<smem>>, %arg2: memref<10xi32, #tpu.memory_space<smem>>) -> (i32, i32, i32) {
    %c0_i32 = arith.constant 0 : i32
    %c0_i32_0 = arith.constant 0 : i32
    %c0_i32_1 = arith.constant 0 : i32
    %c0_i32_2 = arith.constant 0 : i32
    return %c0_i32, %c0_i32_0, %c0_i32_1 : i32, i32, i32
  }
  func.func @transform_5(%arg0: i32, %arg1: memref<6xi32, #tpu.memory_space<smem>>, %arg2: memref<10xi32, #tpu.memory_space<smem>>) -> (i32, i32, i32) {
    %c0_i32 = arith.constant 0 : i32
    %c0_i32_0 = arith.constant 0 : i32
    %c0_i32_1 = arith.constant 0 : i32
    %c0_i32_2 = arith.constant 0 : i32
    return %c0_i32, %c0_i32_0, %c0_i32_1 : i32, i32, i32
  }
  func.func @transform_6(%arg0: i32, %arg1: memref<6xi32, #tpu.memory_space<smem>>, %arg2: memref<10xi32, #tpu.memory_space<smem>>) -> (i32, i32, i32) {
    %c0_i32 = arith.constant 0 : i32
    %c0_i32_0 = arith.constant 0 : i32
    %c0_i32_1 = arith.constant 0 : i32
    %c0_i32_2 = arith.constant 0 : i32
    return %c0_i32, %c0_i32_0, %c0_i32_1 : i32, i32, i32
  }
  func.func @transform_7(%arg0: i32, %arg1: memref<6xi32, #tpu.memory_space<smem>>, %arg2: memref<10xi32, #tpu.memory_space<smem>>) -> (i32, i32, i32) {
    %c0_i32 = arith.constant 0 : i32
    %c0_i32_0 = arith.constant 0 : i32
    %c0_i32_1 = arith.constant 0 : i32
    %c0_i32_2 = arith.constant 0 : i32
    return %c0_i32, %c0_i32_0, %c0_i32_1 : i32, i32, i32
  }
  func.func @transform_8(%arg0: i32, %arg1: memref<6xi32, #tpu.memory_space<smem>>, %arg2: memref<10xi32, #tpu.memory_space<smem>>) -> (i32, i32, i32) {
    %c0_i32 = arith.constant 0 : i32
    %c0_i32_0 = arith.constant 0 : i32
    %c0_i32_1 = arith.constant 0 : i32
    %c0_i32_2 = arith.constant 0 : i32
    return %c0_i32, %c0_i32_0, %c0_i32_1 : i32, i32, i32
  }
  func.func @transform_9(%arg0: i32, %arg1: memref<6xi32, #tpu.memory_space<smem>>, %arg2: memref<10xi32, #tpu.memory_space<smem>>) -> (i32, i32, i32) {
    %c0_i32 = arith.constant 0 : i32
    %c0_i32_0 = arith.constant 0 : i32
    %c0_i32_1 = arith.constant 0 : i32
    %c0_i32_2 = arith.constant 0 : i32
    return %c0_i32, %c0_i32_0, %c0_i32_1 : i32, i32, i32
  }
  func.func @transform_10(%arg0: i32, %arg1: memref<6xi32, #tpu.memory_space<smem>>, %arg2: memref<10xi32, #tpu.memory_space<smem>>) -> (i32, i32, i32) {
    %c0_i32 = arith.constant 0 : i32
    %c0_i32_0 = arith.constant 0 : i32
    %c0_i32_1 = arith.constant 0 : i32
    %c0_i32_2 = arith.constant 0 : i32
    return %c0_i32, %c0_i32_0, %c0_i32_1 : i32, i32, i32
  }
  func.func @transform_11(%arg0: i32, %arg1: memref<6xi32, #tpu.memory_space<smem>>, %arg2: memref<10xi32, #tpu.memory_space<smem>>) -> (i32, i32, i32) {
    %c0_i32 = arith.constant 0 : i32
    %c0_i32_0 = arith.constant 0 : i32
    %c0_i32_1 = arith.constant 0 : i32
    %c0_i32_2 = arith.constant 0 : i32
    return %c0_i32, %c0_i32_0, %c0_i32_1 : i32, i32, i32
  }
  func.func @transform_12(%arg0: i32, %arg1: memref<6xi32, #tpu.memory_space<smem>>, %arg2: memref<10xi32, #tpu.memory_space<smem>>) -> (i32, i32, i32) {
    %c0_i32 = arith.constant 0 : i32
    %c0_i32_0 = arith.constant 0 : i32
    %c0_i32_1 = arith.constant 0 : i32
    %c0_i32_2 = arith.constant 0 : i32
    return %c0_i32, %c0_i32_0, %c0_i32_1 : i32, i32, i32
  }
  func.func @transform_13(%arg0: i32, %arg1: memref<6xi32, #tpu.memory_space<smem>>, %arg2: memref<10xi32, #tpu.memory_space<smem>>) -> (i32, i32, i32) {
    %c0_i32 = arith.constant 0 : i32
    %c0_i32_0 = arith.constant 0 : i32
    %c0_i32_1 = arith.constant 0 : i32
    %c0_i32_2 = arith.constant 0 : i32
    return %c0_i32, %c0_i32_0, %c0_i32_1 : i32, i32, i32
  }
  func.func @transform_14(%arg0: i32, %arg1: memref<6xi32, #tpu.memory_space<smem>>, %arg2: memref<10xi32, #tpu.memory_space<smem>>) -> (i32, i32, i32) {
    %c0_i32 = arith.constant 0 : i32
    %c0_i32_0 = arith.constant 0 : i32
    %c0_i32_1 = arith.constant 0 : i32
    %c0_i32_2 = arith.constant 0 : i32
    return %c0_i32, %c0_i32_0, %c0_i32_1 : i32, i32, i32
  }
  func.func @transform_15(%arg0: i32, %arg1: memref<6xi32, #tpu.memory_space<smem>>, %arg2: memref<10xi32, #tpu.memory_space<smem>>) -> (i32, i32, i32) {
    %c0_i32 = arith.constant 0 : i32
    %c0_i32_0 = arith.constant 0 : i32
    %c0_i32_1 = arith.constant 0 : i32
    %c0_i32_2 = arith.constant 0 : i32
    return %c0_i32, %c0_i32_0, %c0_i32_1 : i32, i32, i32
  }
  func.func @transform_16(%arg0: i32, %arg1: memref<6xi32, #tpu.memory_space<smem>>, %arg2: memref<10xi32, #tpu.memory_space<smem>>) -> (i32, i32, i32) {
    %c0_i32 = arith.constant 0 : i32
    %c0_i32_0 = arith.constant 0 : i32
    %c0_i32_1 = arith.constant 0 : i32
    return %arg0, %c0_i32, %c0_i32_0 : i32, i32, i32
  }
}

</mosaic_0001>

<llo_original>
// kernel: encoder_both_forward.1
$region0: #{encoder_both_forward.1}
  #allocation0 [shape = 'u32[]', space=smem, size = 0x4, offset = 0x4, fixed_abs, tag = 'smem constant byte address 0x4 - core index']
  #allocation1 [shape = 'u32[144,128]{1,0:T(1,128)}', space=vmem, size = 0x12000, scoped, tag = 'internal scratch']
  #allocation2 [shape = 'f32[16,32]{1,0:T(8,128)}', space=vmem, size = 0x2000, scoped, tag = 'scratch operand']
  #allocation3 [shape = 's32[1]{0}', space=sflag, size = 0x4, scoped, tag = 'scoped memory for encoder_both_forward.1']
  #allocation4 [shape = 'u8[512]{0}', space=smem, size = 0x200, scoped, tag = 'prefetched SMEM operand 0']
  #allocation5 [shape = 'u8[512]{0}', space=smem, size = 0x200, scoped, tag = 'prefetched SMEM operand 1']
  %s0 = inlined_call_operand.vmem [shape: s32[6], index: 0, kind: input, shape index: {}]
  %s1 = inlined_call_operand.vmem [shape: s32[10], index: 1, kind: input, shape index: {}]
  %s2 = inlined_call_operand.vmem [shape: f32[16,32], index: 2, kind: input, shape index: {}]
  %s3 = inlined_call_operand.vmem [shape: f32[8,1,8], index: 3, kind: input, shape index: {}]
  %s4 = inlined_call_operand.vmem [shape: f32[1,32], index: 4, kind: input, shape index: {}]
  %s5 = inlined_call_operand.vmem [shape: f32[1,32], index: 5, kind: input, shape index: {}]
  %s6 = inlined_call_operand.vmem [shape: f32[2,32,96], index: 6, kind: input, shape index: {}]
  %s7 = inlined_call_operand.vmem [shape: f32[2,1,96], index: 7, kind: input, shape index: {}]
  %s8 = inlined_call_operand.vmem [shape: f32[2,32,32], index: 8, kind: input, shape index: {}]
  %s9 = inlined_call_operand.vmem [shape: f32[2,1,32], index: 9, kind: input, shape index: {}]
  %s10 = inlined_call_operand.vmem [shape: f32[2,1,32], index: 10, kind: input, shape index: {}]
  %s11 = inlined_call_operand.vmem [shape: f32[2,1,32], index: 11, kind: input, shape index: {}]
  %s12 = inlined_call_operand.vmem [shape: f32[2,32,64], index: 12, kind: input, shape index: {}]
  %s13 = inlined_call_operand.vmem [shape: f32[2,1,64], index: 13, kind: input, shape index: {}]
  %s14 = inlined_call_operand.vmem [shape: f32[2,64,32], index: 14, kind: input, shape index: {}]
  %s15 = inlined_call_operand.vmem [shape: f32[2,1,32], index: 15, kind: input, shape index: {}]
  %s16 = inlined_call_operand.vmem [shape: f32[2,1,32], index: 16, kind: input, shape index: {}]
  %s17 = inlined_call_operand.vmem [shape: f32[2,1,32], index: 17, kind: input, shape index: {}]
  %s18 = inlined_call_operand.vmem [shape: f32[2,8,32], index: 18, kind: output, shape index: {}]
  %s19 = sld [smem:[#allocation0]]
  $region74: #{encoder_both_forward.1} parent=0
    _
  %s21 = ssub.s32 1, %s19
  %s22 = scalar_select 0, %s21, %s19
  %s23 = sshll.u32 %s0, 4
  %s24 = int_to_ptr.vmem [resolvable:$true] %s23
  %26 = dma.vmem_to_smem %s24, 16, [#allocation4], [#allocation3]
  %s27 = sshll.u32 %s1, 4
  %s28 = int_to_ptr.vmem [resolvable:$true] %s27
  %30 = dma.vmem_to_smem %s28, 16, [#allocation5], [#allocation3]
  %31 = dma.done [#allocation3], 32
  %32 = sfence
  // Predicated region
  $region2: #{encoder_both_forward.1} parent=0 // pred_check
    _
  $region3: #{encoder_both_forward.1} parent=0 // pred_check_branch
    %34 = sbr.rel (0) target = $region5
  $region4: #{encoder_both_forward.1} parent=0 // pred_region
    _
  $region5: #{encoder_both_forward.1} parent=0 // pred_fallthru
    _
  // Predicated region
  $region6: #{encoder_both_forward.1} parent=0 // pred_check
    _
  $region7: #{encoder_both_forward.1} parent=0 // pred_check_branch
    %36 = sbr.rel (0) target = $region9
  $region8: #{encoder_both_forward.1} parent=0 // pred_region
    _
  $region9: #{encoder_both_forward.1} parent=0 // pred_fallthru
    _
  // Predicated region
  $region10: #{encoder_both_forward.1} parent=0 // pred_check
    _
  $region11: #{encoder_both_forward.1} parent=0 // pred_check_branch
    %38 = sbr.rel (0) target = $region13
  $region12: #{encoder_both_forward.1} parent=0 // pred_region
    _
  $region13: #{encoder_both_forward.1} parent=0 // pred_fallthru
    _
  // Predicated region
  $region14: #{encoder_both_forward.1} parent=0 // pred_check
    _
  $region15: #{encoder_both_forward.1} parent=0 // pred_check_branch
    %40 = sbr.rel (0) target = $region17
  $region16: #{encoder_both_forward.1} parent=0 // pred_region
    _
  $region17: #{encoder_both_forward.1} parent=0 // pred_fallthru
    _
  // Predicated region
  $region18: #{encoder_both_forward.1} parent=0 // pred_check
    _
  $region19: #{encoder_both_forward.1} parent=0 // pred_check_branch
    %42 = sbr.rel (0) target = $region21
  $region20: #{encoder_both_forward.1} parent=0 // pred_region
    _
  $region21: #{encoder_both_forward.1} parent=0 // pred_fallthru
    _
  // Predicated region
  $region22: #{encoder_both_forward.1} parent=0 // pred_check
    _
  $region23: #{encoder_both_forward.1} parent=0 // pred_check_branch
    %44 = sbr.rel (0) target = $region25
  $region24: #{encoder_both_forward.1} parent=0 // pred_region
    _
  $region25: #{encoder_both_forward.1} parent=0 // pred_fallthru
    _
  // Predicated region
  $region26: #{encoder_both_forward.1} parent=0 // pred_check
    _
  $region27: #{encoder_both_forward.1} parent=0 // pred_check_branch
    %46 = sbr.rel (0) target = $region29
  $region28: #{encoder_both_forward.1} parent=0 // pred_region
    _
  $region29: #{encoder_both_forward.1} parent=0 // pred_fallthru
    _
  // Predicated region
  $region30: #{encoder_both_forward.1} parent=0 // pred_check
    _
  $region31: #{encoder_both_forward.1} parent=0 // pred_check_branch
    %48 = sbr.rel (0) target = $region33
  $region32: #{encoder_both_forward.1} parent=0 // pred_region
    _
  $region33: #{encoder_both_forward.1} parent=0 // pred_fallthru
    _
  // Predicated region
  $region34: #{encoder_both_forward.1} parent=0 // pred_check
    _
  $region35: #{encoder_both_forward.1} parent=0 // pred_check_branch
    %50 = sbr.rel (0) target = $region37
  $region36: #{encoder_both_forward.1} parent=0 // pred_region
    _
  $region37: #{encoder_both_forward.1} parent=0 // pred_fallthru
    _
  // Predicated region
  $region38: #{encoder_both_forward.1} parent=0 // pred_check
    _
  $region39: #{encoder_both_forward.1} parent=0 // pred_check_branch
    %52 = sbr.rel (0) target = $region41
  $region40: #{encoder_both_forward.1} parent=0 // pred_region
    _
  $region41: #{encoder_both_forward.1} parent=0 // pred_fallthru
    _
  // Predicated region
  $region42: #{encoder_both_forward.1} parent=0 // pred_check
    _
  $region43: #{encoder_both_forward.1} parent=0 // pred_check_branch
    %54 = sbr.rel (0) target = $region45
  $region44: #{encoder_both_forward.1} parent=0 // pred_region
    _
  $region45: #{encoder_both_forward.1} parent=0 // pred_fallthru
    _
  // Predicated region
  $region46: #{encoder_both_forward.1} parent=0 // pred_check
    _
  $region47: #{encoder_both_forward.1} parent=0 // pred_check_branch
    %56 = sbr.rel (0) target = $region49
  $region48: #{encoder_both_forward.1} parent=0 // pred_region
    _
  $region49: #{encoder_both_forward.1} parent=0 // pred_fallthru
    _
  // Predicated region
  $region50: #{encoder_both_forward.1} parent=0 // pred_check
    _
  $region51: #{encoder_both_forward.1} parent=0 // pred_check_branch
    %58 = sbr.rel (0) target = $region53
  $region52: #{encoder_both_forward.1} parent=0 // pred_region
    _
  $region53: #{encoder_both_forward.1} parent=0 // pred_fallthru
    _
  // Predicated region
  $region54: #{encoder_both_forward.1} parent=0 // pred_check
    _
  $region55: #{encoder_both_forward.1} parent=0 // pred_check_branch
    %60 = sbr.rel (0) target = $region57
  $region56: #{encoder_both_forward.1} parent=0 // pred_region
    _
  $region57: #{encoder_both_forward.1} parent=0 // pred_fallthru
    _
  // Predicated region
  $region58: #{encoder_both_forward.1} parent=0 // pred_check
    _
  $region59: #{encoder_both_forward.1} parent=0 // pred_check_branch
    %62 = sbr.rel (0) target = $region61
  $region60: #{encoder_both_forward.1} parent=0 // pred_region
    _
  $region61: #{encoder_both_forward.1} parent=0 // pred_fallthru
    _
  // Predicated region
  $region62: #{encoder_both_forward.1} parent=0 // pred_check
    _
  $region63: #{encoder_both_forward.1} parent=0 // pred_check_branch
    %64 = sbr.rel (0) target = $region65
  $region64: #{encoder_both_forward.1} parent=0 // pred_region
    _
  $region65: #{encoder_both_forward.1} parent=0 // pred_fallthru
    _
  %v65 = vld [vmem:[%s2] sm:$0xff]
  %v66 = vld [vmem:[%s2 + $0x8] sm:$0xff]
  %v67 = vld [vmem:[%s4] sm:$0x1]
  %v68 = vld [vmem:[%s5] sm:$0x1]
  %vm69 = vcmask 261120
  %v70 = vsel %vm69, %v65, 0.0
  %71 = vadd.xlane.f32.xlu0 %v70
  %v72 = vpop.xlane.xlu0 %71
  %v73 = vsel %vm69, %v66, 0.0
  %74 = vadd.xlane.f32.xlu0 %v73
  %v75 = vpop.xlane.xlu0 %74
  %v76 = vrcp.pop 32.0
  %v77 = vmul.f32 %v72, %v76
  %v78 = vmul.f32 %v75, %v76
  %v79 = vsub.f32 %v65, %v77
  %v80 = vsub.f32 %v66, %v78
  %v81 = vmul.f32 %v79, %v79
  %v82 = vmul.f32 %v80, %v80
  %v83 = vsel %vm69, %v81, 0.0
  %84 = vadd.xlane.f32.xlu0 %v83
  %v85 = vpop.xlane.xlu0 %84
  %v86 = vsel %vm69, %v82, 0.0
  %87 = vadd.xlane.f32.xlu0 %v86
  %v88 = vpop.xlane.xlu0 %87
  %v89 = vmul.f32 %v85, %v76
  %v90 = vmul.f32 %v88, %v76
  %v91 = vadd.f32 %v89, 1e-12
  %v92 = vadd.f32 %v90, 1e-12
  %v93 = vrsqrt.pop %v91
  %v94 = vrsqrt.pop %v92
  %v95 = vmul.f32 %v79, %v93
  %v96 = vmul.f32 %v80, %v94
  %v98 = vlaneseq
  %v99 = vshrl.u32 %v98, 7
  %v100 = vsub.s32 0, %v99
  %v101 = vrot.slane %v67, %v100
  %v103 = vmul.f32 %v95, %v101
  %v104 = vmul.f32 %v96, %v101
  %v106 = vlaneseq
  %v107 = vshrl.u32 %v106, 7
  %v108 = vsub.s32 0, %v107
  %v109 = vrot.slane %v68, %v108
  %v111 = vadd.f32 %v103, %v109
  %v112 = vadd.f32 %v104, %v109
  %v113 = vld [vmem:[%s3] sm:$0x1]
  %v114 = vld [vmem:[%s3 + $0x1] sm:$0x1]
  %v115 = vld [vmem:[%s3 + $0x2] sm:$0x1]
  %v116 = vld [vmem:[%s3 + $0x3] sm:$0x1]
  %v117 = vld [vmem:[%s3 + $0x4] sm:$0x1]
  %v118 = vld [vmem:[%s3 + $0x5] sm:$0x1]
  %v119 = vld [vmem:[%s3 + $0x6] sm:$0x1]
  %v120 = vld [vmem:[%s3 + $0x7] sm:$0x1]
  %v121 = vld [vmem:[%s6] sm:$0xff]
  %v122 = vld [vmem:[%s6 + $0x8] sm:$0xff]
  %v123 = vld [vmem:[%s6 + $0x10] sm:$0xff]
  %v124 = vld [vmem:[%s6 + $0x18] sm:$0xff]
  %v125 = vld [vmem:[%s7] sm:$0x1]
  %v127 = vlaneseq
  %v128 = vshrl.u32 %v127, 7
  %v129 = vsub.s32 0, %v128
  %v130 = vrot.slane %v125, %v129
  %v133 = vsel %vm69, %v111, 0
  %v136 = vsel %vm69, %v112, 0
  %138 = vmatprep.subr.mxu0 0.0
  %139 = vmatpush1.msra.mxu0 0.0
  %140 = vmatprep.subr.mxu0 0.0
  %141 = vmatpush1.msra.mxu0 0.0
  %142 = vmatprep.subr.mxu0 0.0
  %143 = vmatpush1.msra.mxu0 0.0
  %144 = vmatprep.subr.mxu0 0.0
  %145 = vmatpush1.msra.mxu0 0.0
  %146 = vmatprep.subr.mxu0 0.0
  %147 = vmatpush1.msra.mxu0 0.0
  %148 = vmatprep.subr.mxu0 0.0
  %149 = vmatpush1.msra.mxu0 0.0
  %150 = vmatprep.subr.mxu0 0.0
  %151 = vmatpush1.msra.mxu0 0.0
  %152 = vmatprep.subr.mxu0 0.0
  %153 = vmatpush1.msra.mxu0 0.0
  %154 = vmatprep.subr.mxu0 0.0
  %155 = vmatpush1.msra.mxu0 0.0
  %156 = vmatprep.subr.mxu0 0.0
  %157 = vmatpush1.msra.mxu0 0.0
  %158 = vmatprep.subr.mxu0 0.0
  %159 = vmatpush1.msra.mxu0 0.0
  %160 = vmatprep.subr.mxu0 0.0
  %161 = vmatpush1.msra.mxu0 0.0
  %162 = vmatprep.subr.mxu0 0.0
  %163 = vmatpush1.msra.mxu0 %v124
  %164 = vmatprep.subr.mxu0 0.0
  %165 = vmatpush1.msra.mxu0 %v123
  %166 = vmatprep.subr.mxu0 0.0
  %167 = vmatpush1.msra.mxu0 %v122
  %168 = vmatprep.subr.mxu0 0.0
  %169 = vmatpush1.msra.mxu0 %v121
  %170 = vmatprep.subr.mxu0 0.0
  %171 = vmatpush2.msra.mxu0 0.0
  %172 = vmatprep.subr.mxu0 0.0
  %173 = vmatpush2.msra.mxu0 0.0
  %174 = vmatprep.subr.mxu0 0.0
  %175 = vmatpush2.msra.mxu0 0.0
  %176 = vmatprep.subr.mxu0 0.0
  %177 = vmatpush2.msra.mxu0 0.0
  %178 = vmatprep.subr.mxu0 0.0
  %179 = vmatpush2.msra.mxu0 0.0
  %180 = vmatprep.subr.mxu0 0.0
  %181 = vmatpush2.msra.mxu0 0.0
  %182 = vmatprep.subr.mxu0 0.0
  %183 = vmatpush2.msra.mxu0 0.0
  %184 = vmatprep.subr.mxu0 0.0
  %185 = vmatpush2.msra.mxu0 0.0
  %186 = vmatprep.subr.mxu0 0.0
  %187 = vmatpush2.msra.mxu0 0.0
  %188 = vmatprep.subr.mxu0 0.0
  %189 = vmatpush2.msra.mxu0 0.0
  %190 = vmatprep.subr.mxu0 0.0
  %191 = vmatpush2.msra.mxu0 0.0
  %192 = vmatprep.subr.mxu0 0.0
  %193 = vmatpush2.msra.mxu0 0.0
  %194 = vmatprep.subr.mxu0 0.0
  %195 = vmatpush2.msra.mxu0 0.0
  %196 = vmatprep.subr.mxu0 0.0
  %197 = vmatpush2.msra.mxu0 0.0
  %198 = vmatprep.subr.mxu0 0.0
  %199 = vmatpush2.msra.mxu0 0.0
  %200 = vmatprep.subr.mxu0 0.0
  %201 = vmatpush2.msra.mxu0 0.0
  %202 = vmatprep.mubr.f32.mxu0 0.0
  %203 = vmatmul.mubr.f32.gmra.mxu0 %v133
  %v204 = vpop.f32.mrf.mxu0
  %v205 = vadd.f32 %v130, %v204
  %v206 = vpop.f32.mrf.mxu0
  %207 = vmatprep.mubr.f32.mxu0 0.0
  %208 = vmatmul.mubr.f32.gmra.mxu0 %v136
  %v209 = vpop.f32.mrf.mxu0
  %v210 = vadd.f32 %v130, %v209
  %v211 = vpop.f32.mrf.mxu0
  %212 = vdwg.mxu0
  %214 = vrot.lane.b32.xlu0 %v205, 120
  %v215 = vpop.permute.xlu0 %214
  %216 = vrot.lane.b32.xlu0 %v205, 112
  %v217 = vpop.permute.xlu0 %216
  %218 = vrot.lane.b32.xlu0 %v205, 104
  %v219 = vpop.permute.xlu0 %218
  %221 = vrot.lane.b32.xlu0 %v210, 120
  %v222 = vpop.permute.xlu0 %221
  %223 = vrot.lane.b32.xlu0 %v210, 112
  %v224 = vpop.permute.xlu0 %223
  %225 = vrot.lane.b32.xlu0 %v210, 104
  %v226 = vpop.permute.xlu0 %225
  %227 = vrot.lane.b32.xlu0 %v205, 96
  %v228 = vpop.permute.xlu0 %227
  %vm229 = vcmask 64512
  %v230 = vsel %vm229, %v205, 0
  %v232 = vsel %vm229, %v228, 0
  %234 = vmatprep.subr.mxu0 0.0
  %235 = vmatpush1.xpose.msra.mxu0 0.0
  %236 = vmatprep.subr.mxu0 0.0
  %237 = vmatpush1.xpose.msra.mxu0 0.0
  %238 = vmatprep.subr.mxu0 0.0
  %239 = vmatpush1.xpose.msra.mxu0 0.0
  %240 = vmatprep.subr.mxu0 0.0
  %241 = vmatpush1.xpose.msra.mxu0 0.0
  %242 = vmatprep.subr.mxu0 0.0
  %243 = vmatpush1.xpose.msra.mxu0 0.0
  %244 = vmatprep.subr.mxu0 0.0
  %245 = vmatpush1.xpose.msra.mxu0 0.0
  %246 = vmatprep.subr.mxu0 0.0
  %247 = vmatpush1.xpose.msra.mxu0 0.0
  %248 = vmatprep.subr.mxu0 0.0
  %249 = vmatpush1.xpose.msra.mxu0 0.0
  %250 = vmatprep.subr.mxu0 0.0
  %251 = vmatpush1.xpose.msra.mxu0 0.0
  %252 = vmatprep.subr.mxu0 0.0
  %253 = vmatpush1.xpose.msra.mxu0 0.0
  %254 = vmatprep.subr.mxu0 0.0
  %255 = vmatpush1.xpose.msra.mxu0 0.0
  %256 = vmatprep.subr.mxu0 0.0
  %257 = vmatpush1.xpose.msra.mxu0 0.0
  %258 = vmatprep.subr.mxu0 0.0
  %259 = vmatpush1.xpose.msra.mxu0 0.0
  %260 = vmatprep.subr.mxu0 0.0
  %261 = vmatpush1.xpose.msra.mxu0 0.0
  %262 = vmatprep.subr.mxu0 0.0
  %263 = vmatpush1.xpose.msra.mxu0 0.0
  %264 = vmatprep.subr.mxu0 0.0
  %265 = vmatpush1.xpose.msra.mxu0 %v232
  %266 = vmatprep.subr.mxu0 0.0
  %267 = vmatpush2.xpose.msra.mxu0 0.0
  %268 = vmatprep.subr.mxu0 0.0
  %269 = vmatpush2.xpose.msra.mxu0 0.0
  %270 = vmatprep.subr.mxu0 0.0
  %271 = vmatpush2.xpose.msra.mxu0 0.0
  %272 = vmatprep.subr.mxu0 0.0
  %273 = vmatpush2.xpose.msra.mxu0 0.0
  %274 = vmatprep.subr.mxu0 0.0
  %275 = vmatpush2.xpose.msra.mxu0 0.0
  %276 = vmatprep.subr.mxu0 0.0
  %277 = vmatpush2.xpose.msra.mxu0 0.0
  %278 = vmatprep.subr.mxu0 0.0
  %279 = vmatpush2.xpose.msra.mxu0 0.0
  %280 = vmatprep.subr.mxu0 0.0
  %281 = vmatpush2.xpose.msra.mxu0 0.0
  %282 = vmatprep.subr.mxu0 0.0
  %283 = vmatpush2.xpose.msra.mxu0 0.0
  %284 = vmatprep.subr.mxu0 0.0
  %285 = vmatpush2.xpose.msra.mxu0 0.0
  %286 = vmatprep.subr.mxu0 0.0
  %287 = vmatpush2.xpose.msra.mxu0 0.0
  %288 = vmatprep.subr.mxu0 0.0
  %289 = vmatpush2.xpose.msra.mxu0 0.0
  %290 = vmatprep.subr.mxu0 0.0
  %291 = vmatpush2.xpose.msra.mxu0 0.0
  %292 = vmatprep.subr.mxu0 0.0
  %293 = vmatpush2.xpose.msra.mxu0 0.0
  %294 = vmatprep.subr.mxu0 0.0
  %295 = vmatpush2.xpose.msra.mxu0 0.0
  %296 = vmatprep.subr.mxu0 0.0
  %297 = vmatpush2.xpose.msra.mxu0 0.0
  %298 = vmatprep.mubr.f32.mxu0 0.0
  %299 = vmatmul.mubr.f32.gmra.mxu0 %v230
  %v300 = vpop.f32.mrf.mxu0
  %v301 = vadd.f32 0.0, %v300
  %v302 = vpop.f32.mrf.mxu0
  %303 = vdwg.mxu0
  %304 = vrot.lane.b32.xlu0 %v215, 96
  %v305 = vpop.permute.xlu0 %304
  %v306 = vsel %vm229, %v215, 0
  %v308 = vsel %vm229, %v305, 0
  %310 = vmatprep.subr.mxu0 0.0
  %311 = vmatpush1.xpose.msra.mxu0 0.0
  %312 = vmatprep.subr.mxu0 0.0
  %313 = vmatpush1.xpose.msra.mxu0 0.0
  %314 = vmatprep.subr.mxu0 0.0
  %315 = vmatpush1.xpose.msra.mxu0 0.0
  %316 = vmatprep.subr.mxu0 0.0
  %317 = vmatpush1.xpose.msra.mxu0 0.0
  %318 = vmatprep.subr.mxu0 0.0
  %319 = vmatpush1.xpose.msra.mxu0 0.0
  %320 = vmatprep.subr.mxu0 0.0
  %321 = vmatpush1.xpose.msra.mxu0 0.0
  %322 = vmatprep.subr.mxu0 0.0
  %323 = vmatpush1.xpose.msra.mxu0 0.0
  %324 = vmatprep.subr.mxu0 0.0
  %325 = vmatpush1.xpose.msra.mxu0 0.0
  %326 = vmatprep.subr.mxu0 0.0
  %327 = vmatpush1.xpose.msra.mxu0 0.0
  %328 = vmatprep.subr.mxu0 0.0
  %329 = vmatpush1.xpose.msra.mxu0 0.0
  %330 = vmatprep.subr.mxu0 0.0
  %331 = vmatpush1.xpose.msra.mxu0 0.0
  %332 = vmatprep.subr.mxu0 0.0
  %333 = vmatpush1.xpose.msra.mxu0 0.0
  %334 = vmatprep.subr.mxu0 0.0
  %335 = vmatpush1.xpose.msra.mxu0 0.0
  %336 = vmatprep.subr.mxu0 0.0
  %337 = vmatpush1.xpose.msra.mxu0 0.0
  %338 = vmatprep.subr.mxu0 0.0
  %339 = vmatpush1.xpose.msra.mxu0 0.0
  %340 = vmatprep.subr.mxu0 0.0
  %341 = vmatpush1.xpose.msra.mxu0 %v308
  %342 = vmatprep.subr.mxu0 0.0
  %343 = vmatpush2.xpose.msra.mxu0 0.0
  %344 = vmatprep.subr.mxu0 0.0
  %345 = vmatpush2.xpose.msra.mxu0 0.0
  %346 = vmatprep.subr.mxu0 0.0
  %347 = vmatpush2.xpose.msra.mxu0 0.0
  %348 = vmatprep.subr.mxu0 0.0
  %349 = vmatpush2.xpose.msra.mxu0 0.0
  %350 = vmatprep.subr.mxu0 0.0
  %351 = vmatpush2.xpose.msra.mxu0 0.0
  %352 = vmatprep.subr.mxu0 0.0
  %353 = vmatpush2.xpose.msra.mxu0 0.0
  %354 = vmatprep.subr.mxu0 0.0
  %355 = vmatpush2.xpose.msra.mxu0 0.0
  %356 = vmatprep.subr.mxu0 0.0
  %357 = vmatpush2.xpose.msra.mxu0 0.0
  %358 = vmatprep.subr.mxu0 0.0
  %359 = vmatpush2.xpose.msra.mxu0 0.0
  %360 = vmatprep.subr.mxu0 0.0
  %361 = vmatpush2.xpose.msra.mxu0 0.0
  %362 = vmatprep.subr.mxu0 0.0
  %363 = vmatpush2.xpose.msra.mxu0 0.0
  %364 = vmatprep.subr.mxu0 0.0
  %365 = vmatpush2.xpose.msra.mxu0 0.0
  %366 = vmatprep.subr.mxu0 0.0
  %367 = vmatpush2.xpose.msra.mxu0 0.0
  %368 = vmatprep.subr.mxu0 0.0
  %369 = vmatpush2.xpose.msra.mxu0 0.0
  %370 = vmatprep.subr.mxu0 0.0
  %371 = vmatpush2.xpose.msra.mxu0 0.0
  %372 = vmatprep.subr.mxu0 0.0
  %373 = vmatpush2.xpose.msra.mxu0 0.0
  %374 = vmatprep.mubr.f32.mxu0 0.0
  %375 = vmatmul.mubr.f32.gmra.mxu0 %v306
  %v376 = vpop.f32.mrf.mxu0
  %v377 = vadd.f32 0.0, %v376
  %v378 = vpop.f32.mrf.mxu0
  %379 = vdwg.mxu0
  %380 = vrot.lane.b32.xlu0 %v217, 96
  %v381 = vpop.permute.xlu0 %380
  %v382 = vsel %vm229, %v217, 0
  %v384 = vsel %vm229, %v381, 0
  %386 = vmatprep.subr.mxu0 0.0
  %387 = vmatpush1.xpose.msra.mxu0 0.0
  %388 = vmatprep.subr.mxu0 0.0
  %389 = vmatpush1.xpose.msra.mxu0 0.0
  %390 = vmatprep.subr.mxu0 0.0
  %391 = vmatpush1.xpose.msra.mxu0 0.0
  %392 = vmatprep.subr.mxu0 0.0
  %393 = vmatpush1.xpose.msra.mxu0 0.0
  %394 = vmatprep.subr.mxu0 0.0
  %395 = vmatpush1.xpose.msra.mxu0 0.0
  %396 = vmatprep.subr.mxu0 0.0
  %397 = vmatpush1.xpose.msra.mxu0 0.0
  %398 = vmatprep.subr.mxu0 0.0
  %399 = vmatpush1.xpose.msra.mxu0 0.0
  %400 = vmatprep.subr.mxu0 0.0
  %401 = vmatpush1.xpose.msra.mxu0 0.0
  %402 = vmatprep.subr.mxu0 0.0
  %403 = vmatpush1.xpose.msra.mxu0 0.0
  %404 = vmatprep.subr.mxu0 0.0
  %405 = vmatpush1.xpose.msra.mxu0 0.0
  %406 = vmatprep.subr.mxu0 0.0
  %407 = vmatpush1.xpose.msra.mxu0 0.0
  %408 = vmatprep.subr.mxu0 0.0
  %409 = vmatpush1.xpose.msra.mxu0 0.0
  %410 = vmatprep.subr.mxu0 0.0
  %411 = vmatpush1.xpose.msra.mxu0 0.0
  %412 = vmatprep.subr.mxu0 0.0
  %413 = vmatpush1.xpose.msra.mxu0 0.0
  %414 = vmatprep.subr.mxu0 0.0
  %415 = vmatpush1.xpose.msra.mxu0 0.0
  %416 = vmatprep.subr.mxu0 0.0
  %417 = vmatpush1.xpose.msra.mxu0 %v384
  %418 = vmatprep.subr.mxu0 0.0
  %419 = vmatpush2.xpose.msra.mxu0 0.0
  %420 = vmatprep.subr.mxu0 0.0
  %421 = vmatpush2.xpose.msra.mxu0 0.0
  %422 = vmatprep.subr.mxu0 0.0
  %423 = vmatpush2.xpose.msra.mxu0 0.0
  %424 = vmatprep.subr.mxu0 0.0
  %425 = vmatpush2.xpose.msra.mxu0 0.0
  %426 = vmatprep.subr.mxu0 0.0
  %427 = vmatpush2.xpose.msra.mxu0 0.0
  %428 = vmatprep.subr.mxu0 0.0
  %429 = vmatpush2.xpose.msra.mxu0 0.0
  %430 = vmatprep.subr.mxu0 0.0
  %431 = vmatpush2.xpose.msra.mxu0 0.0
  %432 = vmatprep.subr.mxu0 0.0
  %433 = vmatpush2.xpose.msra.mxu0 0.0
  %434 = vmatprep.subr.mxu0 0.0
  %435 = vmatpush2.xpose.msra.mxu0 0.0
  %436 = vmatprep.subr.mxu0 0.0
  %437 = vmatpush2.xpose.msra.mxu0 0.0
  %438 = vmatprep.subr.mxu0 0.0
  %439 = vmatpush2.xpose.msra.mxu0 0.0
  %440 = vmatprep.subr.mxu0 0.0
  %441 = vmatpush2.xpose.msra.mxu0 0.0
  %442 = vmatprep.subr.mxu0 0.0
  %443 = vmatpush2.xpose.msra.mxu0 0.0
  %444 = vmatprep.subr.mxu0 0.0
  %445 = vmatpush2.xpose.msra.mxu0 0.0
  %446 = vmatprep.subr.mxu0 0.0
  %447 = vmatpush2.xpose.msra.mxu0 0.0
  %448 = vmatprep.subr.mxu0 0.0
  %449 = vmatpush2.xpose.msra.mxu0 0.0
  %450 = vmatprep.mubr.f32.mxu0 0.0
  %451 = vmatmul.mubr.f32.gmra.mxu0 %v382
  %v452 = vpop.f32.mrf.mxu0
  %v453 = vadd.f32 0.0, %v452
  %v454 = vpop.f32.mrf.mxu0
  %455 = vdwg.mxu0
  %456 = vrot.lane.b32.xlu0 %v219, 96
  %v457 = vpop.permute.xlu0 %456
  %v458 = vsel %vm229, %v219, 0
  %v460 = vsel %vm229, %v457, 0
  %462 = vmatprep.subr.mxu0 0.0
  %463 = vmatpush1.xpose.msra.mxu0 0.0
  %464 = vmatprep.subr.mxu0 0.0
  %465 = vmatpush1.xpose.msra.mxu0 0.0
  %466 = vmatprep.subr.mxu0 0.0
  %467 = vmatpush1.xpose.msra.mxu0 0.0
  %468 = vmatprep.subr.mxu0 0.0
  %469 = vmatpush1.xpose.msra.mxu0 0.0
  %470 = vmatprep.subr.mxu0 0.0
  %471 = vmatpush1.xpose.msra.mxu0 0.0
  %472 = vmatprep.subr.mxu0 0.0
  %473 = vmatpush1.xpose.msra.mxu0 0.0
  %474 = vmatprep.subr.mxu0 0.0
  %475 = vmatpush1.xpose.msra.mxu0 0.0
  %476 = vmatprep.subr.mxu0 0.0
  %477 = vmatpush1.xpose.msra.mxu0 0.0
  %478 = vmatprep.subr.mxu0 0.0
  %479 = vmatpush1.xpose.msra.mxu0 0.0
  %480 = vmatprep.subr.mxu0 0.0
  %481 = vmatpush1.xpose.msra.mxu0 0.0
  %482 = vmatprep.subr.mxu0 0.0
  %483 = vmatpush1.xpose.msra.mxu0 0.0
  %484 = vmatprep.subr.mxu0 0.0
  %485 = vmatpush1.xpose.msra.mxu0 0.0
  %486 = vmatprep.subr.mxu0 0.0
  %487 = vmatpush1.xpose.msra.mxu0 0.0
  %488 = vmatprep.subr.mxu0 0.0
  %489 = vmatpush1.xpose.msra.mxu0 0.0
  %490 = vmatprep.subr.mxu0 0.0
  %491 = vmatpush1.xpose.msra.mxu0 0.0
  %492 = vmatprep.subr.mxu0 0.0
  %493 = vmatpush1.xpose.msra.mxu0 %v460
  %494 = vmatprep.subr.mxu0 0.0
  %495 = vmatpush2.xpose.msra.mxu0 0.0
  %496 = vmatprep.subr.mxu0 0.0
  %497 = vmatpush2.xpose.msra.mxu0 0.0
  %498 = vmatprep.subr.mxu0 0.0
  %499 = vmatpush2.xpose.msra.mxu0 0.0
  %500 = vmatprep.subr.mxu0 0.0
  %501 = vmatpush2.xpose.msra.mxu0 0.0
  %502 = vmatprep.subr.mxu0 0.0
  %503 = vmatpush2.xpose.msra.mxu0 0.0
  %504 = vmatprep.subr.mxu0 0.0
  %505 = vmatpush2.xpose.msra.mxu0 0.0
  %506 = vmatprep.subr.mxu0 0.0
  %507 = vmatpush2.xpose.msra.mxu0 0.0
  %508 = vmatprep.subr.mxu0 0.0
  %509 = vmatpush2.xpose.msra.mxu0 0.0
  %510 = vmatprep.subr.mxu0 0.0
  %511 = vmatpush2.xpose.msra.mxu0 0.0
  %512 = vmatprep.subr.mxu0 0.0
  %513 = vmatpush2.xpose.msra.mxu0 0.0
  %514 = vmatprep.subr.mxu0 0.0
  %515 = vmatpush2.xpose.msra.mxu0 0.0
  %516 = vmatprep.subr.mxu0 0.0
  %517 = vmatpush2.xpose.msra.mxu0 0.0
  %518 = vmatprep.subr.mxu0 0.0
  %519 = vmatpush2.xpose.msra.mxu0 0.0
  %520 = vmatprep.subr.mxu0 0.0
  %521 = vmatpush2.xpose.msra.mxu0 0.0
  %522 = vmatprep.subr.mxu0 0.0
  %523 = vmatpush2.xpose.msra.mxu0 0.0
  %524 = vmatprep.subr.mxu0 0.0
  %525 = vmatpush2.xpose.msra.mxu0 0.0
  %526 = vmatprep.mubr.f32.mxu0 0.0
  %527 = vmatmul.mubr.f32.gmra.mxu0 %v458
  %v528 = vpop.f32.mrf.mxu0
  %v529 = vadd.f32 0.0, %v528
  %v530 = vpop.f32.mrf.mxu0
  %531 = vdwg.mxu0
  %532 = vrot.lane.b32.xlu0 %v210, 96
  %v533 = vpop.permute.xlu0 %532
  %v534 = vsel %vm229, %v210, 0
  %v536 = vsel %vm229, %v533, 0
  %538 = vmatprep.subr.mxu0 0.0
  %539 = vmatpush1.xpose.msra.mxu0 0.0
  %540 = vmatprep.subr.mxu0 0.0
  %541 = vmatpush1.xpose.msra.mxu0 0.0
  %542 = vmatprep.subr.mxu0 0.0
  %543 = vmatpush1.xpose.msra.mxu0 0.0
  %544 = vmatprep.subr.mxu0 0.0
  %545 = vmatpush1.xpose.msra.mxu0 0.0
  %546 = vmatprep.subr.mxu0 0.0
  %547 = vmatpush1.xpose.msra.mxu0 0.0
  %548 = vmatprep.subr.mxu0 0.0
  %549 = vmatpush1.xpose.msra.mxu0 0.0
  %550 = vmatprep.subr.mxu0 0.0
  %551 = vmatpush1.xpose.msra.mxu0 0.0
  %552 = vmatprep.subr.mxu0 0.0
  %553 = vmatpush1.xpose.msra.mxu0 0.0
  %554 = vmatprep.subr.mxu0 0.0
  %555 = vmatpush1.xpose.msra.mxu0 0.0
  %556 = vmatprep.subr.mxu0 0.0
  %557 = vmatpush1.xpose.msra.mxu0 0.0
  %558 = vmatprep.subr.mxu0 0.0
  %559 = vmatpush1.xpose.msra.mxu0 0.0
  %560 = vmatprep.subr.mxu0 0.0
  %561 = vmatpush1.xpose.msra.mxu0 0.0
  %562 = vmatprep.subr.mxu0 0.0
  %563 = vmatpush1.xpose.msra.mxu0 0.0
  %564 = vmatprep.subr.mxu0 0.0
  %565 = vmatpush1.xpose.msra.mxu0 0.0
  %566 = vmatprep.subr.mxu0 0.0
  %567 = vmatpush1.xpose.msra.mxu0 0.0
  %568 = vmatprep.subr.mxu0 0.0
  %569 = vmatpush1.xpose.msra.mxu0 %v536
  %570 = vmatprep.subr.mxu0 0.0
  %571 = vmatpush2.xpose.msra.mxu0 0.0
  %572 = vmatprep.subr.mxu0 0.0
  %573 = vmatpush2.xpose.msra.mxu0 0.0
  %574 = vmatprep.subr.mxu0 0.0
  %575 = vmatpush2.xpose.msra.mxu0 0.0
  %576 = vmatprep.subr.mxu0 0.0
  %577 = vmatpush2.xpose.msra.mxu0 0.0
  %578 = vmatprep.subr.mxu0 0.0
  %579 = vmatpush2.xpose.msra.mxu0 0.0
  %580 = vmatprep.subr.mxu0 0.0
  %581 = vmatpush2.xpose.msra.mxu0 0.0
  %582 = vmatprep.subr.mxu0 0.0
  %583 = vmatpush2.xpose.msra.mxu0 0.0
  %584 = vmatprep.subr.mxu0 0.0
  %585 = vmatpush2.xpose.msra.mxu0 0.0
  %586 = vmatprep.subr.mxu0 0.0
  %587 = vmatpush2.xpose.msra.mxu0 0.0
  %588 = vmatprep.subr.mxu0 0.0
  %589 = vmatpush2.xpose.msra.mxu0 0.0
  %590 = vmatprep.subr.mxu0 0.0
  %591 = vmatpush2.xpose.msra.mxu0 0.0
  %592 = vmatprep.subr.mxu0 0.0
  %593 = vmatpush2.xpose.msra.mxu0 0.0
  %594 = vmatprep.subr.mxu0 0.0
  %595 = vmatpush2.xpose.msra.mxu0 0.0
  %596 = vmatprep.subr.mxu0 0.0
  %597 = vmatpush2.xpose.msra.mxu0 0.0
  %598 = vmatprep.subr.mxu0 0.0
  %599 = vmatpush2.xpose.msra.mxu0 0.0
  %600 = vmatprep.subr.mxu0 0.0
  %601 = vmatpush2.xpose.msra.mxu0 0.0
  %602 = vmatprep.mubr.f32.mxu0 0.0
  %603 = vmatmul.mubr.f32.gmra.mxu0 %v534
  %v604 = vpop.f32.mrf.mxu0
  %v605 = vadd.f32 0.0, %v604
  %v606 = vpop.f32.mrf.mxu0
  %607 = vdwg.mxu0
  %608 = vrot.lane.b32.xlu0 %v222, 96
  %v609 = vpop.permute.xlu0 %608
  %v610 = vsel %vm229, %v222, 0
  %v612 = vsel %vm229, %v609, 0
  %614 = vmatprep.subr.mxu0 0.0
  %615 = vmatpush1.xpose.msra.mxu0 0.0
  %616 = vmatprep.subr.mxu0 0.0
  %617 = vmatpush1.xpose.msra.mxu0 0.0
  %618 = vmatprep.subr.mxu0 0.0
  %619 = vmatpush1.xpose.msra.mxu0 0.0
  %620 = vmatprep.subr.mxu0 0.0
  %621 = vmatpush1.xpose.msra.mxu0 0.0
  %622 = vmatprep.subr.mxu0 0.0
  %623 = vmatpush1.xpose.msra.mxu0 0.0
  %624 = vmatprep.subr.mxu0 0.0
  %625 = vmatpush1.xpose.msra.mxu0 0.0
  %626 = vmatprep.subr.mxu0 0.0
  %627 = vmatpush1.xpose.msra.mxu0 0.0
  %628 = vmatprep.subr.mxu0 0.0
  %629 = vmatpush1.xpose.msra.mxu0 0.0
  %630 = vmatprep.subr.mxu0 0.0
  %631 = vmatpush1.xpose.msra.mxu0 0.0
  %632 = vmatprep.subr.mxu0 0.0
  %633 = vmatpush1.xpose.msra.mxu0 0.0
  %634 = vmatprep.subr.mxu0 0.0
  %635 = vmatpush1.xpose.msra.mxu0 0.0
  %636 = vmatprep.subr.mxu0 0.0
  %637 = vmatpush1.xpose.msra.mxu0 0.0
  %638 = vmatprep.subr.mxu0 0.0
  %639 = vmatpush1.xpose.msra.mxu0 0.0
  %640 = vmatprep.subr.mxu0 0.0
  %641 = vmatpush1.xpose.msra.mxu0 0.0
  %642 = vmatprep.subr.mxu0 0.0
  %643 = vmatpush1.xpose.msra.mxu0 0.0
  %644 = vmatprep.subr.mxu0 0.0
  %645 = vmatpush1.xpose.msra.mxu0 %v612
  %646 = vmatprep.subr.mxu0 0.0
  %647 = vmatpush2.xpose.msra.mxu0 0.0
  %648 = vmatprep.subr.mxu0 0.0
  %649 = vmatpush2.xpose.msra.mxu0 0.0
  %650 = vmatprep.subr.mxu0 0.0
  %651 = vmatpush2.xpose.msra.mxu0 0.0
  %652 = vmatprep.subr.mxu0 0.0
  %653 = vmatpush2.xpose.msra.mxu0 0.0
  %654 = vmatprep.subr.mxu0 0.0
  %655 = vmatpush2.xpose.msra.mxu0 0.0
  %656 = vmatprep.subr.mxu0 0.0
  %657 = vmatpush2.xpose.msra.mxu0 0.0
  %658 = vmatprep.subr.mxu0 0.0
  %659 = vmatpush2.xpose.msra.mxu0 0.0
  %660 = vmatprep.subr.mxu0 0.0
  %661 = vmatpush2.xpose.msra.mxu0 0.0
  %662 = vmatprep.subr.mxu0 0.0
  %663 = vmatpush2.xpose.msra.mxu0 0.0
  %664 = vmatprep.subr.mxu0 0.0
  %665 = vmatpush2.xpose.msra.mxu0 0.0
  %666 = vmatprep.subr.mxu0 0.0
  %667 = vmatpush2.xpose.msra.mxu0 0.0
  %668 = vmatprep.subr.mxu0 0.0
  %669 = vmatpush2.xpose.msra.mxu0 0.0
  %670 = vmatprep.subr.mxu0 0.0
  %671 = vmatpush2.xpose.msra.mxu0 0.0
  %672 = vmatprep.subr.mxu0 0.0
  %673 = vmatpush2.xpose.msra.mxu0 0.0
  %674 = vmatprep.subr.mxu0 0.0
  %675 = vmatpush2.xpose.msra.mxu0 0.0
  %676 = vmatprep.subr.mxu0 0.0
  %677 = vmatpush2.xpose.msra.mxu0 0.0
  %678 = vmatprep.mubr.f32.mxu0 0.0
  %679 = vmatmul.mubr.f32.gmra.mxu0 %v610
  %v680 = vpop.f32.mrf.mxu0
  %v681 = vadd.f32 0.0, %v680
  %v682 = vpop.f32.mrf.mxu0
  %683 = vdwg.mxu0
  %684 = vrot.lane.b32.xlu0 %v224, 96
  %v685 = vpop.permute.xlu0 %684
  %v686 = vsel %vm229, %v224, 0
  %v688 = vsel %vm229, %v685, 0
  %690 = vmatprep.subr.mxu0 0.0
  %691 = vmatpush1.xpose.msra.mxu0 0.0
  %692 = vmatprep.subr.mxu0 0.0
  %693 = vmatpush1.xpose.msra.mxu0 0.0
  %694 = vmatprep.subr.mxu0 0.0
  %695 = vmatpush1.xpose.msra.mxu0 0.0
  %696 = vmatprep.subr.mxu0 0.0
  %697 = vmatpush1.xpose.msra.mxu0 0.0
  %698 = vmatprep.subr.mxu0 0.0
  %699 = vmatpush1.xpose.msra.mxu0 0.0
  %700 = vmatprep.subr.mxu0 0.0
  %701 = vmatpush1.xpose.msra.mxu0 0.0
  %702 = vmatprep.subr.mxu0 0.0
  %703 = vmatpush1.xpose.msra.mxu0 0.0
  %704 = vmatprep.subr.mxu0 0.0
  %705 = vmatpush1.xpose.msra.mxu0 0.0
  %706 = vmatprep.subr.mxu0 0.0
  %707 = vmatpush1.xpose.msra.mxu0 0.0
  %708 = vmatprep.subr.mxu0 0.0
  %709 = vmatpush1.xpose.msra.mxu0 0.0
  %710 = vmatprep.subr.mxu0 0.0
  %711 = vmatpush1.xpose.msra.mxu0 0.0
  %712 = vmatprep.subr.mxu0 0.0
  %713 = vmatpush1.xpose.msra.mxu0 0.0
  %714 = vmatprep.subr.mxu0 0.0
  %715 = vmatpush1.xpose.msra.mxu0 0.0
  %716 = vmatprep.subr.mxu0 0.0
  %717 = vmatpush1.xpose.msra.mxu0 0.0
  %718 = vmatprep.subr.mxu0 0.0
  %719 = vmatpush1.xpose.msra.mxu0 0.0
  %720 = vmatprep.subr.mxu0 0.0
  %721 = vmatpush1.xpose.msra.mxu0 %v688
  %722 = vmatprep.subr.mxu0 0.0
  %723 = vmatpush2.xpose.msra.mxu0 0.0
  %724 = vmatprep.subr.mxu0 0.0
  %725 = vmatpush2.xpose.msra.mxu0 0.0
  %726 = vmatprep.subr.mxu0 0.0
  %727 = vmatpush2.xpose.msra.mxu0 0.0
  %728 = vmatprep.subr.mxu0 0.0
  %729 = vmatpush2.xpose.msra.mxu0 0.0
  %730 = vmatprep.subr.mxu0 0.0
  %731 = vmatpush2.xpose.msra.mxu0 0.0
  %732 = vmatprep.subr.mxu0 0.0
  %733 = vmatpush2.xpose.msra.mxu0 0.0
  %734 = vmatprep.subr.mxu0 0.0
  %735 = vmatpush2.xpose.msra.mxu0 0.0
  %736 = vmatprep.subr.mxu0 0.0
  %737 = vmatpush2.xpose.msra.mxu0 0.0
  %738 = vmatprep.subr.mxu0 0.0
  %739 = vmatpush2.xpose.msra.mxu0 0.0
  %740 = vmatprep.subr.mxu0 0.0
  %741 = vmatpush2.xpose.msra.mxu0 0.0
  %742 = vmatprep.subr.mxu0 0.0
  %743 = vmatpush2.xpose.msra.mxu0 0.0
  %744 = vmatprep.subr.mxu0 0.0
  %745 = vmatpush2.xpose.msra.mxu0 0.0
  %746 = vmatprep.subr.mxu0 0.0
  %747 = vmatpush2.xpose.msra.mxu0 0.0
  %748 = vmatprep.subr.mxu0 0.0
  %749 = vmatpush2.xpose.msra.mxu0 0.0
  %750 = vmatprep.subr.mxu0 0.0
  %751 = vmatpush2.xpose.msra.mxu0 0.0
  %752 = vmatprep.subr.mxu0 0.0
  %753 = vmatpush2.xpose.msra.mxu0 0.0
  %754 = vmatprep.mubr.f32.mxu0 0.0
  %755 = vmatmul.mubr.f32.gmra.mxu0 %v686
  %v756 = vpop.f32.mrf.mxu0
  %v757 = vadd.f32 0.0, %v756
  %v758 = vpop.f32.mrf.mxu0
  %759 = vdwg.mxu0
  %760 = vrot.lane.b32.xlu0 %v226, 96
  %v761 = vpop.permute.xlu0 %760
  %v762 = vsel %vm229, %v226, 0
  %v764 = vsel %vm229, %v761, 0
  %766 = vmatprep.subr.mxu0 0.0
  %767 = vmatpush1.xpose.msra.mxu0 0.0
  %768 = vmatprep.subr.mxu0 0.0
  %769 = vmatpush1.xpose.msra.mxu0 0.0
  %770 = vmatprep.subr.mxu0 0.0
  %771 = vmatpush1.xpose.msra.mxu0 0.0
  %772 = vmatprep.subr.mxu0 0.0
  %773 = vmatpush1.xpose.msra.mxu0 0.0
  %774 = vmatprep.subr.mxu0 0.0
  %775 = vmatpush1.xpose.msra.mxu0 0.0
  %776 = vmatprep.subr.mxu0 0.0
  %777 = vmatpush1.xpose.msra.mxu0 0.0
  %778 = vmatprep.subr.mxu0 0.0
  %779 = vmatpush1.xpose.msra.mxu0 0.0
  %780 = vmatprep.subr.mxu0 0.0
  %781 = vmatpush1.xpose.msra.mxu0 0.0
  %782 = vmatprep.subr.mxu0 0.0
  %783 = vmatpush1.xpose.msra.mxu0 0.0
  %784 = vmatprep.subr.mxu0 0.0
  %785 = vmatpush1.xpose.msra.mxu0 0.0
  %786 = vmatprep.subr.mxu0 0.0
  %787 = vmatpush1.xpose.msra.mxu0 0.0
  %788 = vmatprep.subr.mxu0 0.0
  %789 = vmatpush1.xpose.msra.mxu0 0.0
  %790 = vmatprep.subr.mxu0 0.0
  %791 = vmatpush1.xpose.msra.mxu0 0.0
  %792 = vmatprep.subr.mxu0 0.0
  %793 = vmatpush1.xpose.msra.mxu0 0.0
  %794 = vmatprep.subr.mxu0 0.0
  %795 = vmatpush1.xpose.msra.mxu0 0.0
  %796 = vmatprep.subr.mxu0 0.0
  %797 = vmatpush1.xpose.msra.mxu0 %v764
  %798 = vmatprep.subr.mxu0 0.0
  %799 = vmatpush2.xpose.msra.mxu0 0.0
  %800 = vmatprep.subr.mxu0 0.0
  %801 = vmatpush2.xpose.msra.mxu0 0.0
  %802 = vmatprep.subr.mxu0 0.0
  %803 = vmatpush2.xpose.msra.mxu0 0.0
  %804 = vmatprep.subr.mxu0 0.0
  %805 = vmatpush2.xpose.msra.mxu0 0.0
  %806 = vmatprep.subr.mxu0 0.0
  %807 = vmatpush2.xpose.msra.mxu0 0.0
  %808 = vmatprep.subr.mxu0 0.0
  %809 = vmatpush2.xpose.msra.mxu0 0.0
  %810 = vmatprep.subr.mxu0 0.0
  %811 = vmatpush2.xpose.msra.mxu0 0.0
  %812 = vmatprep.subr.mxu0 0.0
  %813 = vmatpush2.xpose.msra.mxu0 0.0
  %814 = vmatprep.subr.mxu0 0.0
  %815 = vmatpush2.xpose.msra.mxu0 0.0
  %816 = vmatprep.subr.mxu0 0.0
  %817 = vmatpush2.xpose.msra.mxu0 0.0
  %818 = vmatprep.subr.mxu0 0.0
  %819 = vmatpush2.xpose.msra.mxu0 0.0
  %820 = vmatprep.subr.mxu0 0.0
  %821 = vmatpush2.xpose.msra.mxu0 0.0
  %822 = vmatprep.subr.mxu0 0.0
  %823 = vmatpush2.xpose.msra.mxu0 0.0
  %824 = vmatprep.subr.mxu0 0.0
  %825 = vmatpush2.xpose.msra.mxu0 0.0
  %826 = vmatprep.subr.mxu0 0.0
  %827 = vmatpush2.xpose.msra.mxu0 0.0
  %828 = vmatprep.subr.mxu0 0.0
  %829 = vmatpush2.xpose.msra.mxu0 0.0
  %830 = vmatprep.mubr.f32.mxu0 0.0
  %831 = vmatmul.mubr.f32.gmra.mxu0 %v762
  %v832 = vpop.f32.mrf.mxu0
  %v833 = vadd.f32 0.0, %v832
  %v834 = vpop.f32.mrf.mxu0
  %835 = vdwg.mxu0
  %v836 = vmul.f32 %v301, 0.35355338
  %v837 = vmul.f32 %v377, 0.35355338
  %v838 = vmul.f32 %v453, 0.35355338
  %v839 = vmul.f32 %v529, 0.35355338
  %v840 = vmul.f32 %v605, 0.35355338
  %v841 = vmul.f32 %v681, 0.35355338
  %v842 = vmul.f32 %v757, 0.35355338
  %v843 = vmul.f32 %v833, 0.35355338
  %v852 = vlaneseq
  %v853 = vshrl.u32 %v852, 7
  %v854 = vsub.s32 0, %v853
  %v855 = vrot.slane %v113, %v854
  %v856 = vlaneseq
  %v857 = vshrl.u32 %v856, 7
  %v858 = vsub.s32 0, %v857
  %v859 = vrot.slane %v114, %v858
  %v860 = vlaneseq
  %v861 = vshrl.u32 %v860, 7
  %v862 = vsub.s32 0, %v861
  %v863 = vrot.slane %v115, %v862
  %v864 = vlaneseq
  %v865 = vshrl.u32 %v864, 7
  %v866 = vsub.s32 0, %v865
  %v867 = vrot.slane %v116, %v866
  %v868 = vlaneseq
  %v869 = vshrl.u32 %v868, 7
  %v870 = vsub.s32 0, %v869
  %v871 = vrot.slane %v117, %v870
  %v872 = vlaneseq
  %v873 = vshrl.u32 %v872, 7
  %v874 = vsub.s32 0, %v873
  %v875 = vrot.slane %v118, %v874
  %v876 = vlaneseq
  %v877 = vshrl.u32 %v876, 7
  %v878 = vsub.s32 0, %v877
  %v879 = vrot.slane %v119, %v878
  %v880 = vlaneseq
  %v881 = vshrl.u32 %v880, 7
  %v882 = vsub.s32 0, %v881
  %v883 = vrot.slane %v120, %v882
  %v892 = vadd.f32 %v836, %v855
  %v893 = vadd.f32 %v837, %v859
  %v894 = vadd.f32 %v838, %v863
  %v895 = vadd.f32 %v839, %v867
  %v896 = vadd.f32 %v840, %v871
  %v897 = vadd.f32 %v841, %v875
  %v898 = vadd.f32 %v842, %v879
  %v899 = vadd.f32 %v843, %v883
  %v900 = vsel %vm229, %v892, -inf
  %901 = vmax.xlane.f32.xlu0 %v900
  %v902 = vpop.xlane.xlu0 %901
  %v903 = vsel %vm229, %v893, -inf
  %904 = vmax.xlane.f32.xlu0 %v903
  %v905 = vpop.xlane.xlu0 %904
  %v906 = vsel %vm229, %v894, -inf
  %907 = vmax.xlane.f32.xlu0 %v906
  %v908 = vpop.xlane.xlu0 %907
  %v909 = vsel %vm229, %v895, -inf
  %910 = vmax.xlane.f32.xlu0 %v909
  %v911 = vpop.xlane.xlu0 %910
  %v912 = vsel %vm229, %v896, -inf
  %913 = vmax.xlane.f32.xlu0 %v912
  %v914 = vpop.xlane.xlu0 %913
  %v915 = vsel %vm229, %v897, -inf
  %916 = vmax.xlane.f32.xlu0 %v915
  %v917 = vpop.xlane.xlu0 %916
  %v918 = vsel %vm229, %v898, -inf
  %919 = vmax.xlane.f32.xlu0 %v918
  %v920 = vpop.xlane.xlu0 %919
  %v921 = vsel %vm229, %v899, -inf
  %922 = vmax.xlane.f32.xlu0 %v921
  %v923 = vpop.xlane.xlu0 %922
  %v924 = vsub.f32 %v892, %v902
  %v925 = vsub.f32 %v893, %v905
  %v926 = vsub.f32 %v894, %v908
  %v927 = vsub.f32 %v895, %v911
  %v928 = vsub.f32 %v896, %v914
  %v929 = vsub.f32 %v897, %v917
  %v930 = vsub.f32 %v898, %v920
  %v931 = vsub.f32 %v899, %v923
  %v932 = vmul.f32 %v924, 1.442695
  %v933 = vpow.pop %v932
  %v934 = vmul.f32 %v925, 1.442695
  %v935 = vpow.pop %v934
  %v936 = vmul.f32 %v926, 1.442695
  %v937 = vpow.pop %v936
  %v938 = vmul.f32 %v927, 1.442695
  %v939 = vpow.pop %v938
  %v940 = vmul.f32 %v928, 1.442695
  %v941 = vpow.pop %v940
  %v942 = vmul.f32 %v929, 1.442695
  %v943 = vpow.pop %v942
  %v944 = vmul.f32 %v930, 1.442695
  %v945 = vpow.pop %v944
  %v946 = vmul.f32 %v931, 1.442695
  %v947 = vpow.pop %v946
  %v948 = vsel %vm229, %v933, 0.0
  %949 = vadd.xlane.f32.xlu0 %v948
  %v950 = vpop.xlane.xlu0 %949
  %v951 = vsel %vm229, %v935, 0.0
  %952 = vadd.xlane.f32.xlu0 %v951
  %v953 = vpop.xlane.xlu0 %952
  %v954 = vsel %vm229, %v937, 0.0
  %955 = vadd.xlane.f32.xlu0 %v954
  %v956 = vpop.xlane.xlu0 %955
  %v957 = vsel %vm229, %v939, 0.0
  %958 = vadd.xlane.f32.xlu0 %v957
  %v959 = vpop.xlane.xlu0 %958
  %v960 = vsel %vm229, %v941, 0.0
  %961 = vadd.xlane.f32.xlu0 %v960
  %v962 = vpop.xlane.xlu0 %961
  %v963 = vsel %vm229, %v943, 0.0
  %964 = vadd.xlane.f32.xlu0 %v963
  %v965 = vpop.xlane.xlu0 %964
  %v966 = vsel %vm229, %v945, 0.0
  %967 = vadd.xlane.f32.xlu0 %v966
  %v968 = vpop.xlane.xlu0 %967
  %v969 = vsel %vm229, %v947, 0.0
  %970 = vadd.xlane.f32.xlu0 %v969
  %v971 = vpop.xlane.xlu0 %970
  %v972 = vrcp.pop %v950
  %v973 = vrcp.pop %v953
  %v974 = vrcp.pop %v956
  %v975 = vrcp.pop %v959
  %v976 = vrcp.pop %v962
  %v977 = vrcp.pop %v965
  %v978 = vrcp.pop %v968
  %v979 = vrcp.pop %v971
  %v980 = vmul.f32 %v933, %v972
  %v981 = vmul.f32 %v935, %v973
  %v982 = vmul.f32 %v937, %v974
  %v983 = vmul.f32 %v939, %v975
  %v984 = vmul.f32 %v941, %v976
  %v985 = vmul.f32 %v943, %v977
  %v986 = vmul.f32 %v945, %v978
  %v987 = vmul.f32 %v947, %v979
  %988 = vrot.lane.b32.xlu0 %v205, 64
  %v989 = vpop.permute.xlu0 %988
  %v992 = vsel %vm229, %v980, 0
  %994 = vmatprep.subr.mxu0 0.0
  %995 = vmatpush1.msra.mxu0 0.0
  %996 = vmatprep.subr.mxu0 0.0
  %997 = vmatpush1.msra.mxu0 0.0
  %998 = vmatprep.subr.mxu0 0.0
  %999 = vmatpush1.msra.mxu0 0.0
  %1000 = vmatprep.subr.mxu0 0.0
  %1001 = vmatpush1.msra.mxu0 0.0
  %1002 = vmatprep.subr.mxu0 0.0
  %1003 = vmatpush1.msra.mxu0 0.0
  %1004 = vmatprep.subr.mxu0 0.0
  %1005 = vmatpush1.msra.mxu0 0.0
  %1006 = vmatprep.subr.mxu0 0.0
  %1007 = vmatpush1.msra.mxu0 0.0
  %1008 = vmatprep.subr.mxu0 0.0
  %1009 = vmatpush1.msra.mxu0 0.0
  %1010 = vmatprep.subr.mxu0 0.0
  %1011 = vmatpush1.msra.mxu0 0.0
  %1012 = vmatprep.subr.mxu0 0.0
  %1013 = vmatpush1.msra.mxu0 0.0
  %1014 = vmatprep.subr.mxu0 0.0
  %1015 = vmatpush1.msra.mxu0 0.0
  %1016 = vmatprep.subr.mxu0 0.0
  %1017 = vmatpush1.msra.mxu0 0.0
  %1018 = vmatprep.subr.mxu0 0.0
  %1019 = vmatpush1.msra.mxu0 0.0
  %1020 = vmatprep.subr.mxu0 0.0
  %1021 = vmatpush1.msra.mxu0 0.0
  %1022 = vmatprep.subr.mxu0 0.0
  %1023 = vmatpush1.msra.mxu0 0.0
  %1024 = vmatprep.subr.mxu0 0.0
  %1025 = vmatpush1.msra.mxu0 %v989
  %1026 = vmatprep.subr.mxu0 0.0
  %1027 = vmatpush2.msra.mxu0 0.0
  %1028 = vmatprep.subr.mxu0 0.0
  %1029 = vmatpush2.msra.mxu0 0.0
  %1030 = vmatprep.subr.mxu0 0.0
  %1031 = vmatpush2.msra.mxu0 0.0
  %1032 = vmatprep.subr.mxu0 0.0
  %1033 = vmatpush2.msra.mxu0 0.0
  %1034 = vmatprep.subr.mxu0 0.0
  %1035 = vmatpush2.msra.mxu0 0.0
  %1036 = vmatprep.subr.mxu0 0.0
  %1037 = vmatpush2.msra.mxu0 0.0
  %1038 = vmatprep.subr.mxu0 0.0
  %1039 = vmatpush2.msra.mxu0 0.0
  %1040 = vmatprep.subr.mxu0 0.0
  %1041 = vmatpush2.msra.mxu0 0.0
  %1042 = vmatprep.subr.mxu0 0.0
  %1043 = vmatpush2.msra.mxu0 0.0
  %1044 = vmatprep.subr.mxu0 0.0
  %1045 = vmatpush2.msra.mxu0 0.0
  %1046 = vmatprep.subr.mxu0 0.0
  %1047 = vmatpush2.msra.mxu0 0.0
  %1048 = vmatprep.subr.mxu0 0.0
  %1049 = vmatpush2.msra.mxu0 0.0
  %1050 = vmatprep.subr.mxu0 0.0
  %1051 = vmatpush2.msra.mxu0 0.0
  %1052 = vmatprep.subr.mxu0 0.0
  %1053 = vmatpush2.msra.mxu0 0.0
  %1054 = vmatprep.subr.mxu0 0.0
  %1055 = vmatpush2.msra.mxu0 0.0
  %1056 = vmatprep.subr.mxu0 0.0
  %1057 = vmatpush2.msra.mxu0 0.0
  %1058 = vmatprep.mubr.f32.mxu0 0.0
  %1059 = vmatmul.mubr.f32.gmra.mxu0 %v992
  %v1060 = vpop.f32.mrf.mxu0
  %v1061 = vadd.f32 0.0, %v1060
  %v1062 = vpop.f32.mrf.mxu0
  %1063 = vdwg.mxu0
  %1064 = vrot.lane.b32.xlu0 %v215, 64
  %v1065 = vpop.permute.xlu0 %1064
  %v1068 = vsel %vm229, %v981, 0
  %1070 = vmatprep.subr.mxu0 0.0
  %1071 = vmatpush1.msra.mxu0 0.0
  %1072 = vmatprep.subr.mxu0 0.0
  %1073 = vmatpush1.msra.mxu0 0.0
  %1074 = vmatprep.subr.mxu0 0.0
  %1075 = vmatpush1.msra.mxu0 0.0
  %1076 = vmatprep.subr.mxu0 0.0
  %1077 = vmatpush1.msra.mxu0 0.0
  %1078 = vmatprep.subr.mxu0 0.0
  %1079 = vmatpush1.msra.mxu0 0.0
  %1080 = vmatprep.subr.mxu0 0.0
  %1081 = vmatpush1.msra.mxu0 0.0
  %1082 = vmatprep.subr.mxu0 0.0
  %1083 = vmatpush1.msra.mxu0 0.0
  %1084 = vmatprep.subr.mxu0 0.0
  %1085 = vmatpush1.msra.mxu0 0.0
  %1086 = vmatprep.subr.mxu0 0.0
  %1087 = vmatpush1.msra.mxu0 0.0
  %1088 = vmatprep.subr.mxu0 0.0
  %1089 = vmatpush1.msra.mxu0 0.0
  %1090 = vmatprep.subr.mxu0 0.0
  %1091 = vmatpush1.msra.mxu0 0.0
  %1092 = vmatprep.subr.mxu0 0.0
  %1093 = vmatpush1.msra.mxu0 0.0
  %1094 = vmatprep.subr.mxu0 0.0
  %1095 = vmatpush1.msra.mxu0 0.0
  %1096 = vmatprep.subr.mxu0 0.0
  %1097 = vmatpush1.msra.mxu0 0.0
  %1098 = vmatprep.subr.mxu0 0.0
  %1099 = vmatpush1.msra.mxu0 0.0
  %1100 = vmatprep.subr.mxu0 0.0
  %1101 = vmatpush1.msra.mxu0 %v1065
  %1102 = vmatprep.subr.mxu0 0.0
  %1103 = vmatpush2.msra.mxu0 0.0
  %1104 = vmatprep.subr.mxu0 0.0
  %1105 = vmatpush2.msra.mxu0 0.0
  %1106 = vmatprep.subr.mxu0 0.0
  %1107 = vmatpush2.msra.mxu0 0.0
  %1108 = vmatprep.subr.mxu0 0.0
  %1109 = vmatpush2.msra.mxu0 0.0
  %1110 = vmatprep.subr.mxu0 0.0
  %1111 = vmatpush2.msra.mxu0 0.0
  %1112 = vmatprep.subr.mxu0 0.0
  %1113 = vmatpush2.msra.mxu0 0.0
  %1114 = vmatprep.subr.mxu0 0.0
  %1115 = vmatpush2.msra.mxu0 0.0
  %1116 = vmatprep.subr.mxu0 0.0
  %1117 = vmatpush2.msra.mxu0 0.0
  %1118 = vmatprep.subr.mxu0 0.0
  %1119 = vmatpush2.msra.mxu0 0.0
  %1120 = vmatprep.subr.mxu0 0.0
  %1121 = vmatpush2.msra.mxu0 0.0
  %1122 = vmatprep.subr.mxu0 0.0
  %1123 = vmatpush2.msra.mxu0 0.0
  %1124 = vmatprep.subr.mxu0 0.0
  %1125 = vmatpush2.msra.mxu0 0.0
  %1126 = vmatprep.subr.mxu0 0.0
  %1127 = vmatpush2.msra.mxu0 0.0
  %1128 = vmatprep.subr.mxu0 0.0
  %1129 = vmatpush2.msra.mxu0 0.0
  %1130 = vmatprep.subr.mxu0 0.0
  %1131 = vmatpush2.msra.mxu0 0.0
  %1132 = vmatprep.subr.mxu0 0.0
  %1133 = vmatpush2.msra.mxu0 0.0
  %1134 = vmatprep.mubr.f32.mxu0 0.0
  %1135 = vmatmul.mubr.f32.gmra.mxu0 %v1068
  %v1136 = vpop.f32.mrf.mxu0
  %v1137 = vadd.f32 0.0, %v1136
  %v1138 = vpop.f32.mrf.mxu0
  %1139 = vdwg.mxu0
  %1140 = vrot.lane.b32.xlu0 %v217, 64
  %v1141 = vpop.permute.xlu0 %1140
  %v1144 = vsel %vm229, %v982, 0
  %1146 = vmatprep.subr.mxu0 0.0
  %1147 = vmatpush1.msra.mxu0 0.0
  %1148 = vmatprep.subr.mxu0 0.0
  %1149 = vmatpush1.msra.mxu0 0.0
  %1150 = vmatprep.subr.mxu0 0.0
  %1151 = vmatpush1.msra.mxu0 0.0
  %1152 = vmatprep.subr.mxu0 0.0
  %1153 = vmatpush1.msra.mxu0 0.0
  %1154 = vmatprep.subr.mxu0 0.0
  %1155 = vmatpush1.msra.mxu0 0.0
  %1156 = vmatprep.subr.mxu0 0.0
  %1157 = vmatpush1.msra.mxu0 0.0
  %1158 = vmatprep.subr.mxu0 0.0
  %1159 = vmatpush1.msra.mxu0 0.0
  %1160 = vmatprep.subr.mxu0 0.0
  %1161 = vmatpush1.msra.mxu0 0.0
  %1162 = vmatprep.subr.mxu0 0.0
  %1163 = vmatpush1.msra.mxu0 0.0
  %1164 = vmatprep.subr.mxu0 0.0
  %1165 = vmatpush1.msra.mxu0 0.0
  %1166 = vmatprep.subr.mxu0 0.0
  %1167 = vmatpush1.msra.mxu0 0.0
  %1168 = vmatprep.subr.mxu0 0.0
  %1169 = vmatpush1.msra.mxu0 0.0
  %1170 = vmatprep.subr.mxu0 0.0
  %1171 = vmatpush1.msra.mxu0 0.0
  %1172 = vmatprep.subr.mxu0 0.0
  %1173 = vmatpush1.msra.mxu0 0.0
  %1174 = vmatprep.subr.mxu0 0.0
  %1175 = vmatpush1.msra.mxu0 0.0
  %1176 = vmatprep.subr.mxu0 0.0
  %1177 = vmatpush1.msra.mxu0 %v1141
  %1178 = vmatprep.subr.mxu0 0.0
  %1179 = vmatpush2.msra.mxu0 0.0
  %1180 = vmatprep.subr.mxu0 0.0
  %1181 = vmatpush2.msra.mxu0 0.0
  %1182 = vmatprep.subr.mxu0 0.0
  %1183 = vmatpush2.msra.mxu0 0.0
  %1184 = vmatprep.subr.mxu0 0.0
  %1185 = vmatpush2.msra.mxu0 0.0
  %1186 = vmatprep.subr.mxu0 0.0
  %1187 = vmatpush2.msra.mxu0 0.0
  %1188 = vmatprep.subr.mxu0 0.0
  %1189 = vmatpush2.msra.mxu0 0.0
  %1190 = vmatprep.subr.mxu0 0.0
  %1191 = vmatpush2.msra.mxu0 0.0
  %1192 = vmatprep.subr.mxu0 0.0
  %1193 = vmatpush2.msra.mxu0 0.0
  %1194 = vmatprep.subr.mxu0 0.0
  %1195 = vmatpush2.msra.mxu0 0.0
  %1196 = vmatprep.subr.mxu0 0.0
  %1197 = vmatpush2.msra.mxu0 0.0
  %1198 = vmatprep.subr.mxu0 0.0
  %1199 = vmatpush2.msra.mxu0 0.0
  %1200 = vmatprep.subr.mxu0 0.0
  %1201 = vmatpush2.msra.mxu0 0.0
  %1202 = vmatprep.subr.mxu0 0.0
  %1203 = vmatpush2.msra.mxu0 0.0
  %1204 = vmatprep.subr.mxu0 0.0
  %1205 = vmatpush2.msra.mxu0 0.0
  %1206 = vmatprep.subr.mxu0 0.0
  %1207 = vmatpush2.msra.mxu0 0.0
  %1208 = vmatprep.subr.mxu0 0.0
  %1209 = vmatpush2.msra.mxu0 0.0
  %1210 = vmatprep.mubr.f32.mxu0 0.0
  %1211 = vmatmul.mubr.f32.gmra.mxu0 %v1144
  %v1212 = vpop.f32.mrf.mxu0
  %v1213 = vadd.f32 0.0, %v1212
  %v1214 = vpop.f32.mrf.mxu0
  %1215 = vdwg.mxu0
  %1216 = vrot.lane.b32.xlu0 %v219, 64
  %v1217 = vpop.permute.xlu0 %1216
  %v1220 = vsel %vm229, %v983, 0
  %1222 = vmatprep.subr.mxu0 0.0
  %1223 = vmatpush1.msra.mxu0 0.0
  %1224 = vmatprep.subr.mxu0 0.0
  %1225 = vmatpush1.msra.mxu0 0.0
  %1226 = vmatprep.subr.mxu0 0.0
  %1227 = vmatpush1.msra.mxu0 0.0
  %1228 = vmatprep.subr.mxu0 0.0
  %1229 = vmatpush1.msra.mxu0 0.0
  %1230 = vmatprep.subr.mxu0 0.0
  %1231 = vmatpush1.msra.mxu0 0.0
  %1232 = vmatprep.subr.mxu0 0.0
  %1233 = vmatpush1.msra.mxu0 0.0
  %1234 = vmatprep.subr.mxu0 0.0
  %1235 = vmatpush1.msra.mxu0 0.0
  %1236 = vmatprep.subr.mxu0 0.0
  %1237 = vmatpush1.msra.mxu0 0.0
  %1238 = vmatprep.subr.mxu0 0.0
  %1239 = vmatpush1.msra.mxu0 0.0
  %1240 = vmatprep.subr.mxu0 0.0
  %1241 = vmatpush1.msra.mxu0 0.0
  %1242 = vmatprep.subr.mxu0 0.0
  %1243 = vmatpush1.msra.mxu0 0.0
  %1244 = vmatprep.subr.mxu0 0.0
  %1245 = vmatpush1.msra.mxu0 0.0
  %1246 = vmatprep.subr.mxu0 0.0
  %1247 = vmatpush1.msra.mxu0 0.0
  %1248 = vmatprep.subr.mxu0 0.0
  %1249 = vmatpush1.msra.mxu0 0.0
  %1250 = vmatprep.subr.mxu0 0.0
  %1251 = vmatpush1.msra.mxu0 0.0
  %1252 = vmatprep.subr.mxu0 0.0
  %1253 = vmatpush1.msra.mxu0 %v1217
  %1254 = vmatprep.subr.mxu0 0.0
  %1255 = vmatpush2.msra.mxu0 0.0
  %1256 = vmatprep.subr.mxu0 0.0
  %1257 = vmatpush2.msra.mxu0 0.0
  %1258 = vmatprep.subr.mxu0 0.0
  %1259 = vmatpush2.msra.mxu0 0.0
  %1260 = vmatprep.subr.mxu0 0.0
  %1261 = vmatpush2.msra.mxu0 0.0
  %1262 = vmatprep.subr.mxu0 0.0
  %1263 = vmatpush2.msra.mxu0 0.0
  %1264 = vmatprep.subr.mxu0 0.0
  %1265 = vmatpush2.msra.mxu0 0.0
  %1266 = vmatprep.subr.mxu0 0.0
  %1267 = vmatpush2.msra.mxu0 0.0
  %1268 = vmatprep.subr.mxu0 0.0
  %1269 = vmatpush2.msra.mxu0 0.0
  %1270 = vmatprep.subr.mxu0 0.0
  %1271 = vmatpush2.msra.mxu0 0.0
  %1272 = vmatprep.subr.mxu0 0.0
  %1273 = vmatpush2.msra.mxu0 0.0
  %1274 = vmatprep.subr.mxu0 0.0
  %1275 = vmatpush2.msra.mxu0 0.0
  %1276 = vmatprep.subr.mxu0 0.0
  %1277 = vmatpush2.msra.mxu0 0.0
  %1278 = vmatprep.subr.mxu0 0.0
  %1279 = vmatpush2.msra.mxu0 0.0
  %1280 = vmatprep.subr.mxu0 0.0
  %1281 = vmatpush2.msra.mxu0 0.0
  %1282 = vmatprep.subr.mxu0 0.0
  %1283 = vmatpush2.msra.mxu0 0.0
  %1284 = vmatprep.subr.mxu0 0.0
  %1285 = vmatpush2.msra.mxu0 0.0
  %1286 = vmatprep.mubr.f32.mxu0 0.0
  %1287 = vmatmul.mubr.f32.gmra.mxu0 %v1220
  %v1288 = vpop.f32.mrf.mxu0
  %v1289 = vadd.f32 0.0, %v1288
  %v1290 = vpop.f32.mrf.mxu0
  %1291 = vdwg.mxu0
  %1292 = vrot.lane.b32.xlu0 %v210, 64
  %v1293 = vpop.permute.xlu0 %1292
  %v1296 = vsel %vm229, %v984, 0
  %1298 = vmatprep.subr.mxu0 0.0
  %1299 = vmatpush1.msra.mxu0 0.0
  %1300 = vmatprep.subr.mxu0 0.0
  %1301 = vmatpush1.msra.mxu0 0.0
  %1302 = vmatprep.subr.mxu0 0.0
  %1303 = vmatpush1.msra.mxu0 0.0
  %1304 = vmatprep.subr.mxu0 0.0
  %1305 = vmatpush1.msra.mxu0 0.0
  %1306 = vmatprep.subr.mxu0 0.0
  %1307 = vmatpush1.msra.mxu0 0.0
  %1308 = vmatprep.subr.mxu0 0.0
  %1309 = vmatpush1.msra.mxu0 0.0
  %1310 = vmatprep.subr.mxu0 0.0
  %1311 = vmatpush1.msra.mxu0 0.0
  %1312 = vmatprep.subr.mxu0 0.0
  %1313 = vmatpush1.msra.mxu0 0.0
  %1314 = vmatprep.subr.mxu0 0.0
  %1315 = vmatpush1.msra.mxu0 0.0
  %1316 = vmatprep.subr.mxu0 0.0
  %1317 = vmatpush1.msra.mxu0 0.0
  %1318 = vmatprep.subr.mxu0 0.0
  %1319 = vmatpush1.msra.mxu0 0.0
  %1320 = vmatprep.subr.mxu0 0.0
  %1321 = vmatpush1.msra.mxu0 0.0
  %1322 = vmatprep.subr.mxu0 0.0
  %1323 = vmatpush1.msra.mxu0 0.0
  %1324 = vmatprep.subr.mxu0 0.0
  %1325 = vmatpush1.msra.mxu0 0.0
  %1326 = vmatprep.subr.mxu0 0.0
  %1327 = vmatpush1.msra.mxu0 0.0
  %1328 = vmatprep.subr.mxu0 0.0
  %1329 = vmatpush1.msra.mxu0 %v1293
  %1330 = vmatprep.subr.mxu0 0.0
  %1331 = vmatpush2.msra.mxu0 0.0
  %1332 = vmatprep.subr.mxu0 0.0
  %1333 = vmatpush2.msra.mxu0 0.0
  %1334 = vmatprep.subr.mxu0 0.0
  %1335 = vmatpush2.msra.mxu0 0.0
  %1336 = vmatprep.subr.mxu0 0.0
  %1337 = vmatpush2.msra.mxu0 0.0
  %1338 = vmatprep.subr.mxu0 0.0
  %1339 = vmatpush2.msra.mxu0 0.0
  %1340 = vmatprep.subr.mxu0 0.0
  %1341 = vmatpush2.msra.mxu0 0.0
  %1342 = vmatprep.subr.mxu0 0.0
  %1343 = vmatpush2.msra.mxu0 0.0
  %1344 = vmatprep.subr.mxu0 0.0
  %1345 = vmatpush2.msra.mxu0 0.0
  %1346 = vmatprep.subr.mxu0 0.0
  %1347 = vmatpush2.msra.mxu0 0.0
  %1348 = vmatprep.subr.mxu0 0.0
  %1349 = vmatpush2.msra.mxu0 0.0
  %1350 = vmatprep.subr.mxu0 0.0
  %1351 = vmatpush2.msra.mxu0 0.0
  %1352 = vmatprep.subr.mxu0 0.0
  %1353 = vmatpush2.msra.mxu0 0.0
  %1354 = vmatprep.subr.mxu0 0.0
  %1355 = vmatpush2.msra.mxu0 0.0
  %1356 = vmatprep.subr.mxu0 0.0
  %1357 = vmatpush2.msra.mxu0 0.0
  %1358 = vmatprep.subr.mxu0 0.0
  %1359 = vmatpush2.msra.mxu0 0.0
  %1360 = vmatprep.subr.mxu0 0.0
  %1361 = vmatpush2.msra.mxu0 0.0
  %1362 = vmatprep.mubr.f32.mxu0 0.0
  %1363 = vmatmul.mubr.f32.gmra.mxu0 %v1296
  %v1364 = vpop.f32.mrf.mxu0
  %v1365 = vadd.f32 0.0, %v1364
  %v1366 = vpop.f32.mrf.mxu0
  %1367 = vdwg.mxu0
  %1368 = vrot.lane.b32.xlu0 %v222, 64
  %v1369 = vpop.permute.xlu0 %1368
  %v1372 = vsel %vm229, %v985, 0
  %1374 = vmatprep.subr.mxu0 0.0
  %1375 = vmatpush1.msra.mxu0 0.0
  %1376 = vmatprep.subr.mxu0 0.0
  %1377 = vmatpush1.msra.mxu0 0.0
  %1378 = vmatprep.subr.mxu0 0.0
  %1379 = vmatpush1.msra.mxu0 0.0
  %1380 = vmatprep.subr.mxu0 0.0
  %1381 = vmatpush1.msra.mxu0 0.0
  %1382 = vmatprep.subr.mxu0 0.0
  %1383 = vmatpush1.msra.mxu0 0.0
  %1384 = vmatprep.subr.mxu0 0.0
  %1385 = vmatpush1.msra.mxu0 0.0
  %1386 = vmatprep.subr.mxu0 0.0
  %1387 = vmatpush1.msra.mxu0 0.0
  %1388 = vmatprep.subr.mxu0 0.0
  %1389 = vmatpush1.msra.mxu0 0.0
  %1390 = vmatprep.subr.mxu0 0.0
  %1391 = vmatpush1.msra.mxu0 0.0
  %1392 = vmatprep.subr.mxu0 0.0
  %1393 = vmatpush1.msra.mxu0 0.0
  %1394 = vmatprep.subr.mxu0 0.0
  %1395 = vmatpush1.msra.mxu0 0.0
  %1396 = vmatprep.subr.mxu0 0.0
  %1397 = vmatpush1.msra.mxu0 0.0
  %1398 = vmatprep.subr.mxu0 0.0
  %1399 = vmatpush1.msra.mxu0 0.0
  %1400 = vmatprep.subr.mxu0 0.0
  %1401 = vmatpush1.msra.mxu0 0.0
  %1402 = vmatprep.subr.mxu0 0.0
  %1403 = vmatpush1.msra.mxu0 0.0
  %1404 = vmatprep.subr.mxu0 0.0
  %1405 = vmatpush1.msra.mxu0 %v1369
  %1406 = vmatprep.subr.mxu0 0.0
  %1407 = vmatpush2.msra.mxu0 0.0
  %1408 = vmatprep.subr.mxu0 0.0
  %1409 = vmatpush2.msra.mxu0 0.0
  %1410 = vmatprep.subr.mxu0 0.0
  %1411 = vmatpush2.msra.mxu0 0.0
  %1412 = vmatprep.subr.mxu0 0.0
  %1413 = vmatpush2.msra.mxu0 0.0
  %1414 = vmatprep.subr.mxu0 0.0
  %1415 = vmatpush2.msra.mxu0 0.0
  %1416 = vmatprep.subr.mxu0 0.0
  %1417 = vmatpush2.msra.mxu0 0.0
  %1418 = vmatprep.subr.mxu0 0.0
  %1419 = vmatpush2.msra.mxu0 0.0
  %1420 = vmatprep.subr.mxu0 0.0
  %1421 = vmatpush2.msra.mxu0 0.0
  %1422 = vmatprep.subr.mxu0 0.0
  %1423 = vmatpush2.msra.mxu0 0.0
  %1424 = vmatprep.subr.mxu0 0.0
  %1425 = vmatpush2.msra.mxu0 0.0
  %1426 = vmatprep.subr.mxu0 0.0
  %1427 = vmatpush2.msra.mxu0 0.0
  %1428 = vmatprep.subr.mxu0 0.0
  %1429 = vmatpush2.msra.mxu0 0.0
  %1430 = vmatprep.subr.mxu0 0.0
  %1431 = vmatpush2.msra.mxu0 0.0
  %1432 = vmatprep.subr.mxu0 0.0
  %1433 = vmatpush2.msra.mxu0 0.0
  %1434 = vmatprep.subr.mxu0 0.0
  %1435 = vmatpush2.msra.mxu0 0.0
  %1436 = vmatprep.subr.mxu0 0.0
  %1437 = vmatpush2.msra.mxu0 0.0
  %1438 = vmatprep.mubr.f32.mxu0 0.0
  %1439 = vmatmul.mubr.f32.gmra.mxu0 %v1372
  %v1440 = vpop.f32.mrf.mxu0
  %v1441 = vadd.f32 0.0, %v1440
  %v1442 = vpop.f32.mrf.mxu0
  %1443 = vdwg.mxu0
  %1444 = vrot.lane.b32.xlu0 %v224, 64
  %v1445 = vpop.permute.xlu0 %1444
  %v1448 = vsel %vm229, %v986, 0
  %1450 = vmatprep.subr.mxu0 0.0
  %1451 = vmatpush1.msra.mxu0 0.0
  %1452 = vmatprep.subr.mxu0 0.0
  %1453 = vmatpush1.msra.mxu0 0.0
  %1454 = vmatprep.subr.mxu0 0.0
  %1455 = vmatpush1.msra.mxu0 0.0
  %1456 = vmatprep.subr.mxu0 0.0
  %1457 = vmatpush1.msra.mxu0 0.0
  %1458 = vmatprep.subr.mxu0 0.0
  %1459 = vmatpush1.msra.mxu0 0.0
  %1460 = vmatprep.subr.mxu0 0.0
  %1461 = vmatpush1.msra.mxu0 0.0
  %1462 = vmatprep.subr.mxu0 0.0
  %1463 = vmatpush1.msra.mxu0 0.0
  %1464 = vmatprep.subr.mxu0 0.0
  %1465 = vmatpush1.msra.mxu0 0.0
  %1466 = vmatprep.subr.mxu0 0.0
  %1467 = vmatpush1.msra.mxu0 0.0
  %1468 = vmatprep.subr.mxu0 0.0
  %1469 = vmatpush1.msra.mxu0 0.0
  %1470 = vmatprep.subr.mxu0 0.0
  %1471 = vmatpush1.msra.mxu0 0.0
  %1472 = vmatprep.subr.mxu0 0.0
  %1473 = vmatpush1.msra.mxu0 0.0
  %1474 = vmatprep.subr.mxu0 0.0
  %1475 = vmatpush1.msra.mxu0 0.0
  %1476 = vmatprep.subr.mxu0 0.0
  %1477 = vmatpush1.msra.mxu0 0.0
  %1478 = vmatprep.subr.mxu0 0.0
  %1479 = vmatpush1.msra.mxu0 0.0
  %1480 = vmatprep.subr.mxu0 0.0
  %1481 = vmatpush1.msra.mxu0 %v1445
  %1482 = vmatprep.subr.mxu0 0.0
  %1483 = vmatpush2.msra.mxu0 0.0
  %1484 = vmatprep.subr.mxu0 0.0
  %1485 = vmatpush2.msra.mxu0 0.0
  %1486 = vmatprep.subr.mxu0 0.0
  %1487 = vmatpush2.msra.mxu0 0.0
  %1488 = vmatprep.subr.mxu0 0.0
  %1489 = vmatpush2.msra.mxu0 0.0
  %1490 = vmatprep.subr.mxu0 0.0
  %1491 = vmatpush2.msra.mxu0 0.0
  %1492 = vmatprep.subr.mxu0 0.0
  %1493 = vmatpush2.msra.mxu0 0.0
  %1494 = vmatprep.subr.mxu0 0.0
  %1495 = vmatpush2.msra.mxu0 0.0
  %1496 = vmatprep.subr.mxu0 0.0
  %1497 = vmatpush2.msra.mxu0 0.0
  %1498 = vmatprep.subr.mxu0 0.0
  %1499 = vmatpush2.msra.mxu0 0.0
  %1500 = vmatprep.subr.mxu0 0.0
  %1501 = vmatpush2.msra.mxu0 0.0
  %1502 = vmatprep.subr.mxu0 0.0
  %1503 = vmatpush2.msra.mxu0 0.0
  %1504 = vmatprep.subr.mxu0 0.0
  %1505 = vmatpush2.msra.mxu0 0.0
  %1506 = vmatprep.subr.mxu0 0.0
  %1507 = vmatpush2.msra.mxu0 0.0
  %1508 = vmatprep.subr.mxu0 0.0
  %1509 = vmatpush2.msra.mxu0 0.0
  %1510 = vmatprep.subr.mxu0 0.0
  %1511 = vmatpush2.msra.mxu0 0.0
  %1512 = vmatprep.subr.mxu0 0.0
  %1513 = vmatpush2.msra.mxu0 0.0
  %1514 = vmatprep.mubr.f32.mxu0 0.0
  %1515 = vmatmul.mubr.f32.gmra.mxu0 %v1448
  %v1516 = vpop.f32.mrf.mxu0
  %v1517 = vadd.f32 0.0, %v1516
  %v1518 = vpop.f32.mrf.mxu0
  %1519 = vdwg.mxu0
  %1520 = vrot.lane.b32.xlu0 %v226, 64
  %v1521 = vpop.permute.xlu0 %1520
  %v1524 = vsel %vm229, %v987, 0
  %1526 = vmatprep.subr.mxu0 0.0
  %1527 = vmatpush1.msra.mxu0 0.0
  %1528 = vmatprep.subr.mxu0 0.0
  %1529 = vmatpush1.msra.mxu0 0.0
  %1530 = vmatprep.subr.mxu0 0.0
  %1531 = vmatpush1.msra.mxu0 0.0
  %1532 = vmatprep.subr.mxu0 0.0
  %1533 = vmatpush1.msra.mxu0 0.0
  %1534 = vmatprep.subr.mxu0 0.0
  %1535 = vmatpush1.msra.mxu0 0.0
  %1536 = vmatprep.subr.mxu0 0.0
  %1537 = vmatpush1.msra.mxu0 0.0
  %1538 = vmatprep.subr.mxu0 0.0
  %1539 = vmatpush1.msra.mxu0 0.0
  %1540 = vmatprep.subr.mxu0 0.0
  %1541 = vmatpush1.msra.mxu0 0.0
  %1542 = vmatprep.subr.mxu0 0.0
  %1543 = vmatpush1.msra.mxu0 0.0
  %1544 = vmatprep.subr.mxu0 0.0
  %1545 = vmatpush1.msra.mxu0 0.0
  %1546 = vmatprep.subr.mxu0 0.0
  %1547 = vmatpush1.msra.mxu0 0.0
  %1548 = vmatprep.subr.mxu0 0.0
  %1549 = vmatpush1.msra.mxu0 0.0
  %1550 = vmatprep.subr.mxu0 0.0
  %1551 = vmatpush1.msra.mxu0 0.0
  %1552 = vmatprep.subr.mxu0 0.0
  %1553 = vmatpush1.msra.mxu0 0.0
  %1554 = vmatprep.subr.mxu0 0.0
  %1555 = vmatpush1.msra.mxu0 0.0
  %1556 = vmatprep.subr.mxu0 0.0
  %1557 = vmatpush1.msra.mxu0 %v1521
  %1558 = vmatprep.subr.mxu0 0.0
  %1559 = vmatpush2.msra.mxu0 0.0
  %1560 = vmatprep.subr.mxu0 0.0
  %1561 = vmatpush2.msra.mxu0 0.0
  %1562 = vmatprep.subr.mxu0 0.0
  %1563 = vmatpush2.msra.mxu0 0.0
  %1564 = vmatprep.subr.mxu0 0.0
  %1565 = vmatpush2.msra.mxu0 0.0
  %1566 = vmatprep.subr.mxu0 0.0
  %1567 = vmatpush2.msra.mxu0 0.0
  %1568 = vmatprep.subr.mxu0 0.0
  %1569 = vmatpush2.msra.mxu0 0.0
  %1570 = vmatprep.subr.mxu0 0.0
  %1571 = vmatpush2.msra.mxu0 0.0
  %1572 = vmatprep.subr.mxu0 0.0
  %1573 = vmatpush2.msra.mxu0 0.0
  %1574 = vmatprep.subr.mxu0 0.0
  %1575 = vmatpush2.msra.mxu0 0.0
  %1576 = vmatprep.subr.mxu0 0.0
  %1577 = vmatpush2.msra.mxu0 0.0
  %1578 = vmatprep.subr.mxu0 0.0
  %1579 = vmatpush2.msra.mxu0 0.0
  %1580 = vmatprep.subr.mxu0 0.0
  %1581 = vmatpush2.msra.mxu0 0.0
  %1582 = vmatprep.subr.mxu0 0.0
  %1583 = vmatpush2.msra.mxu0 0.0
  %1584 = vmatprep.subr.mxu0 0.0
  %1585 = vmatpush2.msra.mxu0 0.0
  %1586 = vmatprep.subr.mxu0 0.0
  %1587 = vmatpush2.msra.mxu0 0.0
  %1588 = vmatprep.subr.mxu0 0.0
  %1589 = vmatpush2.msra.mxu0 0.0
  %1590 = vmatprep.mubr.f32.mxu0 0.0
  %1591 = vmatmul.mubr.f32.gmra.mxu0 %v1524
  %v1592 = vpop.f32.mrf.mxu0
  %v1593 = vadd.f32 0.0, %v1592
  %v1594 = vpop.f32.mrf.mxu0
  %1595 = vdwg.mxu0
  %1597 = vrot.lane.b32.xlu0 %v1137, 8
  %v1598 = vpop.permute.xlu0 %1597
  %1601 = vrot.lane.b32.xlu0 %v1213, 16
  %v1602 = vpop.permute.xlu0 %1601
  %1605 = vrot.lane.b32.xlu0 %v1289, 24
  %v1606 = vpop.permute.xlu0 %1605
  %v1608 = vsel %vm229, %v1061, %v1598
  %vm1609 = vcmask 130048
  %v1610 = vsel %vm1609, %v1608, %v1602
  %vm1611 = vcmask 195584
  %v1612 = vsel %vm1611, %v1610, %v1606
  %1614 = vrot.lane.b32.xlu0 %v1441, 8
  %v1615 = vpop.permute.xlu0 %1614
  %1618 = vrot.lane.b32.xlu0 %v1517, 16
  %v1619 = vpop.permute.xlu0 %1618
  %1622 = vrot.lane.b32.xlu0 %v1593, 24
  %v1623 = vpop.permute.xlu0 %1622
  %v1625 = vsel %vm229, %v1365, %v1615
  %v1626 = vsel %vm1609, %v1625, %v1619
  %v1627 = vsel %vm1611, %v1626, %v1623
  %v1628 = vld [vmem:[%s8] sm:$0xff]
  %v1629 = vld [vmem:[%s8 + $0x8] sm:$0xff]
  %v1630 = vld [vmem:[%s8 + $0x10] sm:$0xff]
  %v1631 = vld [vmem:[%s8 + $0x18] sm:$0xff]
  %v1632 = vld [vmem:[%s9] sm:$0x1]
  %v1634 = vlaneseq
  %v1635 = vshrl.u32 %v1634, 7
  %v1636 = vsub.s32 0, %v1635
  %v1637 = vrot.slane %v1632, %v1636
  %v1640 = vsel %vm69, %v1612, 0
  %v1643 = vsel %vm69, %v1627, 0
  %1645 = vmatprep.subr.mxu0 0.0
  %1646 = vmatpush1.msra.mxu0 0.0
  %1647 = vmatprep.subr.mxu0 0.0
  %1648 = vmatpush1.msra.mxu0 0.0
  %1649 = vmatprep.subr.mxu0 0.0
  %1650 = vmatpush1.msra.mxu0 0.0
  %1651 = vmatprep.subr.mxu0 0.0
  %1652 = vmatpush1.msra.mxu0 0.0
  %1653 = vmatprep.subr.mxu0 0.0
  %1654 = vmatpush1.msra.mxu0 0.0
  %1655 = vmatprep.subr.mxu0 0.0
  %1656 = vmatpush1.msra.mxu0 0.0
  %1657 = vmatprep.subr.mxu0 0.0
  %1658 = vmatpush1.msra.mxu0 0.0
  %1659 = vmatprep.subr.mxu0 0.0
  %1660 = vmatpush1.msra.mxu0 0.0
  %1661 = vmatprep.subr.mxu0 0.0
  %1662 = vmatpush1.msra.mxu0 0.0
  %1663 = vmatprep.subr.mxu0 0.0
  %1664 = vmatpush1.msra.mxu0 0.0
  %1665 = vmatprep.subr.mxu0 0.0
  %1666 = vmatpush1.msra.mxu0 0.0
  %1667 = vmatprep.subr.mxu0 0.0
  %1668 = vmatpush1.msra.mxu0 0.0
  %1669 = vmatprep.subr.mxu0 0.0
  %1670 = vmatpush1.msra.mxu0 %v1631
  %1671 = vmatprep.subr.mxu0 0.0
  %1672 = vmatpush1.msra.mxu0 %v1630
  %1673 = vmatprep.subr.mxu0 0.0
  %1674 = vmatpush1.msra.mxu0 %v1629
  %1675 = vmatprep.subr.mxu0 0.0
  %1676 = vmatpush1.msra.mxu0 %v1628
  %1677 = vmatprep.subr.mxu0 0.0
  %1678 = vmatpush2.msra.mxu0 0.0
  %1679 = vmatprep.subr.mxu0 0.0
  %1680 = vmatpush2.msra.mxu0 0.0
  %1681 = vmatprep.subr.mxu0 0.0
  %1682 = vmatpush2.msra.mxu0 0.0
  %1683 = vmatprep.subr.mxu0 0.0
  %1684 = vmatpush2.msra.mxu0 0.0
  %1685 = vmatprep.subr.mxu0 0.0
  %1686 = vmatpush2.msra.mxu0 0.0
  %1687 = vmatprep.subr.mxu0 0.0
  %1688 = vmatpush2.msra.mxu0 0.0
  %1689 = vmatprep.subr.mxu0 0.0
  %1690 = vmatpush2.msra.mxu0 0.0
  %1691 = vmatprep.subr.mxu0 0.0
  %1692 = vmatpush2.msra.mxu0 0.0
  %1693 = vmatprep.subr.mxu0 0.0
  %1694 = vmatpush2.msra.mxu0 0.0
  %1695 = vmatprep.subr.mxu0 0.0
  %1696 = vmatpush2.msra.mxu0 0.0
  %1697 = vmatprep.subr.mxu0 0.0
  %1698 = vmatpush2.msra.mxu0 0.0
  %1699 = vmatprep.subr.mxu0 0.0
  %1700 = vmatpush2.msra.mxu0 0.0
  %1701 = vmatprep.subr.mxu0 0.0
  %1702 = vmatpush2.msra.mxu0 0.0
  %1703 = vmatprep.subr.mxu0 0.0
  %1704 = vmatpush2.msra.mxu0 0.0
  %1705 = vmatprep.subr.mxu0 0.0
  %1706 = vmatpush2.msra.mxu0 0.0
  %1707 = vmatprep.subr.mxu0 0.0
  %1708 = vmatpush2.msra.mxu0 0.0
  %1709 = vmatprep.mubr.f32.mxu0 0.0
  %1710 = vmatmul.mubr.f32.gmra.mxu0 %v1640
  %v1711 = vpop.f32.mrf.mxu0
  %v1712 = vadd.f32 %v1637, %v1711
  %v1713 = vpop.f32.mrf.mxu0
  %1714 = vmatprep.mubr.f32.mxu0 0.0
  %1715 = vmatmul.mubr.f32.gmra.mxu0 %v1643
  %v1716 = vpop.f32.mrf.mxu0
  %v1717 = vadd.f32 %v1637, %v1716
  %v1718 = vpop.f32.mrf.mxu0
  %1719 = vdwg.mxu0
  %v1720 = vadd.f32 %v1712, %v111
  %v1721 = vadd.f32 %v1717, %v112
  %v1722 = vld [vmem:[%s10] sm:$0x1]
  %v1723 = vld [vmem:[%s11] sm:$0x1]
  %v1724 = vsel %vm69, %v1720, 0.0
  %1725 = vadd.xlane.f32.xlu0 %v1724
  %v1726 = vpop.xlane.xlu0 %1725
  %v1727 = vsel %vm69, %v1721, 0.0
  %1728 = vadd.xlane.f32.xlu0 %v1727
  %v1729 = vpop.xlane.xlu0 %1728
  %v1730 = vmul.f32 %v1726, %v76
  %v1731 = vmul.f32 %v1729, %v76
  %v1732 = vsub.f32 %v1720, %v1730
  %v1733 = vsub.f32 %v1721, %v1731
  %v1734 = vmul.f32 %v1732, %v1732
  %v1735 = vmul.f32 %v1733, %v1733
  %v1736 = vsel %vm69, %v1734, 0.0
  %1737 = vadd.xlane.f32.xlu0 %v1736
  %v1738 = vpop.xlane.xlu0 %1737
  %v1739 = vsel %vm69, %v1735, 0.0
  %1740 = vadd.xlane.f32.xlu0 %v1739
  %v1741 = vpop.xlane.xlu0 %1740
  %v1742 = vmul.f32 %v1738, %v76
  %v1743 = vmul.f32 %v1741, %v76
  %v1744 = vadd.f32 %v1742, 1e-12
  %v1745 = vadd.f32 %v1743, 1e-12
  %v1746 = vrsqrt.pop %v1744
  %v1747 = vrsqrt.pop %v1745
  %v1748 = vmul.f32 %v1732, %v1746
  %v1749 = vmul.f32 %v1733, %v1747
  %v1751 = vlaneseq
  %v1752 = vshrl.u32 %v1751, 7
  %v1753 = vsub.s32 0, %v1752
  %v1754 = vrot.slane %v1722, %v1753
  %v1756 = vmul.f32 %v1748, %v1754
  %v1757 = vmul.f32 %v1749, %v1754
  %v1759 = vlaneseq
  %v1760 = vshrl.u32 %v1759, 7
  %v1761 = vsub.s32 0, %v1760
  %v1762 = vrot.slane %v1723, %v1761
  %v1764 = vadd.f32 %v1756, %v1762
  %v1765 = vadd.f32 %v1757, %v1762
  %v1766 = vld [vmem:[%s12] sm:$0xff]
  %v1767 = vld [vmem:[%s12 + $0x8] sm:$0xff]
  %v1768 = vld [vmem:[%s12 + $0x10] sm:$0xff]
  %v1769 = vld [vmem:[%s12 + $0x18] sm:$0xff]
  %v1770 = vld [vmem:[%s13] sm:$0x1]
  %v1772 = vlaneseq
  %v1773 = vshrl.u32 %v1772, 7
  %v1774 = vsub.s32 0, %v1773
  %v1775 = vrot.slane %v1770, %v1774
  %v1778 = vsel %vm69, %v1764, 0
  %v1781 = vsel %vm69, %v1765, 0
  %1783 = vmatprep.subr.mxu0 0.0
  %1784 = vmatpush1.msra.mxu0 0.0
  %1785 = vmatprep.subr.mxu0 0.0
  %1786 = vmatpush1.msra.mxu0 0.0
  %1787 = vmatprep.subr.mxu0 0.0
  %1788 = vmatpush1.msra.mxu0 0.0
  %1789 = vmatprep.subr.mxu0 0.0
  %1790 = vmatpush1.msra.mxu0 0.0
  %1791 = vmatprep.subr.mxu0 0.0
  %1792 = vmatpush1.msra.mxu0 0.0
  %1793 = vmatprep.subr.mxu0 0.0
  %1794 = vmatpush1.msra.mxu0 0.0
  %1795 = vmatprep.subr.mxu0 0.0
  %1796 = vmatpush1.msra.mxu0 0.0
  %1797 = vmatprep.subr.mxu0 0.0
  %1798 = vmatpush1.msra.mxu0 0.0
  %1799 = vmatprep.subr.mxu0 0.0
  %1800 = vmatpush1.msra.mxu0 0.0
  %1801 = vmatprep.subr.mxu0 0.0
  %1802 = vmatpush1.msra.mxu0 0.0
  %1803 = vmatprep.subr.mxu0 0.0
  %1804 = vmatpush1.msra.mxu0 0.0
  %1805 = vmatprep.subr.mxu0 0.0
  %1806 = vmatpush1.msra.mxu0 0.0
  %1807 = vmatprep.subr.mxu0 0.0
  %1808 = vmatpush1.msra.mxu0 %v1769
  %1809 = vmatprep.subr.mxu0 0.0
  %1810 = vmatpush1.msra.mxu0 %v1768
  %1811 = vmatprep.subr.mxu0 0.0
  %1812 = vmatpush1.msra.mxu0 %v1767
  %1813 = vmatprep.subr.mxu0 0.0
  %1814 = vmatpush1.msra.mxu0 %v1766
  %1815 = vmatprep.subr.mxu0 0.0
  %1816 = vmatpush2.msra.mxu0 0.0
  %1817 = vmatprep.subr.mxu0 0.0
  %1818 = vmatpush2.msra.mxu0 0.0
  %1819 = vmatprep.subr.mxu0 0.0
  %1820 = vmatpush2.msra.mxu0 0.0
  %1821 = vmatprep.subr.mxu0 0.0
  %1822 = vmatpush2.msra.mxu0 0.0
  %1823 = vmatprep.subr.mxu0 0.0
  %1824 = vmatpush2.msra.mxu0 0.0
  %1825 = vmatprep.subr.mxu0 0.0
  %1826 = vmatpush2.msra.mxu0 0.0
  %1827 = vmatprep.subr.mxu0 0.0
  %1828 = vmatpush2.msra.mxu0 0.0
  %1829 = vmatprep.subr.mxu0 0.0
  %1830 = vmatpush2.msra.mxu0 0.0
  %1831 = vmatprep.subr.mxu0 0.0
  %1832 = vmatpush2.msra.mxu0 0.0
  %1833 = vmatprep.subr.mxu0 0.0
  %1834 = vmatpush2.msra.mxu0 0.0
  %1835 = vmatprep.subr.mxu0 0.0
  %1836 = vmatpush2.msra.mxu0 0.0
  %1837 = vmatprep.subr.mxu0 0.0
  %1838 = vmatpush2.msra.mxu0 0.0
  %1839 = vmatprep.subr.mxu0 0.0
  %1840 = vmatpush2.msra.mxu0 0.0
  %1841 = vmatprep.subr.mxu0 0.0
  %1842 = vmatpush2.msra.mxu0 0.0
  %1843 = vmatprep.subr.mxu0 0.0
  %1844 = vmatpush2.msra.mxu0 0.0
  %1845 = vmatprep.subr.mxu0 0.0
  %1846 = vmatpush2.msra.mxu0 0.0
  %1847 = vmatprep.mubr.f32.mxu0 0.0
  %1848 = vmatmul.mubr.f32.gmra.mxu0 %v1778
  %v1849 = vpop.f32.mrf.mxu0
  %v1850 = vadd.f32 %v1775, %v1849
  %v1851 = vpop.f32.mrf.mxu0
  %1852 = vmatprep.mubr.f32.mxu0 0.0
  %1853 = vmatmul.mubr.f32.gmra.mxu0 %v1781
  %v1854 = vpop.f32.mrf.mxu0
  %v1855 = vadd.f32 %v1775, %v1854
  %v1856 = vpop.f32.mrf.mxu0
  %1857 = vdwg.mxu0
  %v1858 = vmul.f32 %v1850, 0.5
  %v1859 = vmul.f32 %v1855, 0.5
  %v1860 = vmul.f32 %v1850, 0.044715
  %v1861 = vmul.f32 %v1855, 0.044715
  %v1862 = vmul.f32 %v1860, %v1850
  %v1863 = vmul.f32 %v1861, %v1855
  %v1864 = vmul.f32 %v1862, %v1850
  %v1865 = vmul.f32 %v1863, %v1855
  %v1866 = vadd.f32 %v1850, %v1864
  %v1867 = vadd.f32 %v1855, %v1865
  %v1868 = vmul.f32 %v1866, 0.7978846
  %v1869 = vmul.f32 %v1867, 0.7978846
  %v1870 = vtanh.pop %v1868
  %v1871 = vtanh.pop %v1869
  %v1872 = vadd.f32 %v1870, 1.0
  %v1873 = vadd.f32 %v1871, 1.0
  %v1874 = vmul.f32 %v1858, %v1872
  %v1875 = vmul.f32 %v1859, %v1873
  %v1876 = vld [vmem:[%s14] sm:$0xff]
  %v1877 = vld [vmem:[%s14 + $0x8] sm:$0xff]
  %v1878 = vld [vmem:[%s14 + $0x10] sm:$0xff]
  %v1879 = vld [vmem:[%s14 + $0x18] sm:$0xff]
  %v1880 = vld [vmem:[%s14 + $0x20] sm:$0xff]
  %v1881 = vld [vmem:[%s14 + $0x28] sm:$0xff]
  %v1882 = vld [vmem:[%s14 + $0x30] sm:$0xff]
  %v1883 = vld [vmem:[%s14 + $0x38] sm:$0xff]
  %v1884 = vld [vmem:[%s15] sm:$0x1]
  %v1886 = vlaneseq
  %v1887 = vshrl.u32 %v1886, 7
  %v1888 = vsub.s32 0, %v1887
  %v1889 = vrot.slane %v1884, %v1888
  %vm1891 = vcmask 523264
  %v1893 = vsel %vm1891, %v1874, 0
  %v1896 = vsel %vm1891, %v1875, 0
  %1898 = vmatprep.subr.mxu0 0.0
  %1899 = vmatpush1.msra.mxu0 0.0
  %1900 = vmatprep.subr.mxu0 0.0
  %1901 = vmatpush1.msra.mxu0 0.0
  %1902 = vmatprep.subr.mxu0 0.0
  %1903 = vmatpush1.msra.mxu0 0.0
  %1904 = vmatprep.subr.mxu0 0.0
  %1905 = vmatpush1.msra.mxu0 0.0
  %1906 = vmatprep.subr.mxu0 0.0
  %1907 = vmatpush1.msra.mxu0 0.0
  %1908 = vmatprep.subr.mxu0 0.0
  %1909 = vmatpush1.msra.mxu0 0.0
  %1910 = vmatprep.subr.mxu0 0.0
  %1911 = vmatpush1.msra.mxu0 0.0
  %1912 = vmatprep.subr.mxu0 0.0
  %1913 = vmatpush1.msra.mxu0 0.0
  %1914 = vmatprep.subr.mxu0 0.0
  %1915 = vmatpush1.msra.mxu0 %v1883
  %1916 = vmatprep.subr.mxu0 0.0
  %1917 = vmatpush1.msra.mxu0 %v1882
  %1918 = vmatprep.subr.mxu0 0.0
  %1919 = vmatpush1.msra.mxu0 %v1881
  %1920 = vmatprep.subr.mxu0 0.0
  %1921 = vmatpush1.msra.mxu0 %v1880
  %1922 = vmatprep.subr.mxu0 0.0
  %1923 = vmatpush1.msra.mxu0 %v1879
  %1924 = vmatprep.subr.mxu0 0.0
  %1925 = vmatpush1.msra.mxu0 %v1878
  %1926 = vmatprep.subr.mxu0 0.0
  %1927 = vmatpush1.msra.mxu0 %v1877
  %1928 = vmatprep.subr.mxu0 0.0
  %1929 = vmatpush1.msra.mxu0 %v1876
  %1930 = vmatprep.subr.mxu0 0.0
  %1931 = vmatpush2.msra.mxu0 0.0
  %1932 = vmatprep.subr.mxu0 0.0
  %1933 = vmatpush2.msra.mxu0 0.0
  %1934 = vmatprep.subr.mxu0 0.0
  %1935 = vmatpush2.msra.mxu0 0.0
  %1936 = vmatprep.subr.mxu0 0.0
  %1937 = vmatpush2.msra.mxu0 0.0
  %1938 = vmatprep.subr.mxu0 0.0
  %1939 = vmatpush2.msra.mxu0 0.0
  %1940 = vmatprep.subr.mxu0 0.0
  %1941 = vmatpush2.msra.mxu0 0.0
  %1942 = vmatprep.subr.mxu0 0.0
  %1943 = vmatpush2.msra.mxu0 0.0
  %1944 = vmatprep.subr.mxu0 0.0
  %1945 = vmatpush2.msra.mxu0 0.0
  %1946 = vmatprep.subr.mxu0 0.0
  %1947 = vmatpush2.msra.mxu0 0.0
  %1948 = vmatprep.subr.mxu0 0.0
  %1949 = vmatpush2.msra.mxu0 0.0
  %1950 = vmatprep.subr.mxu0 0.0
  %1951 = vmatpush2.msra.mxu0 0.0
  %1952 = vmatprep.subr.mxu0 0.0
  %1953 = vmatpush2.msra.mxu0 0.0
  %1954 = vmatprep.subr.mxu0 0.0
  %1955 = vmatpush2.msra.mxu0 0.0
  %1956 = vmatprep.subr.mxu0 0.0
  %1957 = vmatpush2.msra.mxu0 0.0
  %1958 = vmatprep.subr.mxu0 0.0
  %1959 = vmatpush2.msra.mxu0 0.0
  %1960 = vmatprep.subr.mxu0 0.0
  %1961 = vmatpush2.msra.mxu0 0.0
  %1962 = vmatprep.mubr.f32.mxu0 0.0
  %1963 = vmatmul.mubr.f32.gmra.mxu0 %v1893
  %v1964 = vpop.f32.mrf.mxu0
  %v1965 = vadd.f32 %v1889, %v1964
  %v1966 = vpop.f32.mrf.mxu0
  %1967 = vmatprep.mubr.f32.mxu0 0.0
  %1968 = vmatmul.mubr.f32.gmra.mxu0 %v1896
  %v1969 = vpop.f32.mrf.mxu0
  %v1970 = vadd.f32 %v1889, %v1969
  %v1971 = vpop.f32.mrf.mxu0
  %1972 = vdwg.mxu0
  %v1973 = vadd.f32 %v1965, %v1764
  %v1974 = vadd.f32 %v1970, %v1765
  %v1975 = vld [vmem:[%s16] sm:$0x1]
  %v1976 = vld [vmem:[%s17] sm:$0x1]
  %v1977 = vsel %vm69, %v1973, 0.0
  %1978 = vadd.xlane.f32.xlu0 %v1977
  %v1979 = vpop.xlane.xlu0 %1978
  %v1980 = vsel %vm69, %v1974, 0.0
  %1981 = vadd.xlane.f32.xlu0 %v1980
  %v1982 = vpop.xlane.xlu0 %1981
  %v1983 = vmul.f32 %v1979, %v76
  %v1984 = vmul.f32 %v1982, %v76
  %v1985 = vsub.f32 %v1973, %v1983
  %v1986 = vsub.f32 %v1974, %v1984
  %v1987 = vmul.f32 %v1985, %v1985
  %v1988 = vmul.f32 %v1986, %v1986
  %v1989 = vsel %vm69, %v1987, 0.0
  %1990 = vadd.xlane.f32.xlu0 %v1989
  %v1991 = vpop.xlane.xlu0 %1990
  %v1992 = vsel %vm69, %v1988, 0.0
  %1993 = vadd.xlane.f32.xlu0 %v1992
  %v1994 = vpop.xlane.xlu0 %1993
  %v1995 = vmul.f32 %v1991, %v76
  %v1996 = vmul.f32 %v1994, %v76
  %v1997 = vadd.f32 %v1995, 1e-12
  %v1998 = vadd.f32 %v1996, 1e-12
  %v1999 = vrsqrt.pop %v1997
  %v2000 = vrsqrt.pop %v1998
  %v2001 = vmul.f32 %v1985, %v1999
  %v2002 = vmul.f32 %v1986, %v2000
  %v2004 = vlaneseq
  %v2005 = vshrl.u32 %v2004, 7
  %v2006 = vsub.s32 0, %v2005
  %v2007 = vrot.slane %v1975, %v2006
  %v2009 = vmul.f32 %v2001, %v2007
  %v2010 = vmul.f32 %v2002, %v2007
  %v2012 = vlaneseq
  %v2013 = vshrl.u32 %v2012, 7
  %v2014 = vsub.s32 0, %v2013
  %v2015 = vrot.slane %v1976, %v2014
  %v2017 = vadd.f32 %v2009, %v2015
  %v2018 = vadd.f32 %v2010, %v2015
  %s2019 = scalar_lea.vmem %s6, 32
  %v2020 = vld [vmem:[%s2019] sm:$0xff]
  %v2021 = vld [vmem:[%s2019 + $0x8] sm:$0xff]
  %v2022 = vld [vmem:[%s2019 + $0x10] sm:$0xff]
  %v2023 = vld [vmem:[%s2019 + $0x18] sm:$0xff]
  %s2024 = scalar_lea.vmem %s7, 1
  %v2025 = vld [vmem:[%s2024] sm:$0x1]
  %v2027 = vlaneseq
  %v2028 = vshrl.u32 %v2027, 7
  %v2029 = vsub.s32 0, %v2028
  %v2030 = vrot.slane %v2025, %v2029
  %v2033 = vsel %vm69, %v2017, 0
  %v2036 = vsel %vm69, %v2018, 0
  %2038 = vmatprep.subr.mxu0 0.0
  %2039 = vmatpush1.msra.mxu0 0.0
  %2040 = vmatprep.subr.mxu0 0.0
  %2041 = vmatpush1.msra.mxu0 0.0
  %2042 = vmatprep.subr.mxu0 0.0
  %2043 = vmatpush1.msra.mxu0 0.0
  %2044 = vmatprep.subr.mxu0 0.0
  %2045 = vmatpush1.msra.mxu0 0.0
  %2046 = vmatprep.subr.mxu0 0.0
  %2047 = vmatpush1.msra.mxu0 0.0
  %2048 = vmatprep.subr.mxu0 0.0
  %2049 = vmatpush1.msra.mxu0 0.0
  %2050 = vmatprep.subr.mxu0 0.0
  %2051 = vmatpush1.msra.mxu0 0.0
  %2052 = vmatprep.subr.mxu0 0.0
  %2053 = vmatpush1.msra.mxu0 0.0
  %2054 = vmatprep.subr.mxu0 0.0
  %2055 = vmatpush1.msra.mxu0 0.0
  %2056 = vmatprep.subr.mxu0 0.0
  %2057 = vmatpush1.msra.mxu0 0.0
  %2058 = vmatprep.subr.mxu0 0.0
  %2059 = vmatpush1.msra.mxu0 0.0
  %2060 = vmatprep.subr.mxu0 0.0
  %2061 = vmatpush1.msra.mxu0 0.0
  %2062 = vmatprep.subr.mxu0 0.0
  %2063 = vmatpush1.msra.mxu0 %v2023
  %2064 = vmatprep.subr.mxu0 0.0
  %2065 = vmatpush1.msra.mxu0 %v2022
  %2066 = vmatprep.subr.mxu0 0.0
  %2067 = vmatpush1.msra.mxu0 %v2021
  %2068 = vmatprep.subr.mxu0 0.0
  %2069 = vmatpush1.msra.mxu0 %v2020
  %2070 = vmatprep.subr.mxu0 0.0
  %2071 = vmatpush2.msra.mxu0 0.0
  %2072 = vmatprep.subr.mxu0 0.0
  %2073 = vmatpush2.msra.mxu0 0.0
  %2074 = vmatprep.subr.mxu0 0.0
  %2075 = vmatpush2.msra.mxu0 0.0
  %2076 = vmatprep.subr.mxu0 0.0
  %2077 = vmatpush2.msra.mxu0 0.0
  %2078 = vmatprep.subr.mxu0 0.0
  %2079 = vmatpush2.msra.mxu0 0.0
  %2080 = vmatprep.subr.mxu0 0.0
  %2081 = vmatpush2.msra.mxu0 0.0
  %2082 = vmatprep.subr.mxu0 0.0
  %2083 = vmatpush2.msra.mxu0 0.0
  %2084 = vmatprep.subr.mxu0 0.0
  %2085 = vmatpush2.msra.mxu0 0.0
  %2086 = vmatprep.subr.mxu0 0.0
  %2087 = vmatpush2.msra.mxu0 0.0
  %2088 = vmatprep.subr.mxu0 0.0
  %2089 = vmatpush2.msra.mxu0 0.0
  %2090 = vmatprep.subr.mxu0 0.0
  %2091 = vmatpush2.msra.mxu0 0.0
  %2092 = vmatprep.subr.mxu0 0.0
  %2093 = vmatpush2.msra.mxu0 0.0
  %2094 = vmatprep.subr.mxu0 0.0
  %2095 = vmatpush2.msra.mxu0 0.0
  %2096 = vmatprep.subr.mxu0 0.0
  %2097 = vmatpush2.msra.mxu0 0.0
  %2098 = vmatprep.subr.mxu0 0.0
  %2099 = vmatpush2.msra.mxu0 0.0
  %2100 = vmatprep.subr.mxu0 0.0
  %2101 = vmatpush2.msra.mxu0 0.0
  %2102 = vmatprep.mubr.f32.mxu0 0.0
  %2103 = vmatmul.mubr.f32.gmra.mxu0 %v2033
  %v2104 = vpop.f32.mrf.mxu0
  %v2105 = vadd.f32 %v2030, %v2104
  %v2106 = vpop.f32.mrf.mxu0
  %2107 = vmatprep.mubr.f32.mxu0 0.0
  %2108 = vmatmul.mubr.f32.gmra.mxu0 %v2036
  %v2109 = vpop.f32.mrf.mxu0
  %v2110 = vadd.f32 %v2030, %v2109
  %v2111 = vpop.f32.mrf.mxu0
  %2112 = vdwg.mxu0
  %2114 = vrot.lane.b32.xlu0 %v2105, 120
  %v2115 = vpop.permute.xlu0 %2114
  %2116 = vrot.lane.b32.xlu0 %v2105, 112
  %v2117 = vpop.permute.xlu0 %2116
  %2118 = vrot.lane.b32.xlu0 %v2105, 104
  %v2119 = vpop.permute.xlu0 %2118
  %2121 = vrot.lane.b32.xlu0 %v2110, 120
  %v2122 = vpop.permute.xlu0 %2121
  %2123 = vrot.lane.b32.xlu0 %v2110, 112
  %v2124 = vpop.permute.xlu0 %2123
  %2125 = vrot.lane.b32.xlu0 %v2110, 104
  %v2126 = vpop.permute.xlu0 %2125
  %2127 = vrot.lane.b32.xlu0 %v2105, 96
  %v2128 = vpop.permute.xlu0 %2127
  %v2129 = vsel %vm229, %v2105, 0
  %v2131 = vsel %vm229, %v2128, 0
  %2133 = vmatprep.subr.mxu0 0.0
  %2134 = vmatpush1.xpose.msra.mxu0 0.0
  %2135 = vmatprep.subr.mxu0 0.0
  %2136 = vmatpush1.xpose.msra.mxu0 0.0
  %2137 = vmatprep.subr.mxu0 0.0
  %2138 = vmatpush1.xpose.msra.mxu0 0.0
  %2139 = vmatprep.subr.mxu0 0.0
  %2140 = vmatpush1.xpose.msra.mxu0 0.0
  %2141 = vmatprep.subr.mxu0 0.0
  %2142 = vmatpush1.xpose.msra.mxu0 0.0
  %2143 = vmatprep.subr.mxu0 0.0
  %2144 = vmatpush1.xpose.msra.mxu0 0.0
  %2145 = vmatprep.subr.mxu0 0.0
  %2146 = vmatpush1.xpose.msra.mxu0 0.0
  %2147 = vmatprep.subr.mxu0 0.0
  %2148 = vmatpush1.xpose.msra.mxu0 0.0
  %2149 = vmatprep.subr.mxu0 0.0
  %2150 = vmatpush1.xpose.msra.mxu0 0.0
  %2151 = vmatprep.subr.mxu0 0.0
  %2152 = vmatpush1.xpose.msra.mxu0 0.0
  %2153 = vmatprep.subr.mxu0 0.0
  %2154 = vmatpush1.xpose.msra.mxu0 0.0
  %2155 = vmatprep.subr.mxu0 0.0
  %2156 = vmatpush1.xpose.msra.mxu0 0.0
  %2157 = vmatprep.subr.mxu0 0.0
  %2158 = vmatpush1.xpose.msra.mxu0 0.0
  %2159 = vmatprep.subr.mxu0 0.0
  %2160 = vmatpush1.xpose.msra.mxu0 0.0
  %2161 = vmatprep.subr.mxu0 0.0
  %2162 = vmatpush1.xpose.msra.mxu0 0.0
  %2163 = vmatprep.subr.mxu0 0.0
  %2164 = vmatpush1.xpose.msra.mxu0 %v2131
  %2165 = vmatprep.subr.mxu0 0.0
  %2166 = vmatpush2.xpose.msra.mxu0 0.0
  %2167 = vmatprep.subr.mxu0 0.0
  %2168 = vmatpush2.xpose.msra.mxu0 0.0
  %2169 = vmatprep.subr.mxu0 0.0
  %2170 = vmatpush2.xpose.msra.mxu0 0.0
  %2171 = vmatprep.subr.mxu0 0.0
  %2172 = vmatpush2.xpose.msra.mxu0 0.0
  %2173 = vmatprep.subr.mxu0 0.0
  %2174 = vmatpush2.xpose.msra.mxu0 0.0
  %2175 = vmatprep.subr.mxu0 0.0
  %2176 = vmatpush2.xpose.msra.mxu0 0.0
  %2177 = vmatprep.subr.mxu0 0.0
  %2178 = vmatpush2.xpose.msra.mxu0 0.0
  %2179 = vmatprep.subr.mxu0 0.0
  %2180 = vmatpush2.xpose.msra.mxu0 0.0
  %2181 = vmatprep.subr.mxu0 0.0
  %2182 = vmatpush2.xpose.msra.mxu0 0.0
  %2183 = vmatprep.subr.mxu0 0.0
  %2184 = vmatpush2.xpose.msra.mxu0 0.0
  %2185 = vmatprep.subr.mxu0 0.0
  %2186 = vmatpush2.xpose.msra.mxu0 0.0
  %2187 = vmatprep.subr.mxu0 0.0
  %2188 = vmatpush2.xpose.msra.mxu0 0.0
  %2189 = vmatprep.subr.mxu0 0.0
  %2190 = vmatpush2.xpose.msra.mxu0 0.0
  %2191 = vmatprep.subr.mxu0 0.0
  %2192 = vmatpush2.xpose.msra.mxu0 0.0
  %2193 = vmatprep.subr.mxu0 0.0
  %2194 = vmatpush2.xpose.msra.mxu0 0.0
  %2195 = vmatprep.subr.mxu0 0.0
  %2196 = vmatpush2.xpose.msra.mxu0 0.0
  %2197 = vmatprep.mubr.f32.mxu0 0.0
  %2198 = vmatmul.mubr.f32.gmra.mxu0 %v2129
  %v2199 = vpop.f32.mrf.mxu0
  %v2200 = vadd.f32 0.0, %v2199
  %v2201 = vpop.f32.mrf.mxu0
  %2202 = vdwg.mxu0
  %2203 = vrot.lane.b32.xlu0 %v2115, 96
  %v2204 = vpop.permute.xlu0 %2203
  %v2205 = vsel %vm229, %v2115, 0
  %v2207 = vsel %vm229, %v2204, 0
  %2209 = vmatprep.subr.mxu0 0.0
  %2210 = vmatpush1.xpose.msra.mxu0 0.0
  %2211 = vmatprep.subr.mxu0 0.0
  %2212 = vmatpush1.xpose.msra.mxu0 0.0
  %2213 = vmatprep.subr.mxu0 0.0
  %2214 = vmatpush1.xpose.msra.mxu0 0.0
  %2215 = vmatprep.subr.mxu0 0.0
  %2216 = vmatpush1.xpose.msra.mxu0 0.0
  %2217 = vmatprep.subr.mxu0 0.0
  %2218 = vmatpush1.xpose.msra.mxu0 0.0
  %2219 = vmatprep.subr.mxu0 0.0
  %2220 = vmatpush1.xpose.msra.mxu0 0.0
  %2221 = vmatprep.subr.mxu0 0.0
  %2222 = vmatpush1.xpose.msra.mxu0 0.0
  %2223 = vmatprep.subr.mxu0 0.0
  %2224 = vmatpush1.xpose.msra.mxu0 0.0
  %2225 = vmatprep.subr.mxu0 0.0
  %2226 = vmatpush1.xpose.msra.mxu0 0.0
  %2227 = vmatprep.subr.mxu0 0.0
  %2228 = vmatpush1.xpose.msra.mxu0 0.0
  %2229 = vmatprep.subr.mxu0 0.0
  %2230 = vmatpush1.xpose.msra.mxu0 0.0
  %2231 = vmatprep.subr.mxu0 0.0
  %2232 = vmatpush1.xpose.msra.mxu0 0.0
  %2233 = vmatprep.subr.mxu0 0.0
  %2234 = vmatpush1.xpose.msra.mxu0 0.0
  %2235 = vmatprep.subr.mxu0 0.0
  %2236 = vmatpush1.xpose.msra.mxu0 0.0
  %2237 = vmatprep.subr.mxu0 0.0
  %2238 = vmatpush1.xpose.msra.mxu0 0.0
  %2239 = vmatprep.subr.mxu0 0.0
  %2240 = vmatpush1.xpose.msra.mxu0 %v2207
  %2241 = vmatprep.subr.mxu0 0.0
  %2242 = vmatpush2.xpose.msra.mxu0 0.0
  %2243 = vmatprep.subr.mxu0 0.0
  %2244 = vmatpush2.xpose.msra.mxu0 0.0
  %2245 = vmatprep.subr.mxu0 0.0
  %2246 = vmatpush2.xpose.msra.mxu0 0.0
  %2247 = vmatprep.subr.mxu0 0.0
  %2248 = vmatpush2.xpose.msra.mxu0 0.0
  %2249 = vmatprep.subr.mxu0 0.0
  %2250 = vmatpush2.xpose.msra.mxu0 0.0
  %2251 = vmatprep.subr.mxu0 0.0
  %2252 = vmatpush2.xpose.msra.mxu0 0.0
  %2253 = vmatprep.subr.mxu0 0.0
  %2254 = vmatpush2.xpose.msra.mxu0 0.0
  %2255 = vmatprep.subr.mxu0 0.0
  %2256 = vmatpush2.xpose.msra.mxu0 0.0
  %2257 = vmatprep.subr.mxu0 0.0
  %2258 = vmatpush2.xpose.msra.mxu0 0.0
  %2259 = vmatprep.subr.mxu0 0.0
  %2260 = vmatpush2.xpose.msra.mxu0 0.0
  %2261 = vmatprep.subr.mxu0 0.0
  %2262 = vmatpush2.xpose.msra.mxu0 0.0
  %2263 = vmatprep.subr.mxu0 0.0
  %2264 = vmatpush2.xpose.msra.mxu0 0.0
  %2265 = vmatprep.subr.mxu0 0.0
  %2266 = vmatpush2.xpose.msra.mxu0 0.0
  %2267 = vmatprep.subr.mxu0 0.0
  %2268 = vmatpush2.xpose.msra.mxu0 0.0
  %2269 = vmatprep.subr.mxu0 0.0
  %2270 = vmatpush2.xpose.msra.mxu0 0.0
  %2271 = vmatprep.subr.mxu0 0.0
  %2272 = vmatpush2.xpose.msra.mxu0 0.0
  %2273 = vmatprep.mubr.f32.mxu0 0.0
  %2274 = vmatmul.mubr.f32.gmra.mxu0 %v2205
  %v2275 = vpop.f32.mrf.mxu0
  %v2276 = vadd.f32 0.0, %v2275
  %v2277 = vpop.f32.mrf.mxu0
  %2278 = vdwg.mxu0
  %2279 = vrot.lane.b32.xlu0 %v2117, 96
  %v2280 = vpop.permute.xlu0 %2279
  %v2281 = vsel %vm229, %v2117, 0
  %v2283 = vsel %vm229, %v2280, 0
  %2285 = vmatprep.subr.mxu0 0.0
  %2286 = vmatpush1.xpose.msra.mxu0 0.0
  %2287 = vmatprep.subr.mxu0 0.0
  %2288 = vmatpush1.xpose.msra.mxu0 0.0
  %2289 = vmatprep.subr.mxu0 0.0
  %2290 = vmatpush1.xpose.msra.mxu0 0.0
  %2291 = vmatprep.subr.mxu0 0.0
  %2292 = vmatpush1.xpose.msra.mxu0 0.0
  %2293 = vmatprep.subr.mxu0 0.0
  %2294 = vmatpush1.xpose.msra.mxu0 0.0
  %2295 = vmatprep.subr.mxu0 0.0
  %2296 = vmatpush1.xpose.msra.mxu0 0.0
  %2297 = vmatprep.subr.mxu0 0.0
  %2298 = vmatpush1.xpose.msra.mxu0 0.0
  %2299 = vmatprep.subr.mxu0 0.0
  %2300 = vmatpush1.xpose.msra.mxu0 0.0
  %2301 = vmatprep.subr.mxu0 0.0
  %2302 = vmatpush1.xpose.msra.mxu0 0.0
  %2303 = vmatprep.subr.mxu0 0.0
  %2304 = vmatpush1.xpose.msra.mxu0 0.0
  %2305 = vmatprep.subr.mxu0 0.0
  %2306 = vmatpush1.xpose.msra.mxu0 0.0
  %2307 = vmatprep.subr.mxu0 0.0
  %2308 = vmatpush1.xpose.msra.mxu0 0.0
  %2309 = vmatprep.subr.mxu0 0.0
  %2310 = vmatpush1.xpose.msra.mxu0 0.0
  %2311 = vmatprep.subr.mxu0 0.0
  %2312 = vmatpush1.xpose.msra.mxu0 0.0
  %2313 = vmatprep.subr.mxu0 0.0
  %2314 = vmatpush1.xpose.msra.mxu0 0.0
  %2315 = vmatprep.subr.mxu0 0.0
  %2316 = vmatpush1.xpose.msra.mxu0 %v2283
  %2317 = vmatprep.subr.mxu0 0.0
  %2318 = vmatpush2.xpose.msra.mxu0 0.0
  %2319 = vmatprep.subr.mxu0 0.0
  %2320 = vmatpush2.xpose.msra.mxu0 0.0
  %2321 = vmatprep.subr.mxu0 0.0
  %2322 = vmatpush2.xpose.msra.mxu0 0.0
  %2323 = vmatprep.subr.mxu0 0.0
  %2324 = vmatpush2.xpose.msra.mxu0 0.0
  %2325 = vmatprep.subr.mxu0 0.0
  %2326 = vmatpush2.xpose.msra.mxu0 0.0
  %2327 = vmatprep.subr.mxu0 0.0
  %2328 = vmatpush2.xpose.msra.mxu0 0.0
  %2329 = vmatprep.subr.mxu0 0.0
  %2330 = vmatpush2.xpose.msra.mxu0 0.0
  %2331 = vmatprep.subr.mxu0 0.0
  %2332 = vmatpush2.xpose.msra.mxu0 0.0
  %2333 = vmatprep.subr.mxu0 0.0
  %2334 = vmatpush2.xpose.msra.mxu0 0.0
  %2335 = vmatprep.subr.mxu0 0.0
  %2336 = vmatpush2.xpose.msra.mxu0 0.0
  %2337 = vmatprep.subr.mxu0 0.0
  %2338 = vmatpush2.xpose.msra.mxu0 0.0
  %2339 = vmatprep.subr.mxu0 0.0
  %2340 = vmatpush2.xpose.msra.mxu0 0.0
  %2341 = vmatprep.subr.mxu0 0.0
  %2342 = vmatpush2.xpose.msra.mxu0 0.0
  %2343 = vmatprep.subr.mxu0 0.0
  %2344 = vmatpush2.xpose.msra.mxu0 0.0
  %2345 = vmatprep.subr.mxu0 0.0
  %2346 = vmatpush2.xpose.msra.mxu0 0.0
  %2347 = vmatprep.subr.mxu0 0.0
  %2348 = vmatpush2.xpose.msra.mxu0 0.0
  %2349 = vmatprep.mubr.f32.mxu0 0.0
  %2350 = vmatmul.mubr.f32.gmra.mxu0 %v2281
  %v2351 = vpop.f32.mrf.mxu0
  %v2352 = vadd.f32 0.0, %v2351
  %v2353 = vpop.f32.mrf.mxu0
  %2354 = vdwg.mxu0
  %2355 = vrot.lane.b32.xlu0 %v2119, 96
  %v2356 = vpop.permute.xlu0 %2355
  %v2357 = vsel %vm229, %v2119, 0
  %v2359 = vsel %vm229, %v2356, 0
  %2361 = vmatprep.subr.mxu0 0.0
  %2362 = vmatpush1.xpose.msra.mxu0 0.0
  %2363 = vmatprep.subr.mxu0 0.0
  %2364 = vmatpush1.xpose.msra.mxu0 0.0
  %2365 = vmatprep.subr.mxu0 0.0
  %2366 = vmatpush1.xpose.msra.mxu0 0.0
  %2367 = vmatprep.subr.mxu0 0.0
  %2368 = vmatpush1.xpose.msra.mxu0 0.0
  %2369 = vmatprep.subr.mxu0 0.0
  %2370 = vmatpush1.xpose.msra.mxu0 0.0
  %2371 = vmatprep.subr.mxu0 0.0
  %2372 = vmatpush1.xpose.msra.mxu0 0.0
  %2373 = vmatprep.subr.mxu0 0.0
  %2374 = vmatpush1.xpose.msra.mxu0 0.0
  %2375 = vmatprep.subr.mxu0 0.0
  %2376 = vmatpush1.xpose.msra.mxu0 0.0
  %2377 = vmatprep.subr.mxu0 0.0
  %2378 = vmatpush1.xpose.msra.mxu0 0.0
  %2379 = vmatprep.subr.mxu0 0.0
  %2380 = vmatpush1.xpose.msra.mxu0 0.0
  %2381 = vmatprep.subr.mxu0 0.0
  %2382 = vmatpush1.xpose.msra.mxu0 0.0
  %2383 = vmatprep.subr.mxu0 0.0
  %2384 = vmatpush1.xpose.msra.mxu0 0.0
  %2385 = vmatprep.subr.mxu0 0.0
  %2386 = vmatpush1.xpose.msra.mxu0 0.0
  %2387 = vmatprep.subr.mxu0 0.0
  %2388 = vmatpush1.xpose.msra.mxu0 0.0
  %2389 = vmatprep.subr.mxu0 0.0
  %2390 = vmatpush1.xpose.msra.mxu0 0.0
  %2391 = vmatprep.subr.mxu0 0.0
  %2392 = vmatpush1.xpose.msra.mxu0 %v2359
  %2393 = vmatprep.subr.mxu0 0.0
  %2394 = vmatpush2.xpose.msra.mxu0 0.0
  %2395 = vmatprep.subr.mxu0 0.0
  %2396 = vmatpush2.xpose.msra.mxu0 0.0
  %2397 = vmatprep.subr.mxu0 0.0
  %2398 = vmatpush2.xpose.msra.mxu0 0.0
  %2399 = vmatprep.subr.mxu0 0.0
  %2400 = vmatpush2.xpose.msra.mxu0 0.0
  %2401 = vmatprep.subr.mxu0 0.0
  %2402 = vmatpush2.xpose.msra.mxu0 0.0
  %2403 = vmatprep.subr.mxu0 0.0
  %2404 = vmatpush2.xpose.msra.mxu0 0.0
  %2405 = vmatprep.subr.mxu0 0.0
  %2406 = vmatpush2.xpose.msra.mxu0 0.0
  %2407 = vmatprep.subr.mxu0 0.0
  %2408 = vmatpush2.xpose.msra.mxu0 0.0
  %2409 = vmatprep.subr.mxu0 0.0
  %2410 = vmatpush2.xpose.msra.mxu0 0.0
  %2411 = vmatprep.subr.mxu0 0.0
  %2412 = vmatpush2.xpose.msra.mxu0 0.0
  %2413 = vmatprep.subr.mxu0 0.0
  %2414 = vmatpush2.xpose.msra.mxu0 0.0
  %2415 = vmatprep.subr.mxu0 0.0
  %2416 = vmatpush2.xpose.msra.mxu0 0.0
  %2417 = vmatprep.subr.mxu0 0.0
  %2418 = vmatpush2.xpose.msra.mxu0 0.0
  %2419 = vmatprep.subr.mxu0 0.0
  %2420 = vmatpush2.xpose.msra.mxu0 0.0
  %2421 = vmatprep.subr.mxu0 0.0
  %2422 = vmatpush2.xpose.msra.mxu0 0.0
  %2423 = vmatprep.subr.mxu0 0.0
  %2424 = vmatpush2.xpose.msra.mxu0 0.0
  %2425 = vmatprep.mubr.f32.mxu0 0.0
  %2426 = vmatmul.mubr.f32.gmra.mxu0 %v2357
  %v2427 = vpop.f32.mrf.mxu0
  %v2428 = vadd.f32 0.0, %v2427
  %v2429 = vpop.f32.mrf.mxu0
  %2430 = vdwg.mxu0
  %2431 = vrot.lane.b32.xlu0 %v2110, 96
  %v2432 = vpop.permute.xlu0 %2431
  %v2433 = vsel %vm229, %v2110, 0
  %v2435 = vsel %vm229, %v2432, 0
  %2437 = vmatprep.subr.mxu0 0.0
  %2438 = vmatpush1.xpose.msra.mxu0 0.0
  %2439 = vmatprep.subr.mxu0 0.0
  %2440 = vmatpush1.xpose.msra.mxu0 0.0
  %2441 = vmatprep.subr.mxu0 0.0
  %2442 = vmatpush1.xpose.msra.mxu0 0.0
  %2443 = vmatprep.subr.mxu0 0.0
  %2444 = vmatpush1.xpose.msra.mxu0 0.0
  %2445 = vmatprep.subr.mxu0 0.0
  %2446 = vmatpush1.xpose.msra.mxu0 0.0
  %2447 = vmatprep.subr.mxu0 0.0
  %2448 = vmatpush1.xpose.msra.mxu0 0.0
  %2449 = vmatprep.subr.mxu0 0.0
  %2450 = vmatpush1.xpose.msra.mxu0 0.0
  %2451 = vmatprep.subr.mxu0 0.0
  %2452 = vmatpush1.xpose.msra.mxu0 0.0
  %2453 = vmatprep.subr.mxu0 0.0
  %2454 = vmatpush1.xpose.msra.mxu0 0.0
  %2455 = vmatprep.subr.mxu0 0.0
  %2456 = vmatpush1.xpose.msra.mxu0 0.0
  %2457 = vmatprep.subr.mxu0 0.0
  %2458 = vmatpush1.xpose.msra.mxu0 0.0
  %2459 = vmatprep.subr.mxu0 0.0
  %2460 = vmatpush1.xpose.msra.mxu0 0.0
  %2461 = vmatprep.subr.mxu0 0.0
  %2462 = vmatpush1.xpose.msra.mxu0 0.0
  %2463 = vmatprep.subr.mxu0 0.0
  %2464 = vmatpush1.xpose.msra.mxu0 0.0
  %2465 = vmatprep.subr.mxu0 0.0
  %2466 = vmatpush1.xpose.msra.mxu0 0.0
  %2467 = vmatprep.subr.mxu0 0.0
  %2468 = vmatpush1.xpose.msra.mxu0 %v2435
  %2469 = vmatprep.subr.mxu0 0.0
  %2470 = vmatpush2.xpose.msra.mxu0 0.0
  %2471 = vmatprep.subr.mxu0 0.0
  %2472 = vmatpush2.xpose.msra.mxu0 0.0
  %2473 = vmatprep.subr.mxu0 0.0
  %2474 = vmatpush2.xpose.msra.mxu0 0.0
  %2475 = vmatprep.subr.mxu0 0.0
  %2476 = vmatpush2.xpose.msra.mxu0 0.0
  %2477 = vmatprep.subr.mxu0 0.0
  %2478 = vmatpush2.xpose.msra.mxu0 0.0
  %2479 = vmatprep.subr.mxu0 0.0
  %2480 = vmatpush2.xpose.msra.mxu0 0.0
  %2481 = vmatprep.subr.mxu0 0.0
  %2482 = vmatpush2.xpose.msra.mxu0 0.0
  %2483 = vmatprep.subr.mxu0 0.0
  %2484 = vmatpush2.xpose.msra.mxu0 0.0
  %2485 = vmatprep.subr.mxu0 0.0
  %2486 = vmatpush2.xpose.msra.mxu0 0.0
  %2487 = vmatprep.subr.mxu0 0.0
  %2488 = vmatpush2.xpose.msra.mxu0 0.0
  %2489 = vmatprep.subr.mxu0 0.0
  %2490 = vmatpush2.xpose.msra.mxu0 0.0
  %2491 = vmatprep.subr.mxu0 0.0
  %2492 = vmatpush2.xpose.msra.mxu0 0.0
  %2493 = vmatprep.subr.mxu0 0.0
  %2494 = vmatpush2.xpose.msra.mxu0 0.0
  %2495 = vmatprep.subr.mxu0 0.0
  %2496 = vmatpush2.xpose.msra.mxu0 0.0
  %2497 = vmatprep.subr.mxu0 0.0
  %2498 = vmatpush2.xpose.msra.mxu0 0.0
  %2499 = vmatprep.subr.mxu0 0.0
  %2500 = vmatpush2.xpose.msra.mxu0 0.0
  %2501 = vmatprep.mubr.f32.mxu0 0.0
  %2502 = vmatmul.mubr.f32.gmra.mxu0 %v2433
  %v2503 = vpop.f32.mrf.mxu0
  %v2504 = vadd.f32 0.0, %v2503
  %v2505 = vpop.f32.mrf.mxu0
  %2506 = vdwg.mxu0
  %2507 = vrot.lane.b32.xlu0 %v2122, 96
  %v2508 = vpop.permute.xlu0 %2507
  %v2509 = vsel %vm229, %v2122, 0
  %v2511 = vsel %vm229, %v2508, 0
  %2513 = vmatprep.subr.mxu0 0.0
  %2514 = vmatpush1.xpose.msra.mxu0 0.0
  %2515 = vmatprep.subr.mxu0 0.0
  %2516 = vmatpush1.xpose.msra.mxu0 0.0
  %2517 = vmatprep.subr.mxu0 0.0
  %2518 = vmatpush1.xpose.msra.mxu0 0.0
  %2519 = vmatprep.subr.mxu0 0.0
  %2520 = vmatpush1.xpose.msra.mxu0 0.0
  %2521 = vmatprep.subr.mxu0 0.0
  %2522 = vmatpush1.xpose.msra.mxu0 0.0
  %2523 = vmatprep.subr.mxu0 0.0
  %2524 = vmatpush1.xpose.msra.mxu0 0.0
  %2525 = vmatprep.subr.mxu0 0.0
  %2526 = vmatpush1.xpose.msra.mxu0 0.0
  %2527 = vmatprep.subr.mxu0 0.0
  %2528 = vmatpush1.xpose.msra.mxu0 0.0
  %2529 = vmatprep.subr.mxu0 0.0
  %2530 = vmatpush1.xpose.msra.mxu0 0.0
  %2531 = vmatprep.subr.mxu0 0.0
  %2532 = vmatpush1.xpose.msra.mxu0 0.0
  %2533 = vmatprep.subr.mxu0 0.0
  %2534 = vmatpush1.xpose.msra.mxu0 0.0
  %2535 = vmatprep.subr.mxu0 0.0
  %2536 = vmatpush1.xpose.msra.mxu0 0.0
  %2537 = vmatprep.subr.mxu0 0.0
  %2538 = vmatpush1.xpose.msra.mxu0 0.0
  %2539 = vmatprep.subr.mxu0 0.0
  %2540 = vmatpush1.xpose.msra.mxu0 0.0
  %2541 = vmatprep.subr.mxu0 0.0
  %2542 = vmatpush1.xpose.msra.mxu0 0.0
  %2543 = vmatprep.subr.mxu0 0.0
  %2544 = vmatpush1.xpose.msra.mxu0 %v2511
  %2545 = vmatprep.subr.mxu0 0.0
  %2546 = vmatpush2.xpose.msra.mxu0 0.0
  %2547 = vmatprep.subr.mxu0 0.0
  %2548 = vmatpush2.xpose.msra.mxu0 0.0
  %2549 = vmatprep.subr.mxu0 0.0
  %2550 = vmatpush2.xpose.msra.mxu0 0.0
  %2551 = vmatprep.subr.mxu0 0.0
  %2552 = vmatpush2.xpose.msra.mxu0 0.0
  %2553 = vmatprep.subr.mxu0 0.0
  %2554 = vmatpush2.xpose.msra.mxu0 0.0
  %2555 = vmatprep.subr.mxu0 0.0
  %2556 = vmatpush2.xpose.msra.mxu0 0.0
  %2557 = vmatprep.subr.mxu0 0.0
  %2558 = vmatpush2.xpose.msra.mxu0 0.0
  %2559 = vmatprep.subr.mxu0 0.0
  %2560 = vmatpush2.xpose.msra.mxu0 0.0
  %2561 = vmatprep.subr.mxu0 0.0
  %2562 = vmatpush2.xpose.msra.mxu0 0.0
  %2563 = vmatprep.subr.mxu0 0.0
  %2564 = vmatpush2.xpose.msra.mxu0 0.0
  %2565 = vmatprep.subr.mxu0 0.0
  %2566 = vmatpush2.xpose.msra.mxu0 0.0
  %2567 = vmatprep.subr.mxu0 0.0
  %2568 = vmatpush2.xpose.msra.mxu0 0.0
  %2569 = vmatprep.subr.mxu0 0.0
  %2570 = vmatpush2.xpose.msra.mxu0 0.0
  %2571 = vmatprep.subr.mxu0 0.0
  %2572 = vmatpush2.xpose.msra.mxu0 0.0
  %2573 = vmatprep.subr.mxu0 0.0
  %2574 = vmatpush2.xpose.msra.mxu0 0.0
  %2575 = vmatprep.subr.mxu0 0.0
  %2576 = vmatpush2.xpose.msra.mxu0 0.0
  %2577 = vmatprep.mubr.f32.mxu0 0.0
  %2578 = vmatmul.mubr.f32.gmra.mxu0 %v2509
  %v2579 = vpop.f32.mrf.mxu0
  %v2580 = vadd.f32 0.0, %v2579
  %v2581 = vpop.f32.mrf.mxu0
  %2582 = vdwg.mxu0
  %2583 = vrot.lane.b32.xlu0 %v2124, 96
  %v2584 = vpop.permute.xlu0 %2583
  %v2585 = vsel %vm229, %v2124, 0
  %v2587 = vsel %vm229, %v2584, 0
  %2589 = vmatprep.subr.mxu0 0.0
  %2590 = vmatpush1.xpose.msra.mxu0 0.0
  %2591 = vmatprep.subr.mxu0 0.0
  %2592 = vmatpush1.xpose.msra.mxu0 0.0
  %2593 = vmatprep.subr.mxu0 0.0
  %2594 = vmatpush1.xpose.msra.mxu0 0.0
  %2595 = vmatprep.subr.mxu0 0.0
  %2596 = vmatpush1.xpose.msra.mxu0 0.0
  %2597 = vmatprep.subr.mxu0 0.0
  %2598 = vmatpush1.xpose.msra.mxu0 0.0
  %2599 = vmatprep.subr.mxu0 0.0
  %2600 = vmatpush1.xpose.msra.mxu0 0.0
  %2601 = vmatprep.subr.mxu0 0.0
  %2602 = vmatpush1.xpose.msra.mxu0 0.0
  %2603 = vmatprep.subr.mxu0 0.0
  %2604 = vmatpush1.xpose.msra.mxu0 0.0
  %2605 = vmatprep.subr.mxu0 0.0
  %2606 = vmatpush1.xpose.msra.mxu0 0.0
  %2607 = vmatprep.subr.mxu0 0.0
  %2608 = vmatpush1.xpose.msra.mxu0 0.0
  %2609 = vmatprep.subr.mxu0 0.0
  %2610 = vmatpush1.xpose.msra.mxu0 0.0
  %2611 = vmatprep.subr.mxu0 0.0
  %2612 = vmatpush1.xpose.msra.mxu0 0.0
  %2613 = vmatprep.subr.mxu0 0.0
  %2614 = vmatpush1.xpose.msra.mxu0 0.0
  %2615 = vmatprep.subr.mxu0 0.0
  %2616 = vmatpush1.xpose.msra.mxu0 0.0
  %2617 = vmatprep.subr.mxu0 0.0
  %2618 = vmatpush1.xpose.msra.mxu0 0.0
  %2619 = vmatprep.subr.mxu0 0.0
  %2620 = vmatpush1.xpose.msra.mxu0 %v2587
  %2621 = vmatprep.subr.mxu0 0.0
  %2622 = vmatpush2.xpose.msra.mxu0 0.0
  %2623 = vmatprep.subr.mxu0 0.0
  %2624 = vmatpush2.xpose.msra.mxu0 0.0
  %2625 = vmatprep.subr.mxu0 0.0
  %2626 = vmatpush2.xpose.msra.mxu0 0.0
  %2627 = vmatprep.subr.mxu0 0.0
  %2628 = vmatpush2.xpose.msra.mxu0 0.0
  %2629 = vmatprep.subr.mxu0 0.0
  %2630 = vmatpush2.xpose.msra.mxu0 0.0
  %2631 = vmatprep.subr.mxu0 0.0
  %2632 = vmatpush2.xpose.msra.mxu0 0.0
  %2633 = vmatprep.subr.mxu0 0.0
  %2634 = vmatpush2.xpose.msra.mxu0 0.0
  %2635 = vmatprep.subr.mxu0 0.0
  %2636 = vmatpush2.xpose.msra.mxu0 0.0
  %2637 = vmatprep.subr.mxu0 0.0
  %2638 = vmatpush2.xpose.msra.mxu0 0.0
  %2639 = vmatprep.subr.mxu0 0.0
  %2640 = vmatpush2.xpose.msra.mxu0 0.0
  %2641 = vmatprep.subr.mxu0 0.0
  %2642 = vmatpush2.xpose.msra.mxu0 0.0
  %2643 = vmatprep.subr.mxu0 0.0
  %2644 = vmatpush2.xpose.msra.mxu0 0.0
  %2645 = vmatprep.subr.mxu0 0.0
  %2646 = vmatpush2.xpose.msra.mxu0 0.0
  %2647 = vmatprep.subr.mxu0 0.0
  %2648 = vmatpush2.xpose.msra.mxu0 0.0
  %2649 = vmatprep.subr.mxu0 0.0
  %2650 = vmatpush2.xpose.msra.mxu0 0.0
  %2651 = vmatprep.subr.mxu0 0.0
  %2652 = vmatpush2.xpose.msra.mxu0 0.0
  %2653 = vmatprep.mubr.f32.mxu0 0.0
  %2654 = vmatmul.mubr.f32.gmra.mxu0 %v2585
  %v2655 = vpop.f32.mrf.mxu0
  %v2656 = vadd.f32 0.0, %v2655
  %v2657 = vpop.f32.mrf.mxu0
  %2658 = vdwg.mxu0
  %2659 = vrot.lane.b32.xlu0 %v2126, 96
  %v2660 = vpop.permute.xlu0 %2659
  %v2661 = vsel %vm229, %v2126, 0
  %v2663 = vsel %vm229, %v2660, 0
  %2665 = vmatprep.subr.mxu0 0.0
  %2666 = vmatpush1.xpose.msra.mxu0 0.0
  %2667 = vmatprep.subr.mxu0 0.0
  %2668 = vmatpush1.xpose.msra.mxu0 0.0
  %2669 = vmatprep.subr.mxu0 0.0
  %2670 = vmatpush1.xpose.msra.mxu0 0.0
  %2671 = vmatprep.subr.mxu0 0.0
  %2672 = vmatpush1.xpose.msra.mxu0 0.0
  %2673 = vmatprep.subr.mxu0 0.0
  %2674 = vmatpush1.xpose.msra.mxu0 0.0
  %2675 = vmatprep.subr.mxu0 0.0
  %2676 = vmatpush1.xpose.msra.mxu0 0.0
  %2677 = vmatprep.subr.mxu0 0.0
  %2678 = vmatpush1.xpose.msra.mxu0 0.0
  %2679 = vmatprep.subr.mxu0 0.0
  %2680 = vmatpush1.xpose.msra.mxu0 0.0
  %2681 = vmatprep.subr.mxu0 0.0
  %2682 = vmatpush1.xpose.msra.mxu0 0.0
  %2683 = vmatprep.subr.mxu0 0.0
  %2684 = vmatpush1.xpose.msra.mxu0 0.0
  %2685 = vmatprep.subr.mxu0 0.0
  %2686 = vmatpush1.xpose.msra.mxu0 0.0
  %2687 = vmatprep.subr.mxu0 0.0
  %2688 = vmatpush1.xpose.msra.mxu0 0.0
  %2689 = vmatprep.subr.mxu0 0.0
  %2690 = vmatpush1.xpose.msra.mxu0 0.0
  %2691 = vmatprep.subr.mxu0 0.0
  %2692 = vmatpush1.xpose.msra.mxu0 0.0
  %2693 = vmatprep.subr.mxu0 0.0
  %2694 = vmatpush1.xpose.msra.mxu0 0.0
  %2695 = vmatprep.subr.mxu0 0.0
  %2696 = vmatpush1.xpose.msra.mxu0 %v2663
  %2697 = vmatprep.subr.mxu0 0.0
  %2698 = vmatpush2.xpose.msra.mxu0 0.0
  %2699 = vmatprep.subr.mxu0 0.0
  %2700 = vmatpush2.xpose.msra.mxu0 0.0
  %2701 = vmatprep.subr.mxu0 0.0
  %2702 = vmatpush2.xpose.msra.mxu0 0.0
  %2703 = vmatprep.subr.mxu0 0.0
  %2704 = vmatpush2.xpose.msra.mxu0 0.0
  %2705 = vmatprep.subr.mxu0 0.0
  %2706 = vmatpush2.xpose.msra.mxu0 0.0
  %2707 = vmatprep.subr.mxu0 0.0
  %2708 = vmatpush2.xpose.msra.mxu0 0.0
  %2709 = vmatprep.subr.mxu0 0.0
  %2710 = vmatpush2.xpose.msra.mxu0 0.0
  %2711 = vmatprep.subr.mxu0 0.0
  %2712 = vmatpush2.xpose.msra.mxu0 0.0
  %2713 = vmatprep.subr.mxu0 0.0
  %2714 = vmatpush2.xpose.msra.mxu0 0.0
  %2715 = vmatprep.subr.mxu0 0.0
  %2716 = vmatpush2.xpose.msra.mxu0 0.0
  %2717 = vmatprep.subr.mxu0 0.0
  %2718 = vmatpush2.xpose.msra.mxu0 0.0
  %2719 = vmatprep.subr.mxu0 0.0
  %2720 = vmatpush2.xpose.msra.mxu0 0.0
  %2721 = vmatprep.subr.mxu0 0.0
  %2722 = vmatpush2.xpose.msra.mxu0 0.0
  %2723 = vmatprep.subr.mxu0 0.0
  %2724 = vmatpush2.xpose.msra.mxu0 0.0
  %2725 = vmatprep.subr.mxu0 0.0
  %2726 = vmatpush2.xpose.msra.mxu0 0.0
  %2727 = vmatprep.subr.mxu0 0.0
  %2728 = vmatpush2.xpose.msra.mxu0 0.0
  %2729 = vmatprep.mubr.f32.mxu0 0.0
  %2730 = vmatmul.mubr.f32.gmra.mxu0 %v2661
  %v2731 = vpop.f32.mrf.mxu0
  %v2732 = vadd.f32 0.0, %v2731
  %v2733 = vpop.f32.mrf.mxu0
  %2734 = vdwg.mxu0
  %v2735 = vmul.f32 %v2200, 0.35355338
  %v2736 = vmul.f32 %v2276, 0.35355338
  %v2737 = vmul.f32 %v2352, 0.35355338
  %v2738 = vmul.f32 %v2428, 0.35355338
  %v2739 = vmul.f32 %v2504, 0.35355338
  %v2740 = vmul.f32 %v2580, 0.35355338
  %v2741 = vmul.f32 %v2656, 0.35355338
  %v2742 = vmul.f32 %v2732, 0.35355338
  %v2743 = vadd.f32 %v2735, %v855
  %v2744 = vadd.f32 %v2736, %v859
  %v2745 = vadd.f32 %v2737, %v863
  %v2746 = vadd.f32 %v2738, %v867
  %v2747 = vadd.f32 %v2739, %v871
  %v2748 = vadd.f32 %v2740, %v875
  %v2749 = vadd.f32 %v2741, %v879
  %v2750 = vadd.f32 %v2742, %v883
  %v2751 = vsel %vm229, %v2743, -inf
  %2752 = vmax.xlane.f32.xlu0 %v2751
  %v2753 = vpop.xlane.xlu0 %2752
  %v2754 = vsel %vm229, %v2744, -inf
  %2755 = vmax.xlane.f32.xlu0 %v2754
  %v2756 = vpop.xlane.xlu0 %2755
  %v2757 = vsel %vm229, %v2745, -inf
  %2758 = vmax.xlane.f32.xlu0 %v2757
  %v2759 = vpop.xlane.xlu0 %2758
  %v2760 = vsel %vm229, %v2746, -inf
  %2761 = vmax.xlane.f32.xlu0 %v2760
  %v2762 = vpop.xlane.xlu0 %2761
  %v2763 = vsel %vm229, %v2747, -inf
  %2764 = vmax.xlane.f32.xlu0 %v2763
  %v2765 = vpop.xlane.xlu0 %2764
  %v2766 = vsel %vm229, %v2748, -inf
  %2767 = vmax.xlane.f32.xlu0 %v2766
  %v2768 = vpop.xlane.xlu0 %2767
  %v2769 = vsel %vm229, %v2749, -inf
  %2770 = vmax.xlane.f32.xlu0 %v2769
  %v2771 = vpop.xlane.xlu0 %2770
  %v2772 = vsel %vm229, %v2750, -inf
  %2773 = vmax.xlane.f32.xlu0 %v2772
  %v2774 = vpop.xlane.xlu0 %2773
  %v2775 = vsub.f32 %v2743, %v2753
  %v2776 = vsub.f32 %v2744, %v2756
  %v2777 = vsub.f32 %v2745, %v2759
  %v2778 = vsub.f32 %v2746, %v2762
  %v2779 = vsub.f32 %v2747, %v2765
  %v2780 = vsub.f32 %v2748, %v2768
  %v2781 = vsub.f32 %v2749, %v2771
  %v2782 = vsub.f32 %v2750, %v2774
  %v2783 = vmul.f32 %v2775, 1.442695
  %v2784 = vpow.pop %v2783
  %v2785 = vmul.f32 %v2776, 1.442695
  %v2786 = vpow.pop %v2785
  %v2787 = vmul.f32 %v2777, 1.442695
  %v2788 = vpow.pop %v2787
  %v2789 = vmul.f32 %v2778, 1.442695
  %v2790 = vpow.pop %v2789
  %v2791 = vmul.f32 %v2779, 1.442695
  %v2792 = vpow.pop %v2791
  %v2793 = vmul.f32 %v2780, 1.442695
  %v2794 = vpow.pop %v2793
  %v2795 = vmul.f32 %v2781, 1.442695
  %v2796 = vpow.pop %v2795
  %v2797 = vmul.f32 %v2782, 1.442695
  %v2798 = vpow.pop %v2797
  %v2799 = vsel %vm229, %v2784, 0.0
  %2800 = vadd.xlane.f32.xlu0 %v2799
  %v2801 = vpop.xlane.xlu0 %2800
  %v2802 = vsel %vm229, %v2786, 0.0
  %2803 = vadd.xlane.f32.xlu0 %v2802
  %v2804 = vpop.xlane.xlu0 %2803
  %v2805 = vsel %vm229, %v2788, 0.0
  %2806 = vadd.xlane.f32.xlu0 %v2805
  %v2807 = vpop.xlane.xlu0 %2806
  %v2808 = vsel %vm229, %v2790, 0.0
  %2809 = vadd.xlane.f32.xlu0 %v2808
  %v2810 = vpop.xlane.xlu0 %2809
  %v2811 = vsel %vm229, %v2792, 0.0
  %2812 = vadd.xlane.f32.xlu0 %v2811
  %v2813 = vpop.xlane.xlu0 %2812
  %v2814 = vsel %vm229, %v2794, 0.0
  %2815 = vadd.xlane.f32.xlu0 %v2814
  %v2816 = vpop.xlane.xlu0 %2815
  %v2817 = vsel %vm229, %v2796, 0.0
  %2818 = vadd.xlane.f32.xlu0 %v2817
  %v2819 = vpop.xlane.xlu0 %2818
  %v2820 = vsel %vm229, %v2798, 0.0
  %2821 = vadd.xlane.f32.xlu0 %v2820
  %v2822 = vpop.xlane.xlu0 %2821
  %v2823 = vrcp.pop %v2801
  %v2824 = vrcp.pop %v2804
  %v2825 = vrcp.pop %v2807
  %v2826 = vrcp.pop %v2810
  %v2827 = vrcp.pop %v2813
  %v2828 = vrcp.pop %v2816
  %v2829 = vrcp.pop %v2819
  %v2830 = vrcp.pop %v2822
  %v2831 = vmul.f32 %v2784, %v2823
  %v2832 = vmul.f32 %v2786, %v2824
  %v2833 = vmul.f32 %v2788, %v2825
  %v2834 = vmul.f32 %v2790, %v2826
  %v2835 = vmul.f32 %v2792, %v2827
  %v2836 = vmul.f32 %v2794, %v2828
  %v2837 = vmul.f32 %v2796, %v2829
  %v2838 = vmul.f32 %v2798, %v2830
  %2839 = vrot.lane.b32.xlu0 %v2105, 64
  %v2840 = vpop.permute.xlu0 %2839
  %v2843 = vsel %vm229, %v2831, 0
  %2845 = vmatprep.subr.mxu0 0.0
  %2846 = vmatpush1.msra.mxu0 0.0
  %2847 = vmatprep.subr.mxu0 0.0
  %2848 = vmatpush1.msra.mxu0 0.0
  %2849 = vmatprep.subr.mxu0 0.0
  %2850 = vmatpush1.msra.mxu0 0.0
  %2851 = vmatprep.subr.mxu0 0.0
  %2852 = vmatpush1.msra.mxu0 0.0
  %2853 = vmatprep.subr.mxu0 0.0
  %2854 = vmatpush1.msra.mxu0 0.0
  %2855 = vmatprep.subr.mxu0 0.0
  %2856 = vmatpush1.msra.mxu0 0.0
  %2857 = vmatprep.subr.mxu0 0.0
  %2858 = vmatpush1.msra.mxu0 0.0
  %2859 = vmatprep.subr.mxu0 0.0
  %2860 = vmatpush1.msra.mxu0 0.0
  %2861 = vmatprep.subr.mxu0 0.0
  %2862 = vmatpush1.msra.mxu0 0.0
  %2863 = vmatprep.subr.mxu0 0.0
  %2864 = vmatpush1.msra.mxu0 0.0
  %2865 = vmatprep.subr.mxu0 0.0
  %2866 = vmatpush1.msra.mxu0 0.0
  %2867 = vmatprep.subr.mxu0 0.0
  %2868 = vmatpush1.msra.mxu0 0.0
  %2869 = vmatprep.subr.mxu0 0.0
  %2870 = vmatpush1.msra.mxu0 0.0
  %2871 = vmatprep.subr.mxu0 0.0
  %2872 = vmatpush1.msra.mxu0 0.0
  %2873 = vmatprep.subr.mxu0 0.0
  %2874 = vmatpush1.msra.mxu0 0.0
  %2875 = vmatprep.subr.mxu0 0.0
  %2876 = vmatpush1.msra.mxu0 %v2840
  %2877 = vmatprep.subr.mxu0 0.0
  %2878 = vmatpush2.msra.mxu0 0.0
  %2879 = vmatprep.subr.mxu0 0.0
  %2880 = vmatpush2.msra.mxu0 0.0
  %2881 = vmatprep.subr.mxu0 0.0
  %2882 = vmatpush2.msra.mxu0 0.0
  %2883 = vmatprep.subr.mxu0 0.0
  %2884 = vmatpush2.msra.mxu0 0.0
  %2885 = vmatprep.subr.mxu0 0.0
  %2886 = vmatpush2.msra.mxu0 0.0
  %2887 = vmatprep.subr.mxu0 0.0
  %2888 = vmatpush2.msra.mxu0 0.0
  %2889 = vmatprep.subr.mxu0 0.0
  %2890 = vmatpush2.msra.mxu0 0.0
  %2891 = vmatprep.subr.mxu0 0.0
  %2892 = vmatpush2.msra.mxu0 0.0
  %2893 = vmatprep.subr.mxu0 0.0
  %2894 = vmatpush2.msra.mxu0 0.0
  %2895 = vmatprep.subr.mxu0 0.0
  %2896 = vmatpush2.msra.mxu0 0.0
  %2897 = vmatprep.subr.mxu0 0.0
  %2898 = vmatpush2.msra.mxu0 0.0
  %2899 = vmatprep.subr.mxu0 0.0
  %2900 = vmatpush2.msra.mxu0 0.0
  %2901 = vmatprep.subr.mxu0 0.0
  %2902 = vmatpush2.msra.mxu0 0.0
  %2903 = vmatprep.subr.mxu0 0.0
  %2904 = vmatpush2.msra.mxu0 0.0
  %2905 = vmatprep.subr.mxu0 0.0
  %2906 = vmatpush2.msra.mxu0 0.0
  %2907 = vmatprep.subr.mxu0 0.0
  %2908 = vmatpush2.msra.mxu0 0.0
  %2909 = vmatprep.mubr.f32.mxu0 0.0
  %2910 = vmatmul.mubr.f32.gmra.mxu0 %v2843
  %v2911 = vpop.f32.mrf.mxu0
  %v2912 = vadd.f32 0.0, %v2911
  %v2913 = vpop.f32.mrf.mxu0
  %2914 = vdwg.mxu0
  %2915 = vrot.lane.b32.xlu0 %v2115, 64
  %v2916 = vpop.permute.xlu0 %2915
  %v2919 = vsel %vm229, %v2832, 0
  %2921 = vmatprep.subr.mxu0 0.0
  %2922 = vmatpush1.msra.mxu0 0.0
  %2923 = vmatprep.subr.mxu0 0.0
  %2924 = vmatpush1.msra.mxu0 0.0
  %2925 = vmatprep.subr.mxu0 0.0
  %2926 = vmatpush1.msra.mxu0 0.0
  %2927 = vmatprep.subr.mxu0 0.0
  %2928 = vmatpush1.msra.mxu0 0.0
  %2929 = vmatprep.subr.mxu0 0.0
  %2930 = vmatpush1.msra.mxu0 0.0
  %2931 = vmatprep.subr.mxu0 0.0
  %2932 = vmatpush1.msra.mxu0 0.0
  %2933 = vmatprep.subr.mxu0 0.0
  %2934 = vmatpush1.msra.mxu0 0.0
  %2935 = vmatprep.subr.mxu0 0.0
  %2936 = vmatpush1.msra.mxu0 0.0
  %2937 = vmatprep.subr.mxu0 0.0
  %2938 = vmatpush1.msra.mxu0 0.0
  %2939 = vmatprep.subr.mxu0 0.0
  %2940 = vmatpush1.msra.mxu0 0.0
  %2941 = vmatprep.subr.mxu0 0.0
  %2942 = vmatpush1.msra.mxu0 0.0
  %2943 = vmatprep.subr.mxu0 0.0
  %2944 = vmatpush1.msra.mxu0 0.0
  %2945 = vmatprep.subr.mxu0 0.0
  %2946 = vmatpush1.msra.mxu0 0.0
  %2947 = vmatprep.subr.mxu0 0.0
  %2948 = vmatpush1.msra.mxu0 0.0
  %2949 = vmatprep.subr.mxu0 0.0
  %2950 = vmatpush1.msra.mxu0 0.0
  %2951 = vmatprep.subr.mxu0 0.0
  %2952 = vmatpush1.msra.mxu0 %v2916
  %2953 = vmatprep.subr.mxu0 0.0
  %2954 = vmatpush2.msra.mxu0 0.0
  %2955 = vmatprep.subr.mxu0 0.0
  %2956 = vmatpush2.msra.mxu0 0.0
  %2957 = vmatprep.subr.mxu0 0.0
  %2958 = vmatpush2.msra.mxu0 0.0
  %2959 = vmatprep.subr.mxu0 0.0
  %2960 = vmatpush2.msra.mxu0 0.0
  %2961 = vmatprep.subr.mxu0 0.0
  %2962 = vmatpush2.msra.mxu0 0.0
  %2963 = vmatprep.subr.mxu0 0.0
  %2964 = vmatpush2.msra.mxu0 0.0
  %2965 = vmatprep.subr.mxu0 0.0
  %2966 = vmatpush2.msra.mxu0 0.0
  %2967 = vmatprep.subr.mxu0 0.0
  %2968 = vmatpush2.msra.mxu0 0.0
  %2969 = vmatprep.subr.mxu0 0.0
  %2970 = vmatpush2.msra.mxu0 0.0
  %2971 = vmatprep.subr.mxu0 0.0
  %2972 = vmatpush2.msra.mxu0 0.0
  %2973 = vmatprep.subr.mxu0 0.0
  %2974 = vmatpush2.msra.mxu0 0.0
  %2975 = vmatprep.subr.mxu0 0.0
  %2976 = vmatpush2.msra.mxu0 0.0
  %2977 = vmatprep.subr.mxu0 0.0
  %2978 = vmatpush2.msra.mxu0 0.0
  %2979 = vmatprep.subr.mxu0 0.0
  %2980 = vmatpush2.msra.mxu0 0.0
  %2981 = vmatprep.subr.mxu0 0.0
  %2982 = vmatpush2.msra.mxu0 0.0
  %2983 = vmatprep.subr.mxu0 0.0
  %2984 = vmatpush2.msra.mxu0 0.0
  %2985 = vmatprep.mubr.f32.mxu0 0.0
  %2986 = vmatmul.mubr.f32.gmra.mxu0 %v2919
  %v2987 = vpop.f32.mrf.mxu0
  %v2988 = vadd.f32 0.0, %v2987
  %v2989 = vpop.f32.mrf.mxu0
  %2990 = vdwg.mxu0
  %2991 = vrot.lane.b32.xlu0 %v2117, 64
  %v2992 = vpop.permute.xlu0 %2991
  %v2995 = vsel %vm229, %v2833, 0
  %2997 = vmatprep.subr.mxu0 0.0
  %2998 = vmatpush1.msra.mxu0 0.0
  %2999 = vmatprep.subr.mxu0 0.0
  %3000 = vmatpush1.msra.mxu0 0.0
  %3001 = vmatprep.subr.mxu0 0.0
  %3002 = vmatpush1.msra.mxu0 0.0
  %3003 = vmatprep.subr.mxu0 0.0
  %3004 = vmatpush1.msra.mxu0 0.0
  %3005 = vmatprep.subr.mxu0 0.0
  %3006 = vmatpush1.msra.mxu0 0.0
  %3007 = vmatprep.subr.mxu0 0.0
  %3008 = vmatpush1.msra.mxu0 0.0
  %3009 = vmatprep.subr.mxu0 0.0
  %3010 = vmatpush1.msra.mxu0 0.0
  %3011 = vmatprep.subr.mxu0 0.0
  %3012 = vmatpush1.msra.mxu0 0.0
  %3013 = vmatprep.subr.mxu0 0.0
  %3014 = vmatpush1.msra.mxu0 0.0
  %3015 = vmatprep.subr.mxu0 0.0
  %3016 = vmatpush1.msra.mxu0 0.0
  %3017 = vmatprep.subr.mxu0 0.0
  %3018 = vmatpush1.msra.mxu0 0.0
  %3019 = vmatprep.subr.mxu0 0.0
  %3020 = vmatpush1.msra.mxu0 0.0
  %3021 = vmatprep.subr.mxu0 0.0
  %3022 = vmatpush1.msra.mxu0 0.0
  %3023 = vmatprep.subr.mxu0 0.0
  %3024 = vmatpush1.msra.mxu0 0.0
  %3025 = vmatprep.subr.mxu0 0.0
  %3026 = vmatpush1.msra.mxu0 0.0
  %3027 = vmatprep.subr.mxu0 0.0
  %3028 = vmatpush1.msra.mxu0 %v2992
  %3029 = vmatprep.subr.mxu0 0.0
  %3030 = vmatpush2.msra.mxu0 0.0
  %3031 = vmatprep.subr.mxu0 0.0
  %3032 = vmatpush2.msra.mxu0 0.0
  %3033 = vmatprep.subr.mxu0 0.0
  %3034 = vmatpush2.msra.mxu0 0.0
  %3035 = vmatprep.subr.mxu0 0.0
  %3036 = vmatpush2.msra.mxu0 0.0
  %3037 = vmatprep.subr.mxu0 0.0
  %3038 = vmatpush2.msra.mxu0 0.0
  %3039 = vmatprep.subr.mxu0 0.0
  %3040 = vmatpush2.msra.mxu0 0.0
  %3041 = vmatprep.subr.mxu0 0.0
  %3042 = vmatpush2.msra.mxu0 0.0
  %3043 = vmatprep.subr.mxu0 0.0
  %3044 = vmatpush2.msra.mxu0 0.0
  %3045 = vmatprep.subr.mxu0 0.0
  %3046 = vmatpush2.msra.mxu0 0.0
  %3047 = vmatprep.subr.mxu0 0.0
  %3048 = vmatpush2.msra.mxu0 0.0
  %3049 = vmatprep.subr.mxu0 0.0
  %3050 = vmatpush2.msra.mxu0 0.0
  %3051 = vmatprep.subr.mxu0 0.0
  %3052 = vmatpush2.msra.mxu0 0.0
  %3053 = vmatprep.subr.mxu0 0.0
  %3054 = vmatpush2.msra.mxu0 0.0
  %3055 = vmatprep.subr.mxu0 0.0
  %3056 = vmatpush2.msra.mxu0 0.0
  %3057 = vmatprep.subr.mxu0 0.0
  %3058 = vmatpush2.msra.mxu0 0.0
  %3059 = vmatprep.subr.mxu0 0.0
  %3060 = vmatpush2.msra.mxu0 0.0
  %3061 = vmatprep.mubr.f32.mxu0 0.0
  %3062 = vmatmul.mubr.f32.gmra.mxu0 %v2995
  %v3063 = vpop.f32.mrf.mxu0
  %v3064 = vadd.f32 0.0, %v3063
  %v3065 = vpop.f32.mrf.mxu0
  %3066 = vdwg.mxu0
  %3067 = vrot.lane.b32.xlu0 %v2119, 64
  %v3068 = vpop.permute.xlu0 %3067
  %v3071 = vsel %vm229, %v2834, 0
  %3073 = vmatprep.subr.mxu0 0.0
  %3074 = vmatpush1.msra.mxu0 0.0
  %3075 = vmatprep.subr.mxu0 0.0
  %3076 = vmatpush1.msra.mxu0 0.0
  %3077 = vmatprep.subr.mxu0 0.0
  %3078 = vmatpush1.msra.mxu0 0.0
  %3079 = vmatprep.subr.mxu0 0.0
  %3080 = vmatpush1.msra.mxu0 0.0
  %3081 = vmatprep.subr.mxu0 0.0
  %3082 = vmatpush1.msra.mxu0 0.0
  %3083 = vmatprep.subr.mxu0 0.0
  %3084 = vmatpush1.msra.mxu0 0.0
  %3085 = vmatprep.subr.mxu0 0.0
  %3086 = vmatpush1.msra.mxu0 0.0
  %3087 = vmatprep.subr.mxu0 0.0
  %3088 = vmatpush1.msra.mxu0 0.0
  %3089 = vmatprep.subr.mxu0 0.0
  %3090 = vmatpush1.msra.mxu0 0.0
  %3091 = vmatprep.subr.mxu0 0.0
  %3092 = vmatpush1.msra.mxu0 0.0
  %3093 = vmatprep.subr.mxu0 0.0
  %3094 = vmatpush1.msra.mxu0 0.0
  %3095 = vmatprep.subr.mxu0 0.0
  %3096 = vmatpush1.msra.mxu0 0.0
  %3097 = vmatprep.subr.mxu0 0.0
  %3098 = vmatpush1.msra.mxu0 0.0
  %3099 = vmatprep.subr.mxu0 0.0
  %3100 = vmatpush1.msra.mxu0 0.0
  %3101 = vmatprep.subr.mxu0 0.0
  %3102 = vmatpush1.msra.mxu0 0.0
  %3103 = vmatprep.subr.mxu0 0.0
  %3104 = vmatpush1.msra.mxu0 %v3068
  %3105 = vmatprep.subr.mxu0 0.0
  %3106 = vmatpush2.msra.mxu0 0.0
  %3107 = vmatprep.subr.mxu0 0.0
  %3108 = vmatpush2.msra.mxu0 0.0
  %3109 = vmatprep.subr.mxu0 0.0
  %3110 = vmatpush2.msra.mxu0 0.0
  %3111 = vmatprep.subr.mxu0 0.0
  %3112 = vmatpush2.msra.mxu0 0.0
  %3113 = vmatprep.subr.mxu0 0.0
  %3114 = vmatpush2.msra.mxu0 0.0
  %3115 = vmatprep.subr.mxu0 0.0
  %3116 = vmatpush2.msra.mxu0 0.0
  %3117 = vmatprep.subr.mxu0 0.0
  %3118 = vmatpush2.msra.mxu0 0.0
  %3119 = vmatprep.subr.mxu0 0.0
  %3120 = vmatpush2.msra.mxu0 0.0
  %3121 = vmatprep.subr.mxu0 0.0
  %3122 = vmatpush2.msra.mxu0 0.0
  %3123 = vmatprep.subr.mxu0 0.0
  %3124 = vmatpush2.msra.mxu0 0.0
  %3125 = vmatprep.subr.mxu0 0.0
  %3126 = vmatpush2.msra.mxu0 0.0
  %3127 = vmatprep.subr.mxu0 0.0
  %3128 = vmatpush2.msra.mxu0 0.0
  %3129 = vmatprep.subr.mxu0 0.0
  %3130 = vmatpush2.msra.mxu0 0.0
  %3131 = vmatprep.subr.mxu0 0.0
  %3132 = vmatpush2.msra.mxu0 0.0
  %3133 = vmatprep.subr.mxu0 0.0
  %3134 = vmatpush2.msra.mxu0 0.0
  %3135 = vmatprep.subr.mxu0 0.0
  %3136 = vmatpush2.msra.mxu0 0.0
  %3137 = vmatprep.mubr.f32.mxu0 0.0
  %3138 = vmatmul.mubr.f32.gmra.mxu0 %v3071
  %v3139 = vpop.f32.mrf.mxu0
  %v3140 = vadd.f32 0.0, %v3139
  %v3141 = vpop.f32.mrf.mxu0
  %3142 = vdwg.mxu0
  %3143 = vrot.lane.b32.xlu0 %v2110, 64
  %v3144 = vpop.permute.xlu0 %3143
  %v3147 = vsel %vm229, %v2835, 0
  %3149 = vmatprep.subr.mxu0 0.0
  %3150 = vmatpush1.msra.mxu0 0.0
  %3151 = vmatprep.subr.mxu0 0.0
  %3152 = vmatpush1.msra.mxu0 0.0
  %3153 = vmatprep.subr.mxu0 0.0
  %3154 = vmatpush1.msra.mxu0 0.0
  %3155 = vmatprep.subr.mxu0 0.0
  %3156 = vmatpush1.msra.mxu0 0.0
  %3157 = vmatprep.subr.mxu0 0.0
  %3158 = vmatpush1.msra.mxu0 0.0
  %3159 = vmatprep.subr.mxu0 0.0
  %3160 = vmatpush1.msra.mxu0 0.0
  %3161 = vmatprep.subr.mxu0 0.0
  %3162 = vmatpush1.msra.mxu0 0.0
  %3163 = vmatprep.subr.mxu0 0.0
  %3164 = vmatpush1.msra.mxu0 0.0
  %3165 = vmatprep.subr.mxu0 0.0
  %3166 = vmatpush1.msra.mxu0 0.0
  %3167 = vmatprep.subr.mxu0 0.0
  %3168 = vmatpush1.msra.mxu0 0.0
  %3169 = vmatprep.subr.mxu0 0.0
  %3170 = vmatpush1.msra.mxu0 0.0
  %3171 = vmatprep.subr.mxu0 0.0
  %3172 = vmatpush1.msra.mxu0 0.0
  %3173 = vmatprep.subr.mxu0 0.0
  %3174 = vmatpush1.msra.mxu0 0.0
  %3175 = vmatprep.subr.mxu0 0.0
  %3176 = vmatpush1.msra.mxu0 0.0
  %3177 = vmatprep.subr.mxu0 0.0
  %3178 = vmatpush1.msra.mxu0 0.0
  %3179 = vmatprep.subr.mxu0 0.0
  %3180 = vmatpush1.msra.mxu0 %v3144
  %3181 = vmatprep.subr.mxu0 0.0
  %3182 = vmatpush2.msra.mxu0 0.0
  %3183 = vmatprep.subr.mxu0 0.0
  %3184 = vmatpush2.msra.mxu0 0.0
  %3185 = vmatprep.subr.mxu0 0.0
  %3186 = vmatpush2.msra.mxu0 0.0
  %3187 = vmatprep.subr.mxu0 0.0
  %3188 = vmatpush2.msra.mxu0 0.0
  %3189 = vmatprep.subr.mxu0 0.0
  %3190 = vmatpush2.msra.mxu0 0.0
  %3191 = vmatprep.subr.mxu0 0.0
  %3192 = vmatpush2.msra.mxu0 0.0
  %3193 = vmatprep.subr.mxu0 0.0
  %3194 = vmatpush2.msra.mxu0 0.0
  %3195 = vmatprep.subr.mxu0 0.0
  %3196 = vmatpush2.msra.mxu0 0.0
  %3197 = vmatprep.subr.mxu0 0.0
  %3198 = vmatpush2.msra.mxu0 0.0
  %3199 = vmatprep.subr.mxu0 0.0
  %3200 = vmatpush2.msra.mxu0 0.0
  %3201 = vmatprep.subr.mxu0 0.0
  %3202 = vmatpush2.msra.mxu0 0.0
  %3203 = vmatprep.subr.mxu0 0.0
  %3204 = vmatpush2.msra.mxu0 0.0
  %3205 = vmatprep.subr.mxu0 0.0
  %3206 = vmatpush2.msra.mxu0 0.0
  %3207 = vmatprep.subr.mxu0 0.0
  %3208 = vmatpush2.msra.mxu0 0.0
  %3209 = vmatprep.subr.mxu0 0.0
  %3210 = vmatpush2.msra.mxu0 0.0
  %3211 = vmatprep.subr.mxu0 0.0
  %3212 = vmatpush2.msra.mxu0 0.0
  %3213 = vmatprep.mubr.f32.mxu0 0.0
  %3214 = vmatmul.mubr.f32.gmra.mxu0 %v3147
  %v3215 = vpop.f32.mrf.mxu0
  %v3216 = vadd.f32 0.0, %v3215
  %v3217 = vpop.f32.mrf.mxu0
  %3218 = vdwg.mxu0
  %3219 = vrot.lane.b32.xlu0 %v2122, 64
  %v3220 = vpop.permute.xlu0 %3219
  %v3223 = vsel %vm229, %v2836, 0
  %3225 = vmatprep.subr.mxu0 0.0
  %3226 = vmatpush1.msra.mxu0 0.0
  %3227 = vmatprep.subr.mxu0 0.0
  %3228 = vmatpush1.msra.mxu0 0.0
  %3229 = vmatprep.subr.mxu0 0.0
  %3230 = vmatpush1.msra.mxu0 0.0
  %3231 = vmatprep.subr.mxu0 0.0
  %3232 = vmatpush1.msra.mxu0 0.0
  %3233 = vmatprep.subr.mxu0 0.0
  %3234 = vmatpush1.msra.mxu0 0.0
  %3235 = vmatprep.subr.mxu0 0.0
  %3236 = vmatpush1.msra.mxu0 0.0
  %3237 = vmatprep.subr.mxu0 0.0
  %3238 = vmatpush1.msra.mxu0 0.0
  %3239 = vmatprep.subr.mxu0 0.0
  %3240 = vmatpush1.msra.mxu0 0.0
  %3241 = vmatprep.subr.mxu0 0.0
  %3242 = vmatpush1.msra.mxu0 0.0
  %3243 = vmatprep.subr.mxu0 0.0
  %3244 = vmatpush1.msra.mxu0 0.0
  %3245 = vmatprep.subr.mxu0 0.0
  %3246 = vmatpush1.msra.mxu0 0.0
  %3247 = vmatprep.subr.mxu0 0.0
  %3248 = vmatpush1.msra.mxu0 0.0
  %3249 = vmatprep.subr.mxu0 0.0
  %3250 = vmatpush1.msra.mxu0 0.0
  %3251 = vmatprep.subr.mxu0 0.0
  %3252 = vmatpush1.msra.mxu0 0.0
  %3253 = vmatprep.subr.mxu0 0.0
  %3254 = vmatpush1.msra.mxu0 0.0
  %3255 = vmatprep.subr.mxu0 0.0
  %3256 = vmatpush1.msra.mxu0 %v3220
  %3257 = vmatprep.subr.mxu0 0.0
  %3258 = vmatpush2.msra.mxu0 0.0
  %3259 = vmatprep.subr.mxu0 0.0
  %3260 = vmatpush2.msra.mxu0 0.0
  %3261 = vmatprep.subr.mxu0 0.0
  %3262 = vmatpush2.msra.mxu0 0.0
  %3263 = vmatprep.subr.mxu0 0.0
  %3264 = vmatpush2.msra.mxu0 0.0
  %3265 = vmatprep.subr.mxu0 0.0
  %3266 = vmatpush2.msra.mxu0 0.0
  %3267 = vmatprep.subr.mxu0 0.0
  %3268 = vmatpush2.msra.mxu0 0.0
  %3269 = vmatprep.subr.mxu0 0.0
  %3270 = vmatpush2.msra.mxu0 0.0
  %3271 = vmatprep.subr.mxu0 0.0
  %3272 = vmatpush2.msra.mxu0 0.0
  %3273 = vmatprep.subr.mxu0 0.0
  %3274 = vmatpush2.msra.mxu0 0.0
  %3275 = vmatprep.subr.mxu0 0.0
  %3276 = vmatpush2.msra.mxu0 0.0
  %3277 = vmatprep.subr.mxu0 0.0
  %3278 = vmatpush2.msra.mxu0 0.0
  %3279 = vmatprep.subr.mxu0 0.0
  %3280 = vmatpush2.msra.mxu0 0.0
  %3281 = vmatprep.subr.mxu0 0.0
  %3282 = vmatpush2.msra.mxu0 0.0
  %3283 = vmatprep.subr.mxu0 0.0
  %3284 = vmatpush2.msra.mxu0 0.0
  %3285 = vmatprep.subr.mxu0 0.0
  %3286 = vmatpush2.msra.mxu0 0.0
  %3287 = vmatprep.subr.mxu0 0.0
  %3288 = vmatpush2.msra.mxu0 0.0
  %3289 = vmatprep.mubr.f32.mxu0 0.0
  %3290 = vmatmul.mubr.f32.gmra.mxu0 %v3223
  %v3291 = vpop.f32.mrf.mxu0
  %v3292 = vadd.f32 0.0, %v3291
  %v3293 = vpop.f32.mrf.mxu0
  %3294 = vdwg.mxu0
  %3295 = vrot.lane.b32.xlu0 %v2124, 64
  %v3296 = vpop.permute.xlu0 %3295
  %v3299 = vsel %vm229, %v2837, 0
  %3301 = vmatprep.subr.mxu0 0.0
  %3302 = vmatpush1.msra.mxu0 0.0
  %3303 = vmatprep.subr.mxu0 0.0
  %3304 = vmatpush1.msra.mxu0 0.0
  %3305 = vmatprep.subr.mxu0 0.0
  %3306 = vmatpush1.msra.mxu0 0.0
  %3307 = vmatprep.subr.mxu0 0.0
  %3308 = vmatpush1.msra.mxu0 0.0
  %3309 = vmatprep.subr.mxu0 0.0
  %3310 = vmatpush1.msra.mxu0 0.0
  %3311 = vmatprep.subr.mxu0 0.0
  %3312 = vmatpush1.msra.mxu0 0.0
  %3313 = vmatprep.subr.mxu0 0.0
  %3314 = vmatpush1.msra.mxu0 0.0
  %3315 = vmatprep.subr.mxu0 0.0
  %3316 = vmatpush1.msra.mxu0 0.0
  %3317 = vmatprep.subr.mxu0 0.0
  %3318 = vmatpush1.msra.mxu0 0.0
  %3319 = vmatprep.subr.mxu0 0.0
  %3320 = vmatpush1.msra.mxu0 0.0
  %3321 = vmatprep.subr.mxu0 0.0
  %3322 = vmatpush1.msra.mxu0 0.0
  %3323 = vmatprep.subr.mxu0 0.0
  %3324 = vmatpush1.msra.mxu0 0.0
  %3325 = vmatprep.subr.mxu0 0.0
  %3326 = vmatpush1.msra.mxu0 0.0
  %3327 = vmatprep.subr.mxu0 0.0
  %3328 = vmatpush1.msra.mxu0 0.0
  %3329 = vmatprep.subr.mxu0 0.0
  %3330 = vmatpush1.msra.mxu0 0.0
  %3331 = vmatprep.subr.mxu0 0.0
  %3332 = vmatpush1.msra.mxu0 %v3296
  %3333 = vmatprep.subr.mxu0 0.0
  %3334 = vmatpush2.msra.mxu0 0.0
  %3335 = vmatprep.subr.mxu0 0.0
  %3336 = vmatpush2.msra.mxu0 0.0
  %3337 = vmatprep.subr.mxu0 0.0
  %3338 = vmatpush2.msra.mxu0 0.0
  %3339 = vmatprep.subr.mxu0 0.0
  %3340 = vmatpush2.msra.mxu0 0.0
  %3341 = vmatprep.subr.mxu0 0.0
  %3342 = vmatpush2.msra.mxu0 0.0
  %3343 = vmatprep.subr.mxu0 0.0
  %3344 = vmatpush2.msra.mxu0 0.0
  %3345 = vmatprep.subr.mxu0 0.0
  %3346 = vmatpush2.msra.mxu0 0.0
  %3347 = vmatprep.subr.mxu0 0.0
  %3348 = vmatpush2.msra.mxu0 0.0
  %3349 = vmatprep.subr.mxu0 0.0
  %3350 = vmatpush2.msra.mxu0 0.0
  %3351 = vmatprep.subr.mxu0 0.0
  %3352 = vmatpush2.msra.mxu0 0.0
  %3353 = vmatprep.subr.mxu0 0.0
  %3354 = vmatpush2.msra.mxu0 0.0
  %3355 = vmatprep.subr.mxu0 0.0
  %3356 = vmatpush2.msra.mxu0 0.0
  %3357 = vmatprep.subr.mxu0 0.0
  %3358 = vmatpush2.msra.mxu0 0.0
  %3359 = vmatprep.subr.mxu0 0.0
  %3360 = vmatpush2.msra.mxu0 0.0
  %3361 = vmatprep.subr.mxu0 0.0
  %3362 = vmatpush2.msra.mxu0 0.0
  %3363 = vmatprep.subr.mxu0 0.0
  %3364 = vmatpush2.msra.mxu0 0.0
  %3365 = vmatprep.mubr.f32.mxu0 0.0
  %3366 = vmatmul.mubr.f32.gmra.mxu0 %v3299
  %v3367 = vpop.f32.mrf.mxu0
  %v3368 = vadd.f32 0.0, %v3367
  %v3369 = vpop.f32.mrf.mxu0
  %3370 = vdwg.mxu0
  %3371 = vrot.lane.b32.xlu0 %v2126, 64
  %v3372 = vpop.permute.xlu0 %3371
  %v3375 = vsel %vm229, %v2838, 0
  %3377 = vmatprep.subr.mxu0 0.0
  %3378 = vmatpush1.msra.mxu0 0.0
  %3379 = vmatprep.subr.mxu0 0.0
  %3380 = vmatpush1.msra.mxu0 0.0
  %3381 = vmatprep.subr.mxu0 0.0
  %3382 = vmatpush1.msra.mxu0 0.0
  %3383 = vmatprep.subr.mxu0 0.0
  %3384 = vmatpush1.msra.mxu0 0.0
  %3385 = vmatprep.subr.mxu0 0.0
  %3386 = vmatpush1.msra.mxu0 0.0
  %3387 = vmatprep.subr.mxu0 0.0
  %3388 = vmatpush1.msra.mxu0 0.0
  %3389 = vmatprep.subr.mxu0 0.0
  %3390 = vmatpush1.msra.mxu0 0.0
  %3391 = vmatprep.subr.mxu0 0.0
  %3392 = vmatpush1.msra.mxu0 0.0
  %3393 = vmatprep.subr.mxu0 0.0
  %3394 = vmatpush1.msra.mxu0 0.0
  %3395 = vmatprep.subr.mxu0 0.0
  %3396 = vmatpush1.msra.mxu0 0.0
  %3397 = vmatprep.subr.mxu0 0.0
  %3398 = vmatpush1.msra.mxu0 0.0
  %3399 = vmatprep.subr.mxu0 0.0
  %3400 = vmatpush1.msra.mxu0 0.0
  %3401 = vmatprep.subr.mxu0 0.0
  %3402 = vmatpush1.msra.mxu0 0.0
  %3403 = vmatprep.subr.mxu0 0.0
  %3404 = vmatpush1.msra.mxu0 0.0
  %3405 = vmatprep.subr.mxu0 0.0
  %3406 = vmatpush1.msra.mxu0 0.0
  %3407 = vmatprep.subr.mxu0 0.0
  %3408 = vmatpush1.msra.mxu0 %v3372
  %3409 = vmatprep.subr.mxu0 0.0
  %3410 = vmatpush2.msra.mxu0 0.0
  %3411 = vmatprep.subr.mxu0 0.0
  %3412 = vmatpush2.msra.mxu0 0.0
  %3413 = vmatprep.subr.mxu0 0.0
  %3414 = vmatpush2.msra.mxu0 0.0
  %3415 = vmatprep.subr.mxu0 0.0
  %3416 = vmatpush2.msra.mxu0 0.0
  %3417 = vmatprep.subr.mxu0 0.0
  %3418 = vmatpush2.msra.mxu0 0.0
  %3419 = vmatprep.subr.mxu0 0.0
  %3420 = vmatpush2.msra.mxu0 0.0
  %3421 = vmatprep.subr.mxu0 0.0
  %3422 = vmatpush2.msra.mxu0 0.0
  %3423 = vmatprep.subr.mxu0 0.0
  %3424 = vmatpush2.msra.mxu0 0.0
  %3425 = vmatprep.subr.mxu0 0.0
  %3426 = vmatpush2.msra.mxu0 0.0
  %3427 = vmatprep.subr.mxu0 0.0
  %3428 = vmatpush2.msra.mxu0 0.0
  %3429 = vmatprep.subr.mxu0 0.0
  %3430 = vmatpush2.msra.mxu0 0.0
  %3431 = vmatprep.subr.mxu0 0.0
  %3432 = vmatpush2.msra.mxu0 0.0
  %3433 = vmatprep.subr.mxu0 0.0
  %3434 = vmatpush2.msra.mxu0 0.0
  %3435 = vmatprep.subr.mxu0 0.0
  %3436 = vmatpush2.msra.mxu0 0.0
  %3437 = vmatprep.subr.mxu0 0.0
  %3438 = vmatpush2.msra.mxu0 0.0
  %3439 = vmatprep.subr.mxu0 0.0
  %3440 = vmatpush2.msra.mxu0 0.0
  %3441 = vmatprep.mubr.f32.mxu0 0.0
  %3442 = vmatmul.mubr.f32.gmra.mxu0 %v3375
  %v3443 = vpop.f32.mrf.mxu0
  %v3444 = vadd.f32 0.0, %v3443
  %v3445 = vpop.f32.mrf.mxu0
  %3446 = vdwg.mxu0
  %3448 = vrot.lane.b32.xlu0 %v2988, 8
  %v3449 = vpop.permute.xlu0 %3448
  %3452 = vrot.lane.b32.xlu0 %v3064, 16
  %v3453 = vpop.permute.xlu0 %3452
  %3456 = vrot.lane.b32.xlu0 %v3140, 24
  %v3457 = vpop.permute.xlu0 %3456
  %v3459 = vsel %vm229, %v2912, %v3449
  %v3460 = vsel %vm1609, %v3459, %v3453
  %v3461 = vsel %vm1611, %v3460, %v3457
  %3463 = vrot.lane.b32.xlu0 %v3292, 8
  %v3464 = vpop.permute.xlu0 %3463
  %3467 = vrot.lane.b32.xlu0 %v3368, 16
  %v3468 = vpop.permute.xlu0 %3467
  %3471 = vrot.lane.b32.xlu0 %v3444, 24
  %v3472 = vpop.permute.xlu0 %3471
  %v3474 = vsel %vm229, %v3216, %v3464
  %v3475 = vsel %vm1609, %v3474, %v3468
  %v3476 = vsel %vm1611, %v3475, %v3472
  %s3477 = scalar_lea.vmem %s8, 32
  %v3478 = vld [vmem:[%s3477] sm:$0xff]
  %v3479 = vld [vmem:[%s3477 + $0x8] sm:$0xff]
  %v3480 = vld [vmem:[%s3477 + $0x10] sm:$0xff]
  %v3481 = vld [vmem:[%s3477 + $0x18] sm:$0xff]
  %s3482 = scalar_lea.vmem %s9, 1
  %v3483 = vld [vmem:[%s3482] sm:$0x1]
  %v3485 = vlaneseq
  %v3486 = vshrl.u32 %v3485, 7
  %v3487 = vsub.s32 0, %v3486
  %v3488 = vrot.slane %v3483, %v3487
  %v3491 = vsel %vm69, %v3461, 0
  %v3494 = vsel %vm69, %v3476, 0
  %3496 = vmatprep.subr.mxu0 0.0
  %3497 = vmatpush1.msra.mxu0 0.0
  %3498 = vmatprep.subr.mxu0 0.0
  %3499 = vmatpush1.msra.mxu0 0.0
  %3500 = vmatprep.subr.mxu0 0.0
  %3501 = vmatpush1.msra.mxu0 0.0
  %3502 = vmatprep.subr.mxu0 0.0
  %3503 = vmatpush1.msra.mxu0 0.0
  %3504 = vmatprep.subr.mxu0 0.0
  %3505 = vmatpush1.msra.mxu0 0.0
  %3506 = vmatprep.subr.mxu0 0.0
  %3507 = vmatpush1.msra.mxu0 0.0
  %3508 = vmatprep.subr.mxu0 0.0
  %3509 = vmatpush1.msra.mxu0 0.0
  %3510 = vmatprep.subr.mxu0 0.0
  %3511 = vmatpush1.msra.mxu0 0.0
  %3512 = vmatprep.subr.mxu0 0.0
  %3513 = vmatpush1.msra.mxu0 0.0
  %3514 = vmatprep.subr.mxu0 0.0
  %3515 = vmatpush1.msra.mxu0 0.0
  %3516 = vmatprep.subr.mxu0 0.0
  %3517 = vmatpush1.msra.mxu0 0.0
  %3518 = vmatprep.subr.mxu0 0.0
  %3519 = vmatpush1.msra.mxu0 0.0
  %3520 = vmatprep.subr.mxu0 0.0
  %3521 = vmatpush1.msra.mxu0 %v3481
  %3522 = vmatprep.subr.mxu0 0.0
  %3523 = vmatpush1.msra.mxu0 %v3480
  %3524 = vmatprep.subr.mxu0 0.0
  %3525 = vmatpush1.msra.mxu0 %v3479
  %3526 = vmatprep.subr.mxu0 0.0
  %3527 = vmatpush1.msra.mxu0 %v3478
  %3528 = vmatprep.subr.mxu0 0.0
  %3529 = vmatpush2.msra.mxu0 0.0
  %3530 = vmatprep.subr.mxu0 0.0
  %3531 = vmatpush2.msra.mxu0 0.0
  %3532 = vmatprep.subr.mxu0 0.0
  %3533 = vmatpush2.msra.mxu0 0.0
  %3534 = vmatprep.subr.mxu0 0.0
  %3535 = vmatpush2.msra.mxu0 0.0
  %3536 = vmatprep.subr.mxu0 0.0
  %3537 = vmatpush2.msra.mxu0 0.0
  %3538 = vmatprep.subr.mxu0 0.0
  %3539 = vmatpush2.msra.mxu0 0.0
  %3540 = vmatprep.subr.mxu0 0.0
  %3541 = vmatpush2.msra.mxu0 0.0
  %3542 = vmatprep.subr.mxu0 0.0
  %3543 = vmatpush2.msra.mxu0 0.0
  %3544 = vmatprep.subr.mxu0 0.0
  %3545 = vmatpush2.msra.mxu0 0.0
  %3546 = vmatprep.subr.mxu0 0.0
  %3547 = vmatpush2.msra.mxu0 0.0
  %3548 = vmatprep.subr.mxu0 0.0
  %3549 = vmatpush2.msra.mxu0 0.0
  %3550 = vmatprep.subr.mxu0 0.0
  %3551 = vmatpush2.msra.mxu0 0.0
  %3552 = vmatprep.subr.mxu0 0.0
  %3553 = vmatpush2.msra.mxu0 0.0
  %3554 = vmatprep.subr.mxu0 0.0
  %3555 = vmatpush2.msra.mxu0 0.0
  %3556 = vmatprep.subr.mxu0 0.0
  %3557 = vmatpush2.msra.mxu0 0.0
  %3558 = vmatprep.subr.mxu0 0.0
  %3559 = vmatpush2.msra.mxu0 0.0
  %3560 = vmatprep.mubr.f32.mxu0 0.0
  %3561 = vmatmul.mubr.f32.gmra.mxu0 %v3491
  %v3562 = vpop.f32.mrf.mxu0
  %v3563 = vadd.f32 %v3488, %v3562
  %v3564 = vpop.f32.mrf.mxu0
  %3565 = vmatprep.mubr.f32.mxu0 0.0
  %3566 = vmatmul.mubr.f32.gmra.mxu0 %v3494
  %v3567 = vpop.f32.mrf.mxu0
  %v3568 = vadd.f32 %v3488, %v3567
  %v3569 = vpop.f32.mrf.mxu0
  %3570 = vdwg.mxu0
  %v3571 = vadd.f32 %v3563, %v2017
  %v3572 = vadd.f32 %v3568, %v2018
  %s3573 = scalar_lea.vmem %s10, 1
  %v3574 = vld [vmem:[%s3573] sm:$0x1]
  %s3575 = scalar_lea.vmem %s11, 1
  %v3576 = vld [vmem:[%s3575] sm:$0x1]
  %v3577 = vsel %vm69, %v3571, 0.0
  %3578 = vadd.xlane.f32.xlu0 %v3577
  %v3579 = vpop.xlane.xlu0 %3578
  %v3580 = vsel %vm69, %v3572, 0.0
  %3581 = vadd.xlane.f32.xlu0 %v3580
  %v3582 = vpop.xlane.xlu0 %3581
  %v3583 = vmul.f32 %v3579, %v76
  %v3584 = vmul.f32 %v3582, %v76
  %v3585 = vsub.f32 %v3571, %v3583
  %v3586 = vsub.f32 %v3572, %v3584
  %v3587 = vmul.f32 %v3585, %v3585
  %v3588 = vmul.f32 %v3586, %v3586
  %v3589 = vsel %vm69, %v3587, 0.0
  %3590 = vadd.xlane.f32.xlu0 %v3589
  %v3591 = vpop.xlane.xlu0 %3590
  %v3592 = vsel %vm69, %v3588, 0.0
  %3593 = vadd.xlane.f32.xlu0 %v3592
  %v3594 = vpop.xlane.xlu0 %3593
  %v3595 = vmul.f32 %v3591, %v76
  %v3596 = vmul.f32 %v3594, %v76
  %v3597 = vadd.f32 %v3595, 1e-12
  %v3598 = vadd.f32 %v3596, 1e-12
  %v3599 = vrsqrt.pop %v3597
  %v3600 = vrsqrt.pop %v3598
  %v3601 = vmul.f32 %v3585, %v3599
  %v3602 = vmul.f32 %v3586, %v3600
  %v3604 = vlaneseq
  %v3605 = vshrl.u32 %v3604, 7
  %v3606 = vsub.s32 0, %v3605
  %v3607 = vrot.slane %v3574, %v3606
  %v3609 = vmul.f32 %v3601, %v3607
  %v3610 = vmul.f32 %v3602, %v3607
  %v3612 = vlaneseq
  %v3613 = vshrl.u32 %v3612, 7
  %v3614 = vsub.s32 0, %v3613
  %v3615 = vrot.slane %v3576, %v3614
  %v3617 = vadd.f32 %v3609, %v3615
  %v3618 = vadd.f32 %v3610, %v3615
  %s3619 = scalar_lea.vmem %s12, 32
  %v3620 = vld [vmem:[%s3619] sm:$0xff]
  %v3621 = vld [vmem:[%s3619 + $0x8] sm:$0xff]
  %v3622 = vld [vmem:[%s3619 + $0x10] sm:$0xff]
  %v3623 = vld [vmem:[%s3619 + $0x18] sm:$0xff]
  %s3624 = scalar_lea.vmem %s13, 1
  %v3625 = vld [vmem:[%s3624] sm:$0x1]
  %v3627 = vlaneseq
  %v3628 = vshrl.u32 %v3627, 7
  %v3629 = vsub.s32 0, %v3628
  %v3630 = vrot.slane %v3625, %v3629
  %v3633 = vsel %vm69, %v3617, 0
  %v3636 = vsel %vm69, %v3618, 0
  %3638 = vmatprep.subr.mxu0 0.0
  %3639 = vmatpush1.msra.mxu0 0.0
  %3640 = vmatprep.subr.mxu0 0.0
  %3641 = vmatpush1.msra.mxu0 0.0
  %3642 = vmatprep.subr.mxu0 0.0
  %3643 = vmatpush1.msra.mxu0 0.0
  %3644 = vmatprep.subr.mxu0 0.0
  %3645 = vmatpush1.msra.mxu0 0.0
  %3646 = vmatprep.subr.mxu0 0.0
  %3647 = vmatpush1.msra.mxu0 0.0
  %3648 = vmatprep.subr.mxu0 0.0
  %3649 = vmatpush1.msra.mxu0 0.0
  %3650 = vmatprep.subr.mxu0 0.0
  %3651 = vmatpush1.msra.mxu0 0.0
  %3652 = vmatprep.subr.mxu0 0.0
  %3653 = vmatpush1.msra.mxu0 0.0
  %3654 = vmatprep.subr.mxu0 0.0
  %3655 = vmatpush1.msra.mxu0 0.0
  %3656 = vmatprep.subr.mxu0 0.0
  %3657 = vmatpush1.msra.mxu0 0.0
  %3658 = vmatprep.subr.mxu0 0.0
  %3659 = vmatpush1.msra.mxu0 0.0
  %3660 = vmatprep.subr.mxu0 0.0
  %3661 = vmatpush1.msra.mxu0 0.0
  %3662 = vmatprep.subr.mxu0 0.0
  %3663 = vmatpush1.msra.mxu0 %v3623
  %3664 = vmatprep.subr.mxu0 0.0
  %3665 = vmatpush1.msra.mxu0 %v3622
  %3666 = vmatprep.subr.mxu0 0.0
  %3667 = vmatpush1.msra.mxu0 %v3621
  %3668 = vmatprep.subr.mxu0 0.0
  %3669 = vmatpush1.msra.mxu0 %v3620
  %3670 = vmatprep.subr.mxu0 0.0
  %3671 = vmatpush2.msra.mxu0 0.0
  %3672 = vmatprep.subr.mxu0 0.0
  %3673 = vmatpush2.msra.mxu0 0.0
  %3674 = vmatprep.subr.mxu0 0.0
  %3675 = vmatpush2.msra.mxu0 0.0
  %3676 = vmatprep.subr.mxu0 0.0
  %3677 = vmatpush2.msra.mxu0 0.0
  %3678 = vmatprep.subr.mxu0 0.0
  %3679 = vmatpush2.msra.mxu0 0.0
  %3680 = vmatprep.subr.mxu0 0.0
  %3681 = vmatpush2.msra.mxu0 0.0
  %3682 = vmatprep.subr.mxu0 0.0
  %3683 = vmatpush2.msra.mxu0 0.0
  %3684 = vmatprep.subr.mxu0 0.0
  %3685 = vmatpush2.msra.mxu0 0.0
  %3686 = vmatprep.subr.mxu0 0.0
  %3687 = vmatpush2.msra.mxu0 0.0
  %3688 = vmatprep.subr.mxu0 0.0
  %3689 = vmatpush2.msra.mxu0 0.0
  %3690 = vmatprep.subr.mxu0 0.0
  %3691 = vmatpush2.msra.mxu0 0.0
  %3692 = vmatprep.subr.mxu0 0.0
  %3693 = vmatpush2.msra.mxu0 0.0
  %3694 = vmatprep.subr.mxu0 0.0
  %3695 = vmatpush2.msra.mxu0 0.0
  %3696 = vmatprep.subr.mxu0 0.0
  %3697 = vmatpush2.msra.mxu0 0.0
  %3698 = vmatprep.subr.mxu0 0.0
  %3699 = vmatpush2.msra.mxu0 0.0
  %3700 = vmatprep.subr.mxu0 0.0
  %3701 = vmatpush2.msra.mxu0 0.0
  %3702 = vmatprep.mubr.f32.mxu0 0.0
  %3703 = vmatmul.mubr.f32.gmra.mxu0 %v3633
  %v3704 = vpop.f32.mrf.mxu0
  %v3705 = vadd.f32 %v3630, %v3704
  %v3706 = vpop.f32.mrf.mxu0
  %3707 = vmatprep.mubr.f32.mxu0 0.0
  %3708 = vmatmul.mubr.f32.gmra.mxu0 %v3636
  %v3709 = vpop.f32.mrf.mxu0
  %v3710 = vadd.f32 %v3630, %v3709
  %v3711 = vpop.f32.mrf.mxu0
  %3712 = vdwg.mxu0
  %v3713 = vmul.f32 %v3705, 0.5
  %v3714 = vmul.f32 %v3710, 0.5
  %v3715 = vmul.f32 %v3705, 0.044715
  %v3716 = vmul.f32 %v3710, 0.044715
  %v3717 = vmul.f32 %v3715, %v3705
  %v3718 = vmul.f32 %v3716, %v3710
  %v3719 = vmul.f32 %v3717, %v3705
  %v3720 = vmul.f32 %v3718, %v3710
  %v3721 = vadd.f32 %v3705, %v3719
  %v3722 = vadd.f32 %v3710, %v3720
  %v3723 = vmul.f32 %v3721, 0.7978846
  %v3724 = vmul.f32 %v3722, 0.7978846
  %v3725 = vtanh.pop %v3723
  %v3726 = vtanh.pop %v3724
  %v3727 = vadd.f32 %v3725, 1.0
  %v3728 = vadd.f32 %v3726, 1.0
  %v3729 = vmul.f32 %v3713, %v3727
  %v3730 = vmul.f32 %v3714, %v3728
  %s3731 = scalar_lea.vmem %s14, 64
  %v3732 = vld [vmem:[%s3731] sm:$0xff]
  %v3733 = vld [vmem:[%s3731 + $0x8] sm:$0xff]
  %v3734 = vld [vmem:[%s3731 + $0x10] sm:$0xff]
  %v3735 = vld [vmem:[%s3731 + $0x18] sm:$0xff]
  %v3736 = vld [vmem:[%s3731 + $0x20] sm:$0xff]
  %v3737 = vld [vmem:[%s3731 + $0x28] sm:$0xff]
  %v3738 = vld [vmem:[%s3731 + $0x30] sm:$0xff]
  %v3739 = vld [vmem:[%s3731 + $0x38] sm:$0xff]
  %s3740 = scalar_lea.vmem %s15, 1
  %v3741 = vld [vmem:[%s3740] sm:$0x1]
  %v3743 = vlaneseq
  %v3744 = vshrl.u32 %v3743, 7
  %v3745 = vsub.s32 0, %v3744
  %v3746 = vrot.slane %v3741, %v3745
  %v3749 = vsel %vm1891, %v3729, 0
  %v3752 = vsel %vm1891, %v3730, 0
  %3754 = vmatprep.subr.mxu0 0.0
  %3755 = vmatpush1.msra.mxu0 0.0
  %3756 = vmatprep.subr.mxu0 0.0
  %3757 = vmatpush1.msra.mxu0 0.0
  %3758 = vmatprep.subr.mxu0 0.0
  %3759 = vmatpush1.msra.mxu0 0.0
  %3760 = vmatprep.subr.mxu0 0.0
  %3761 = vmatpush1.msra.mxu0 0.0
  %3762 = vmatprep.subr.mxu0 0.0
  %3763 = vmatpush1.msra.mxu0 0.0
  %3764 = vmatprep.subr.mxu0 0.0
  %3765 = vmatpush1.msra.mxu0 0.0
  %3766 = vmatprep.subr.mxu0 0.0
  %3767 = vmatpush1.msra.mxu0 0.0
  %3768 = vmatprep.subr.mxu0 0.0
  %3769 = vmatpush1.msra.mxu0 0.0
  %3770 = vmatprep.subr.mxu0 0.0
  %3771 = vmatpush1.msra.mxu0 %v3739
  %3772 = vmatprep.subr.mxu0 0.0
  %3773 = vmatpush1.msra.mxu0 %v3738
  %3774 = vmatprep.subr.mxu0 0.0
  %3775 = vmatpush1.msra.mxu0 %v3737
  %3776 = vmatprep.subr.mxu0 0.0
  %3777 = vmatpush1.msra.mxu0 %v3736
  %3778 = vmatprep.subr.mxu0 0.0
  %3779 = vmatpush1.msra.mxu0 %v3735
  %3780 = vmatprep.subr.mxu0 0.0
  %3781 = vmatpush1.msra.mxu0 %v3734
  %3782 = vmatprep.subr.mxu0 0.0
  %3783 = vmatpush1.msra.mxu0 %v3733
  %3784 = vmatprep.subr.mxu0 0.0
  %3785 = vmatpush1.msra.mxu0 %v3732
  %3786 = vmatprep.subr.mxu0 0.0
  %3787 = vmatpush2.msra.mxu0 0.0
  %3788 = vmatprep.subr.mxu0 0.0
  %3789 = vmatpush2.msra.mxu0 0.0
  %3790 = vmatprep.subr.mxu0 0.0
  %3791 = vmatpush2.msra.mxu0 0.0
  %3792 = vmatprep.subr.mxu0 0.0
  %3793 = vmatpush2.msra.mxu0 0.0
  %3794 = vmatprep.subr.mxu0 0.0
  %3795 = vmatpush2.msra.mxu0 0.0
  %3796 = vmatprep.subr.mxu0 0.0
  %3797 = vmatpush2.msra.mxu0 0.0
  %3798 = vmatprep.subr.mxu0 0.0
  %3799 = vmatpush2.msra.mxu0 0.0
  %3800 = vmatprep.subr.mxu0 0.0
  %3801 = vmatpush2.msra.mxu0 0.0
  %3802 = vmatprep.subr.mxu0 0.0
  %3803 = vmatpush2.msra.mxu0 0.0
  %3804 = vmatprep.subr.mxu0 0.0
  %3805 = vmatpush2.msra.mxu0 0.0
  %3806 = vmatprep.subr.mxu0 0.0
  %3807 = vmatpush2.msra.mxu0 0.0
  %3808 = vmatprep.subr.mxu0 0.0
  %3809 = vmatpush2.msra.mxu0 0.0
  %3810 = vmatprep.subr.mxu0 0.0
  %3811 = vmatpush2.msra.mxu0 0.0
  %3812 = vmatprep.subr.mxu0 0.0
  %3813 = vmatpush2.msra.mxu0 0.0
  %3814 = vmatprep.subr.mxu0 0.0
  %3815 = vmatpush2.msra.mxu0 0.0
  %3816 = vmatprep.subr.mxu0 0.0
  %3817 = vmatpush2.msra.mxu0 0.0
  %3818 = vmatprep.mubr.f32.mxu0 0.0
  %3819 = vmatmul.mubr.f32.gmra.mxu0 %v3749
  %v3820 = vpop.f32.mrf.mxu0
  %v3821 = vadd.f32 %v3746, %v3820
  %v3822 = vpop.f32.mrf.mxu0
  %3823 = vmatprep.mubr.f32.mxu0 0.0
  %3824 = vmatmul.mubr.f32.gmra.mxu0 %v3752
  %v3825 = vpop.f32.mrf.mxu0
  %v3826 = vadd.f32 %v3746, %v3825
  %v3827 = vpop.f32.mrf.mxu0
  %3828 = vdwg.mxu0
  %v3829 = vadd.f32 %v3821, %v3617
  %v3830 = vadd.f32 %v3826, %v3618
  %s3831 = scalar_lea.vmem %s16, 1
  %v3832 = vld [vmem:[%s3831] sm:$0x1]
  %s3833 = scalar_lea.vmem %s17, 1
  %v3834 = vld [vmem:[%s3833] sm:$0x1]
  %v3835 = vsel %vm69, %v3829, 0.0
  %3836 = vadd.xlane.f32.xlu0 %v3835
  %v3837 = vpop.xlane.xlu0 %3836
  %v3838 = vsel %vm69, %v3830, 0.0
  %3839 = vadd.xlane.f32.xlu0 %v3838
  %v3840 = vpop.xlane.xlu0 %3839
  %v3841 = vmul.f32 %v3837, %v76
  %v3842 = vmul.f32 %v3840, %v76
  %v3843 = vsub.f32 %v3829, %v3841
  %v3844 = vsub.f32 %v3830, %v3842
  %v3845 = vmul.f32 %v3843, %v3843
  %v3846 = vmul.f32 %v3844, %v3844
  %v3847 = vsel %vm69, %v3845, 0.0
  %3848 = vadd.xlane.f32.xlu0 %v3847
  %v3849 = vpop.xlane.xlu0 %3848
  %v3850 = vsel %vm69, %v3846, 0.0
  %3851 = vadd.xlane.f32.xlu0 %v3850
  %v3852 = vpop.xlane.xlu0 %3851
  %v3853 = vmul.f32 %v3849, %v76
  %v3854 = vmul.f32 %v3852, %v76
  %v3855 = vadd.f32 %v3853, 1e-12
  %v3856 = vadd.f32 %v3854, 1e-12
  %v3857 = vrsqrt.pop %v3855
  %v3858 = vrsqrt.pop %v3856
  %v3859 = vmul.f32 %v3843, %v3857
  %v3860 = vmul.f32 %v3844, %v3858
  %v3862 = vlaneseq
  %v3863 = vshrl.u32 %v3862, 7
  %v3864 = vsub.s32 0, %v3863
  %v3865 = vrot.slane %v3832, %v3864
  %v3867 = vmul.f32 %v3859, %v3865
  %v3868 = vmul.f32 %v3860, %v3865
  %v3870 = vlaneseq
  %v3871 = vshrl.u32 %v3870, 7
  %v3872 = vsub.s32 0, %v3871
  %v3873 = vrot.slane %v3834, %v3872
  %v3875 = vadd.f32 %v3867, %v3873
  %v3876 = vadd.f32 %v3868, %v3873
  %3877 = vst.msk [vmem:[#allocation2] sm:$0xff] %vm69, %v3875
  %3878 = vst.msk [vmem:[#allocation2 + $0x8] sm:$0xff] %vm69, %v3876
  %s3879 = smul.u32 0, 6
  %s3880 = sld [smem:[#allocation4 + %s3879]]
  %s3881 = scalar_lea.vmem [#allocation2], %s3880
  %v3882 = vld [vmem:[%s3881] sm:$0x1]
  %vm3883 = vcmask 253952
  %3884 = vst.msk [vmem:[%s18] sm:$0x1] %vm3883, %v3882
  %s3885 = sadd.s32 %s3879, 1
  %s3886 = sld [smem:[#allocation4 + %s3885]]
  %s3887 = scalar_lea.vmem [#allocation2], %s3886
  %v3888 = vld [vmem:[%s3887] sm:$0x1]
  %3889 = vst.msk [vmem:[%s18 + $0x1] sm:$0x1] %vm3883, %v3888
  %s3890 = sadd.s32 %s3879, 2
  %s3891 = sld [smem:[#allocation4 + %s3890]]
  %s3892 = scalar_lea.vmem [#allocation2], %s3891
  %v3893 = vld [vmem:[%s3892] sm:$0x1]
  %3894 = vst.msk [vmem:[%s18 + $0x2] sm:$0x1] %vm3883, %v3893
  %s3895 = smul.u32 0, 10
  %s3896 = sld [smem:[#allocation5 + %s3895]]
  %s3897 = scalar_lea.vmem [#allocation2], %s3896
  %v3898 = vld [vmem:[%s3897] sm:$0x1]
  %3899 = vst.msk [vmem:[%s18 + $0x3] sm:$0x1] %vm3883, %v3898
  %s3900 = sadd.s32 %s3895, 1
  %s3901 = sld [smem:[#allocation5 + %s3900]]
  %s3902 = scalar_lea.vmem [#allocation2], %s3901
  %v3903 = vld [vmem:[%s3902] sm:$0x1]
  %3904 = vst.msk [vmem:[%s18 + $0x4] sm:$0x1] %vm3883, %v3903
  %s3905 = sadd.s32 %s3895, 2
  %s3906 = sld [smem:[#allocation5 + %s3905]]
  %s3907 = scalar_lea.vmem [#allocation2], %s3906
  %v3908 = vld [vmem:[%s3907] sm:$0x1]
  %3909 = vst.msk [vmem:[%s18 + $0x5] sm:$0x1] %vm3883, %v3908
  %s3910 = sadd.s32 %s3895, 3
  %s3911 = sld [smem:[#allocation5 + %s3910]]
  %s3912 = scalar_lea.vmem [#allocation2], %s3911
  %v3913 = vld [vmem:[%s3912] sm:$0x1]
  %3914 = vst.msk [vmem:[%s18 + $0x6] sm:$0x1] %vm3883, %v3913
  %s3915 = sadd.s32 %s3895, 4
  %s3916 = sld [smem:[#allocation5 + %s3915]]
  %s3917 = scalar_lea.vmem [#allocation2], %s3916
  %v3918 = vld [vmem:[%s3917] sm:$0x1]
  %3919 = vst.msk [vmem:[%s18 + $0x7] sm:$0x1] %vm3883, %v3918
  %s3920 = smul.u32 0, 2
  %s3921 = sadd.s32 %s3920, 1
  %s3922 = smul.u32 %s3921, 3
  %s3923 = sld [smem:[#allocation4 + %s3922]]
  %s3924 = sadd.s32 %s3923, 8
  %s3925 = scalar_lea.vmem [#allocation2], %s3924
  %v3926 = vld [vmem:[%s3925] sm:$0x1]
  %s3927 = scalar_lea.vmem %s18, 8
  %3928 = vst.msk [vmem:[%s3927] sm:$0x1] %vm3883, %v3926
  %s3929 = sadd.s32 %s3922, 1
  %s3930 = sld [smem:[#allocation4 + %s3929]]
  %s3931 = sadd.s32 %s3930, 8
  %s3932 = scalar_lea.vmem [#allocation2], %s3931
  %v3933 = vld [vmem:[%s3932] sm:$0x1]
  %3934 = vst.msk [vmem:[%s3927 + $0x1] sm:$0x1] %vm3883, %v3933
  %s3935 = sadd.s32 %s3922, 2
  %s3936 = sld [smem:[#allocation4 + %s3935]]
  %s3937 = sadd.s32 %s3936, 8
  %s3938 = scalar_lea.vmem [#allocation2], %s3937
  %v3939 = vld [vmem:[%s3938] sm:$0x1]
  %3940 = vst.msk [vmem:[%s3927 + $0x2] sm:$0x1] %vm3883, %v3939
  %s3941 = smul.u32 %s3921, 5
  %s3942 = sld [smem:[#allocation5 + %s3941]]
  %s3943 = sadd.s32 %s3942, 8
  %s3944 = scalar_lea.vmem [#allocation2], %s3943
  %v3945 = vld [vmem:[%s3944] sm:$0x1]
  %3946 = vst.msk [vmem:[%s3927 + $0x3] sm:$0x1] %vm3883, %v3945
  %s3947 = sadd.s32 %s3941, 1
  %s3948 = sld [smem:[#allocation5 + %s3947]]
  %s3949 = sadd.s32 %s3948, 8
  %s3950 = scalar_lea.vmem [#allocation2], %s3949
  %v3951 = vld [vmem:[%s3950] sm:$0x1]
  %3952 = vst.msk [vmem:[%s3927 + $0x4] sm:$0x1] %vm3883, %v3951
  %s3953 = sadd.s32 %s3941, 2
  %s3954 = sld [smem:[#allocation5 + %s3953]]
  %s3955 = sadd.s32 %s3954, 8
  %s3956 = scalar_lea.vmem [#allocation2], %s3955
  %v3957 = vld [vmem:[%s3956] sm:$0x1]
  %3958 = vst.msk [vmem:[%s3927 + $0x5] sm:$0x1] %vm3883, %v3957
  %s3959 = sadd.s32 %s3941, 3
  %s3960 = sld [smem:[#allocation5 + %s3959]]
  %s3961 = sadd.s32 %s3960, 8
  %s3962 = scalar_lea.vmem [#allocation2], %s3961
  %v3963 = vld [vmem:[%s3962] sm:$0x1]
  %3964 = vst.msk [vmem:[%s3927 + $0x6] sm:$0x1] %vm3883, %v3963
  %s3965 = sadd.s32 %s3941, 4
  %s3966 = sld [smem:[#allocation5 + %s3965]]
  %s3967 = sadd.s32 %s3966, 8
  %s3968 = scalar_lea.vmem [#allocation2], %s3967
  %v3969 = vld [vmem:[%s3968] sm:$0x1]
  %3970 = vst.msk [vmem:[%s3927 + $0x7] sm:$0x1] %vm3883, %v3969
  // Predicated region
  $region66: #{encoder_both_forward.1} parent=0 // pred_check
    _
  $region67: #{encoder_both_forward.1} parent=0 // pred_check_branch
    %3972 = sbr.rel (0) target = $region69
  $region68: #{encoder_both_forward.1} parent=0 // pred_region
    _
  $region69: #{encoder_both_forward.1} parent=0 // pred_fallthru
    _
  // Predicated region
  $region70: #{encoder_both_forward.1} parent=0 // pred_check
    _
  $region71: #{encoder_both_forward.1} parent=0 // pred_check_branch
    %3974 = sbr.rel (0) target = $region73
  $region72: #{encoder_both_forward.1} parent=0 // pred_region
    _
  $region73: #{encoder_both_forward.1} parent=0 // pred_fallthru
    _

</llo_original>
